<compile_context>
chip_gen: v7x
topology: tpu7x:2x2x1
jax: 0.10.0
libtpu: 0.0.40
codegen_flags: <defaults>
</compile_context>

<pallas_src>
import functools
import math

import jax
import jax.numpy as jnp
from jax.experimental import pallas as pl
from jax.experimental.pallas import tpu as pltpu


# TODO(synk): nn.GELU() defaults to the exact erf formulation; we use the tanh
# approximation (max abs deviation ~1e-3) because erf has no guaranteed Mosaic
# lowering, while tanh maps directly onto the EUP.
def _gelu_tanh(x):
    c = math.sqrt(2.0 / math.pi)
    return 0.5 * x * (1.0 + jnp.tanh(c * (x + 0.044715 * (x * x * x))))


def _merge_kernel(x1_ref, xe_ref, w1_ref, b1_ref, w2a_ref, w2b_ref, b2_ref,
                  mask_ref, o_ref, g1_scr, g2_scr, *, Wp, Mpb, m_left):
    """Fully fused LSTM_Decoder_Merge for ONE batch image (grid axis = batch).

    Layouts (per grid step / per image):
      x1_ref : (Cin1, Lb) bf16  conv1 (or conv3) input, zero spatial halo + zero lane margins
      xe_ref : (C,    Lb) bf16  x_enc, same layout
      w*_ref : (9, Cout, Cin) bf16  per-tap weights, tap index t = dy*3 + dx
      b*_ref : (Cout, 1) f32
      mask   : (1, Mpb) f32     1 at real pixels, 0 on the halo ring
      o_ref  : (Cout, Lb) f32
      g*_scr : (C, Lb) bf16     VMEM scratch holding the GELU'd conv2 inputs

    A 3x3 tap at offset (dy, dx) is a constant lane shift of the flattened padded
    image:  shift = (dy-1)*Wp + (dx-1)  (margins keep every shift in-bounds).
    """
    cout = o_ref.shape[0]
    shifts = [(dy - 1) * Wp + (dx - 1) for dy in range(3) for dx in range(3)]

    # ---- conv1 (or conv3): 9 shifted matmul-accumulates on the MXU ------------
    acc1 = jnp.zeros((cout, Mpb), jnp.float32)
    for t, s in enumerate(shifts):
        rhs = x1_ref[:, m_left + s:m_left + s + Mpb]                 # (Cin1, Mpb) bf16
        acc1 = acc1 + jnp.dot(w1_ref[t], rhs, preferred_element_type=jnp.float32)
    c1 = (acc1 + b1_ref[...]) * mask_ref[...]                        # zero halo ring

    # GELU applied ONCE on (C, Mpb) activations (not on 9x-expanded patches).
    # GELU(0) = 0 keeps the zero halo / margins valid as conv2's padding.
    g1_scr[...] = jnp.zeros_like(g1_scr)
    g1_scr[:, m_left:m_left + Mpb] = _gelu_tanh(c1).astype(g1_scr.dtype)
    g2_scr[...] = _gelu_tanh(xe_ref[...].astype(jnp.float32)).astype(g2_scr.dtype)

    # ---- conv2 over cat([GELU(c1), GELU(x_enc)]) ------------------------------
    acc2 = jnp.zeros((cout, Mpb), jnp.float32)
    for t, s in enumerate(shifts):
        sl = slice(m_left + s, m_left + s + Mpb)
        acc2 = acc2 + jnp.dot(w2a_ref[t], g1_scr[:, sl], preferred_element_type=jnp.float32)
        acc2 = acc2 + jnp.dot(w2b_ref[t], g2_scr[:, sl], preferred_element_type=jnp.float32)
    h = _gelu_tanh(acc2 + b2_ref[...])

    o_ref[...] = jnp.zeros_like(o_ref)
    o_ref[:, m_left:m_left + Mpb] = h


# ------------------------------ layout plumbing --------------------------------

def _to_channel_major_padded(x_nchw, m_left, m_right):
    """(B, C, H, W) -> (C, B*Lb): channel-major, per-image zero 3x3 halo, flattened
    spatial axis, plus zero lane margins so in-kernel tap shifts stay in-bounds.
    Done ONCE per input (no 9x im2col expansion)."""
    B, C, H, W = x_nchw.shape
    xp = jnp.pad(x_nchw, ((0, 0), (0, 0), (1, 1), (1, 1)))           # (B,C,Hp,Wp)
    xp = xp.transpose(1, 0, 2, 3).reshape(C, B, (H + 2) * (W + 2))   # (C,B,Mpb)
    xp = jnp.pad(xp, ((0, 0), (0, 0), (m_left, m_right)))            # (C,B,Lb)
    return xp.reshape(C, -1)                                         # (C,B*Lb)


def _taps(w):
    """(Cout, Cin, 3, 3) -> (9, Cout, Cin), tap index t = dy*3 + dx (matches kernel)."""
    cout, cin = w.shape[0], w.shape[1]
    return w.transpose(2, 3, 0, 1).reshape(9, cout, cin)


def _merge_fused(x1, x_enc, w1, b1, w2, b2):
    """Single fused pallas_call for the whole merge module."""
    B, cin1, H, W = x1.shape
    C = x_enc.shape[1]
    cout = w1.shape[0]
    Hp, Wp = H + 2, W + 2
    Mpb = Hp * Wp                                   # flat padded image size
    halo = Wp + 1                                   # max |lane shift| of a 3x3 tap
    Lb = pl.cdiv(Mpb + 2 * halo, 128) * 128         # lane-dense per-image block
    m_left = halo
    m_right = Lb - Mpb - m_left

    # bf16 MXU inputs; accumulation / bias / GELU epilogue stay f32.
    x1_f = _to_channel_major_padded(x1, m_left, m_right).astype(jnp.bfloat16)
    xe_f = _to_channel_major_padded(x_enc, m_left, m_right).astype(jnp.bfloat16)
    w1_t = _taps(w1).astype(jnp.bfloat16)
    w2a_t = _taps(w2[:, :C]).astype(jnp.bfloat16)   # conv2 weights acting on c1
    w2b_t = _taps(w2[:, C:]).astype(jnp.bfloat16)   # conv2 weights acting on x_enc
    b1_c = b1.reshape(cout, 1).astype(jnp.float32)
    b2_c = b2.reshape(cout, 1).astype(jnp.float32)
    mask = jnp.pad(jnp.ones((1, H, W), jnp.float32),
                   ((0, 0), (1, 1), (1, 1))).reshape(1, Mpb)

    kernel = functools.partial(_merge_kernel, Wp=Wp, Mpb=Mpb, m_left=m_left)
    pinned2 = lambda b: (0, 0)
    pinned3 = lambda b: (0, 0, 0)
    y = pl.pallas_call(
        kernel,
        out_shape=jax.ShapeDtypeStruct((cout, B * Lb), jnp.float32),
        grid=(B,),
        in_specs=[
            pl.BlockSpec((cin1, Lb), lambda b: (0, b)),      # conv1 input, per image
            pl.BlockSpec((C, Lb), lambda b: (0, b)),          # x_enc, per image
            pl.BlockSpec((9, cout, cin1), pinned3),           # w1 taps (resident)
            pl.BlockSpec((cout, 1), pinned2),                 # b1
            pl.BlockSpec((9, cout, C), pinned3),              # w2 (c1 part)
            pl.BlockSpec((9, cout, C), pinned3),              # w2 (x_enc part)
            pl.BlockSpec((cout, 1), pinned2),                 # b2
            pl.BlockSpec((1, Mpb), pinned2),                  # interior mask
        ],
        out_specs=pl.BlockSpec((cout, Lb), lambda b: (0, b)),
        scratch_shapes=[pltpu.VMEM((C, Lb), jnp.bfloat16),    # GELU(c1) with margins
                        pltpu.VMEM((C, Lb), jnp.bfloat16)],   # GELU(x_enc) with margins
        compiler_params=pltpu.CompilerParams(
            dimension_semantics=("parallel",)),               # megacore split on v7x
    )(x1_f, xe_f, w1_t, b1_c, w2a_t, w2b_t, b2_c, mask)

    # Single layout conversion at the very end: (Cout, B*Lb) -> (B, Cout, H, W).
    y = y.reshape(cout, B, Lb)[:, :, m_left:m_left + Mpb]
    y = y.reshape(cout, B, Hp, Wp)[:, :, 1:1 + H, 1:1 + W]
    return y.transpose(1, 0, 2, 3)


def lstm_decoder_merge(x_enc, h_lstm, x_dec, params):
    """Pallas forward pass of LSTM_Decoder_Merge."""
    if x_dec is not None:
        x1 = jnp.concatenate([x_dec, h_lstm], axis=1)
        w1, b1 = params["w1"], params["b1"]
    else:
        x1, w1, b1 = h_lstm, params["w3"], params["b3"]
    return _merge_fused(x1, x_enc, w1, b1, params["w2"], params["b2"])


# ----------------------------- plain-JAX reference -----------------------------

def _conv2d_ref(x, w, b):
    y = jax.lax.conv_general_dilated(
        x, w, window_strides=(1, 1), padding=((1, 1), (1, 1)),
        dimension_numbers=("NCHW", "OIHW", "NCHW"))
    return y + b[None, :, None, None]


def lstm_decoder_merge_ref(x_enc, h_lstm, x_dec, params):
    if x_dec is not None:
        c1 = _conv2d_ref(jnp.concatenate([x_dec, h_lstm], axis=1),
                         params["w1"], params["b1"])
    else:
        c1 = _conv2d_ref(h_lstm, params["w3"], params["b3"])
    g = _gelu_tanh(jnp.concatenate([c1, x_enc], axis=1))
    return _gelu_tanh(_conv2d_ref(g, params["w2"], params["b2"]))


def _init_conv(key, cout, cin):
    # torch.nn.Conv2d default init: U(-1/sqrt(fan_in), 1/sqrt(fan_in)).
    kw, kb = jax.random.split(key)
    bound = 1.0 / math.sqrt(cin * 9)
    w = jax.random.uniform(kw, (cout, cin, 3, 3), jnp.float32, -bound, bound)
    b = jax.random.uniform(kb, (cout,), jnp.float32, -bound, bound)
    return w, b


if __name__ == "__main__":
    B, C, H, W = 2, 4, 16, 16

    key = jax.random.PRNGKey(0)
    k_enc, k_lstm, k_dec, k1, k2, k3 = jax.random.split(key, 6)
    x_enc = jax.random.normal(k_enc, (B, C, H, W), dtype=jnp.float32)
    h_lstm = jax.random.normal(k_lstm, (B, C, H, W), dtype=jnp.float32)
    x_dec = jax.random.normal(k_dec, (B, C, H, W), dtype=jnp.float32)

    w1, b1 = _init_conv(k1, C, 2 * C)
    w2, b2 = _init_conv(k2, C, 2 * C)
    w3, b3 = _init_conv(k3, C, C)
    params = dict(w1=w1, b1=b1, w2=w2, b2=b2, w3=w3, b3=b3)

    # Tolerance: bf16 MXU inputs (f32 accumulation/epilogue) => ~1e-2 worst-case abs error.
    TOL = 3e-2

    # Branch 1: x_dec provided (conv1 path).
    h = jax.block_until_ready(lstm_decoder_merge(x_enc, h_lstm, x_dec, params))
    h_ref = lstm_decoder_merge_ref(x_enc, h_lstm, x_dec, params)
    assert h.shape == (B, C, H, W)
    assert jnp.allclose(h, h_ref, atol=TOL, rtol=TOL), \
        float(jnp.max(jnp.abs(h - h_ref)))

    # Branch 2: x_dec is None (conv3 path).
    h0 = jax.block_until_ready(lstm_decoder_merge(x_enc, h_lstm, None, params))
    h0_ref = lstm_decoder_merge_ref(x_enc, h_lstm, None, params)
    assert h0.shape == (B, C, H, W)
    assert jnp.allclose(h0, h0_ref, atol=TOL, rtol=TOL), \
        float(jnp.max(jnp.abs(h0 - h0_ref)))

    print("KERNEL_OK")
</pallas_src>

<mosaic_0001>
module attributes {stable_mosaic.version = 11 : i64} {
  func.func @_merge_kernel(%arg0: i32, %arg1: memref<8x384xbf16, #tpu.memory_space<vmem>>, %arg2: memref<4x384xbf16, #tpu.memory_space<vmem>>, %arg3: memref<9x4x8xbf16, #tpu.memory_space<vmem>>, %arg4: memref<4x1xf32, #tpu.memory_space<vmem>>, %arg5: memref<9x4x4xbf16, #tpu.memory_space<vmem>>, %arg6: memref<9x4x4xbf16, #tpu.memory_space<vmem>>, %arg7: memref<4x1xf32, #tpu.memory_space<vmem>>, %arg8: memref<1x324xf32, #tpu.memory_space<vmem>>, %arg9: memref<4x384xf32, #tpu.memory_space<vmem>>, %arg10: memref<4x384xbf16, #tpu.memory_space<vmem>>, %arg11: memref<4x384xbf16, #tpu.memory_space<vmem>>) attributes {dimension_semantics = [#tpu.dimension_semantics<parallel>], iteration_bounds = array<i64: 2>, scalar_prefetch = 0 : i64, scratch_operands = 2 : i64, tpu.core_type = #tpu.core_type<tc>, window_params = [{transform_indices = @transform_0, window_bounds = array<i64: 8, 384>}, {transform_indices = @transform_1, window_bounds = array<i64: 4, 384>}, {pipeline_mode = #tpu.pipeline_mode<synchronous>, transform_indices = @transform_2, window_bounds = array<i64: 9, 4, 8>}, {pipeline_mode = #tpu.pipeline_mode<synchronous>, transform_indices = @transform_3, window_bounds = array<i64: 4, 1>}, {pipeline_mode = #tpu.pipeline_mode<synchronous>, transform_indices = @transform_4, window_bounds = array<i64: 9, 4, 4>}, {pipeline_mode = #tpu.pipeline_mode<synchronous>, transform_indices = @transform_5, window_bounds = array<i64: 9, 4, 4>}, {pipeline_mode = #tpu.pipeline_mode<synchronous>, transform_indices = @transform_6, window_bounds = array<i64: 4, 1>}, {pipeline_mode = #tpu.pipeline_mode<synchronous>, transform_indices = @transform_7, window_bounds = array<i64: 1, 324>}, {transform_indices = @transform_8, window_bounds = array<i64: 4, 384>}]} {
    %cst = arith.constant 0.000000e+00 : f32
    %0 = vector.broadcast %cst : f32 to vector<4x324xf32>
    %c0 = arith.constant 0 : index
    %c0_0 = arith.constant 0 : index
    %1 = vector.load %arg1[%c0, %c0_0] : memref<8x384xbf16, #tpu.memory_space<vmem>>, vector<8x324xbf16>
    %c0_1 = arith.constant 0 : index
    %c0_2 = arith.constant 0 : index
    %c0_3 = arith.constant 0 : index
    %2 = vector.load %arg3[%c0_1, %c0_2, %c0_3] : memref<9x4x8xbf16, #tpu.memory_space<vmem>>, vector<1x4x8xbf16>
    %3 = vector.shape_cast %2 : vector<1x4x8xbf16> to vector<4x8xbf16>
    %cst_4 = arith.constant dense<0.000000e+00> : vector<4x324xf32>
    %4 = tpu.matmul %3, %1, %cst_4 {dimension_numbers = #tpu.dot_dimension_numbers<[1], [0], [0], [1], [0, 0, 1, 1], [], []>} : vector<4x8xbf16>, vector<8x324xbf16>, vector<4x324xf32> -> vector<4x324xf32>
    %5 = arith.addf %0, %4 : vector<4x324xf32>
    %c0_5 = arith.constant 0 : index
    %c1 = arith.constant 1 : index
    %6 = vector.load %arg1[%c0_5, %c1] : memref<8x384xbf16, #tpu.memory_space<vmem>>, vector<8x324xbf16>
    %c1_6 = arith.constant 1 : index
    %c0_7 = arith.constant 0 : index
    %c0_8 = arith.constant 0 : index
    %7 = vector.load %arg3[%c1_6, %c0_7, %c0_8] : memref<9x4x8xbf16, #tpu.memory_space<vmem>>, vector<1x4x8xbf16>
    %8 = vector.shape_cast %7 : vector<1x4x8xbf16> to vector<4x8xbf16>
    %cst_9 = arith.constant dense<0.000000e+00> : vector<4x324xf32>
    %9 = tpu.matmul %8, %6, %cst_9 {dimension_numbers = #tpu.dot_dimension_numbers<[1], [0], [0], [1], [0, 0, 1, 1], [], []>} : vector<4x8xbf16>, vector<8x324xbf16>, vector<4x324xf32> -> vector<4x324xf32>
    %10 = arith.addf %5, %9 : vector<4x324xf32>
    %c0_10 = arith.constant 0 : index
    %c2 = arith.constant 2 : index
    %11 = vector.load %arg1[%c0_10, %c2] : memref<8x384xbf16, #tpu.memory_space<vmem>>, vector<8x324xbf16>
    %c2_11 = arith.constant 2 : index
    %c0_12 = arith.constant 0 : index
    %c0_13 = arith.constant 0 : index
    %12 = vector.load %arg3[%c2_11, %c0_12, %c0_13] : memref<9x4x8xbf16, #tpu.memory_space<vmem>>, vector<1x4x8xbf16>
    %13 = vector.shape_cast %12 : vector<1x4x8xbf16> to vector<4x8xbf16>
    %cst_14 = arith.constant dense<0.000000e+00> : vector<4x324xf32>
    %14 = tpu.matmul %13, %11, %cst_14 {dimension_numbers = #tpu.dot_dimension_numbers<[1], [0], [0], [1], [0, 0, 1, 1], [], []>} : vector<4x8xbf16>, vector<8x324xbf16>, vector<4x324xf32> -> vector<4x324xf32>
    %15 = arith.addf %10, %14 : vector<4x324xf32>
    %c0_15 = arith.constant 0 : index
    %c18 = arith.constant 18 : index
    %16 = vector.load %arg1[%c0_15, %c18] : memref<8x384xbf16, #tpu.memory_space<vmem>>, vector<8x324xbf16>
    %c3 = arith.constant 3 : index
    %c0_16 = arith.constant 0 : index
    %c0_17 = arith.constant 0 : index
    %17 = vector.load %arg3[%c3, %c0_16, %c0_17] : memref<9x4x8xbf16, #tpu.memory_space<vmem>>, vector<1x4x8xbf16>
    %18 = vector.shape_cast %17 : vector<1x4x8xbf16> to vector<4x8xbf16>
    %cst_18 = arith.constant dense<0.000000e+00> : vector<4x324xf32>
    %19 = tpu.matmul %18, %16, %cst_18 {dimension_numbers = #tpu.dot_dimension_numbers<[1], [0], [0], [1], [0, 0, 1, 1], [], []>} : vector<4x8xbf16>, vector<8x324xbf16>, vector<4x324xf32> -> vector<4x324xf32>
    %20 = arith.addf %15, %19 : vector<4x324xf32>
    %c0_19 = arith.constant 0 : index
    %c19 = arith.constant 19 : index
    %21 = vector.load %arg1[%c0_19, %c19] : memref<8x384xbf16, #tpu.memory_space<vmem>>, vector<8x324xbf16>
    %c4 = arith.constant 4 : index
    %c0_20 = arith.constant 0 : index
    %c0_21 = arith.constant 0 : index
    %22 = vector.load %arg3[%c4, %c0_20, %c0_21] : memref<9x4x8xbf16, #tpu.memory_space<vmem>>, vector<1x4x8xbf16>
    %23 = vector.shape_cast %22 : vector<1x4x8xbf16> to vector<4x8xbf16>
    %cst_22 = arith.constant dense<0.000000e+00> : vector<4x324xf32>
    %24 = tpu.matmul %23, %21, %cst_22 {dimension_numbers = #tpu.dot_dimension_numbers<[1], [0], [0], [1], [0, 0, 1, 1], [], []>} : vector<4x8xbf16>, vector<8x324xbf16>, vector<4x324xf32> -> vector<4x324xf32>
    %25 = arith.addf %20, %24 : vector<4x324xf32>
    %c0_23 = arith.constant 0 : index
    %c20 = arith.constant 20 : index
    %26 = vector.load %arg1[%c0_23, %c20] : memref<8x384xbf16, #tpu.memory_space<vmem>>, vector<8x324xbf16>
    %c5 = arith.constant 5 : index
    %c0_24 = arith.constant 0 : index
    %c0_25 = arith.constant 0 : index
    %27 = vector.load %arg3[%c5, %c0_24, %c0_25] : memref<9x4x8xbf16, #tpu.memory_space<vmem>>, vector<1x4x8xbf16>
    %28 = vector.shape_cast %27 : vector<1x4x8xbf16> to vector<4x8xbf16>
    %cst_26 = arith.constant dense<0.000000e+00> : vector<4x324xf32>
    %29 = tpu.matmul %28, %26, %cst_26 {dimension_numbers = #tpu.dot_dimension_numbers<[1], [0], [0], [1], [0, 0, 1, 1], [], []>} : vector<4x8xbf16>, vector<8x324xbf16>, vector<4x324xf32> -> vector<4x324xf32>
    %30 = arith.addf %25, %29 : vector<4x324xf32>
    %c0_27 = arith.constant 0 : index
    %c36 = arith.constant 36 : index
    %31 = vector.load %arg1[%c0_27, %c36] : memref<8x384xbf16, #tpu.memory_space<vmem>>, vector<8x324xbf16>
    %c6 = arith.constant 6 : index
    %c0_28 = arith.constant 0 : index
    %c0_29 = arith.constant 0 : index
    %32 = vector.load %arg3[%c6, %c0_28, %c0_29] : memref<9x4x8xbf16, #tpu.memory_space<vmem>>, vector<1x4x8xbf16>
    %33 = vector.shape_cast %32 : vector<1x4x8xbf16> to vector<4x8xbf16>
    %cst_30 = arith.constant dense<0.000000e+00> : vector<4x324xf32>
    %34 = tpu.matmul %33, %31, %cst_30 {dimension_numbers = #tpu.dot_dimension_numbers<[1], [0], [0], [1], [0, 0, 1, 1], [], []>} : vector<4x8xbf16>, vector<8x324xbf16>, vector<4x324xf32> -> vector<4x324xf32>
    %35 = arith.addf %30, %34 : vector<4x324xf32>
    %c0_31 = arith.constant 0 : index
    %c37 = arith.constant 37 : index
    %36 = vector.load %arg1[%c0_31, %c37] : memref<8x384xbf16, #tpu.memory_space<vmem>>, vector<8x324xbf16>
    %c7 = arith.constant 7 : index
    %c0_32 = arith.constant 0 : index
    %c0_33 = arith.constant 0 : index
    %37 = vector.load %arg3[%c7, %c0_32, %c0_33] : memref<9x4x8xbf16, #tpu.memory_space<vmem>>, vector<1x4x8xbf16>
    %38 = vector.shape_cast %37 : vector<1x4x8xbf16> to vector<4x8xbf16>
    %cst_34 = arith.constant dense<0.000000e+00> : vector<4x324xf32>
    %39 = tpu.matmul %38, %36, %cst_34 {dimension_numbers = #tpu.dot_dimension_numbers<[1], [0], [0], [1], [0, 0, 1, 1], [], []>} : vector<4x8xbf16>, vector<8x324xbf16>, vector<4x324xf32> -> vector<4x324xf32>
    %40 = arith.addf %35, %39 : vector<4x324xf32>
    %c0_35 = arith.constant 0 : index
    %c38 = arith.constant 38 : index
    %41 = vector.load %arg1[%c0_35, %c38] : memref<8x384xbf16, #tpu.memory_space<vmem>>, vector<8x324xbf16>
    %c8 = arith.constant 8 : index
    %c0_36 = arith.constant 0 : index
    %c0_37 = arith.constant 0 : index
    %42 = vector.load %arg3[%c8, %c0_36, %c0_37] : memref<9x4x8xbf16, #tpu.memory_space<vmem>>, vector<1x4x8xbf16>
    %43 = vector.shape_cast %42 : vector<1x4x8xbf16> to vector<4x8xbf16>
    %cst_38 = arith.constant dense<0.000000e+00> : vector<4x324xf32>
    %44 = tpu.matmul %43, %41, %cst_38 {dimension_numbers = #tpu.dot_dimension_numbers<[1], [0], [0], [1], [0, 0, 1, 1], [], []>} : vector<4x8xbf16>, vector<8x324xbf16>, vector<4x324xf32> -> vector<4x324xf32>
    %45 = arith.addf %40, %44 : vector<4x324xf32>
    %c0_39 = arith.constant 0 : index
    %c0_40 = arith.constant 0 : index
    %46 = vector.load %arg4[%c0_39, %c0_40] : memref<4x1xf32, #tpu.memory_space<vmem>>, vector<4x1xf32>
    %47 = vector.broadcast %46 : vector<4x1xf32> to vector<4x324xf32>
    %48 = arith.addf %45, %47 : vector<4x324xf32>
    %c0_41 = arith.constant 0 : index
    %c0_42 = arith.constant 0 : index
    %49 = vector.load %arg8[%c0_41, %c0_42] : memref<1x324xf32, #tpu.memory_space<vmem>>, vector<1x324xf32>
    %50 = vector.broadcast %49 : vector<1x324xf32> to vector<4x324xf32>
    %51 = arith.mulf %48, %50 : vector<4x324xf32>
    %cst_43 = arith.constant 0.000000e+00 : bf16
    %52 = vector.broadcast %cst_43 : bf16 to vector<4x384xbf16>
    %c0_44 = arith.constant 0 : index
    %c0_45 = arith.constant 0 : index
    %53 = vector.load %arg10[%c0_44, %c0_45] : memref<4x384xbf16, #tpu.memory_space<vmem>>, vector<4x384xbf16>
    tpu.vector_store %arg10[%c0_44, %c0_45], %52 {strides = array<i32>} : memref<4x384xbf16, #tpu.memory_space<vmem>>, vector<4x384xbf16>,
    %cst_46 = arith.constant 5.000000e-01 : f32
    %54 = vector.broadcast %cst_46 : f32 to vector<4x324xf32>
    %55 = arith.mulf %54, %51 : vector<4x324xf32>
    %56 = arith.mulf %51, %51 : vector<4x324xf32>
    %57 = arith.mulf %56, %51 : vector<4x324xf32>
    %cst_47 = arith.constant 4.471500e-02 : f32
    %58 = vector.broadcast %cst_47 : f32 to vector<4x324xf32>
    %59 = arith.mulf %58, %57 : vector<4x324xf32>
    %60 = arith.addf %51, %59 : vector<4x324xf32>
    %cst_48 = arith.constant 0.797884583 : f32
    %61 = vector.broadcast %cst_48 : f32 to vector<4x324xf32>
    %62 = arith.mulf %61, %60 : vector<4x324xf32>
    %63 = math.tanh %62 : vector<4x324xf32>
    %cst_49 = arith.constant 1.000000e+00 : f32
    %64 = vector.broadcast %cst_49 : f32 to vector<4x324xf32>
    %65 = arith.addf %64, %63 : vector<4x324xf32>
    %66 = arith.mulf %55, %65 : vector<4x324xf32>
    %67 = arith.truncf %66 : vector<4x324xf32> to vector<4x324xbf16>
    %c0_50 = arith.constant 0 : index
    %c19_51 = arith.constant 19 : index
    %68 = vector.load %arg10[%c0_50, %c19_51] : memref<4x384xbf16, #tpu.memory_space<vmem>>, vector<4x324xbf16>
    tpu.vector_store %arg10[%c0_50, %c19_51], %67 {strides = array<i32>} : memref<4x384xbf16, #tpu.memory_space<vmem>>, vector<4x324xbf16>,
    %c0_52 = arith.constant 0 : index
    %c0_53 = arith.constant 0 : index
    %69 = vector.load %arg2[%c0_52, %c0_53] : memref<4x384xbf16, #tpu.memory_space<vmem>>, vector<4x384xbf16>
    %70 = arith.extf %69 : vector<4x384xbf16> to vector<4x384xf32>
    %cst_54 = arith.constant 5.000000e-01 : f32
    %71 = vector.broadcast %cst_54 : f32 to vector<4x384xf32>
    %72 = arith.mulf %71, %70 : vector<4x384xf32>
    %73 = arith.mulf %70, %70 : vector<4x384xf32>
    %74 = arith.mulf %73, %70 : vector<4x384xf32>
    %cst_55 = arith.constant 4.471500e-02 : f32
    %75 = vector.broadcast %cst_55 : f32 to vector<4x384xf32>
    %76 = arith.mulf %75, %74 : vector<4x384xf32>
    %77 = arith.addf %70, %76 : vector<4x384xf32>
    %cst_56 = arith.constant 0.797884583 : f32
    %78 = vector.broadcast %cst_56 : f32 to vector<4x384xf32>
    %79 = arith.mulf %78, %77 : vector<4x384xf32>
    %80 = math.tanh %79 : vector<4x384xf32>
    %cst_57 = arith.constant 1.000000e+00 : f32
    %81 = vector.broadcast %cst_57 : f32 to vector<4x384xf32>
    %82 = arith.addf %81, %80 : vector<4x384xf32>
    %83 = arith.mulf %72, %82 : vector<4x384xf32>
    %84 = arith.truncf %83 : vector<4x384xf32> to vector<4x384xbf16>
    %c0_58 = arith.constant 0 : index
    %c0_59 = arith.constant 0 : index
    %85 = vector.load %arg11[%c0_58, %c0_59] : memref<4x384xbf16, #tpu.memory_space<vmem>>, vector<4x384xbf16>
    tpu.vector_store %arg11[%c0_58, %c0_59], %84 {strides = array<i32>} : memref<4x384xbf16, #tpu.memory_space<vmem>>, vector<4x384xbf16>,
    %cst_60 = arith.constant 0.000000e+00 : f32
    %86 = vector.broadcast %cst_60 : f32 to vector<4x324xf32>
    %c0_61 = arith.constant 0 : index
    %c0_62 = arith.constant 0 : index
    %c0_63 = arith.constant 0 : index
    %87 = vector.load %arg5[%c0_61, %c0_62, %c0_63] : memref<9x4x4xbf16, #tpu.memory_space<vmem>>, vector<1x4x4xbf16>
    %88 = vector.shape_cast %87 : vector<1x4x4xbf16> to vector<4x4xbf16>
    %c0_64 = arith.constant 0 : index
    %c0_65 = arith.constant 0 : index
    %89 = vector.load %arg10[%c0_64, %c0_65] : memref<4x384xbf16, #tpu.memory_space<vmem>>, vector<4x324xbf16>
    %cst_66 = arith.constant dense<0.000000e+00> : vector<4x324xf32>
    %90 = tpu.matmul %88, %89, %cst_66 {dimension_numbers = #tpu.dot_dimension_numbers<[1], [0], [0], [1], [0, 0, 1, 1], [], []>} : vector<4x4xbf16>, vector<4x324xbf16>, vector<4x324xf32> -> vector<4x324xf32>
    %91 = arith.addf %86, %90 : vector<4x324xf32>
    %c0_67 = arith.constant 0 : index
    %c0_68 = arith.constant 0 : index
    %c0_69 = arith.constant 0 : index
    %92 = vector.load %arg6[%c0_67, %c0_68, %c0_69] : memref<9x4x4xbf16, #tpu.memory_space<vmem>>, vector<1x4x4xbf16>
    %93 = vector.shape_cast %92 : vector<1x4x4xbf16> to vector<4x4xbf16>
    %c0_70 = arith.constant 0 : index
    %c0_71 = arith.constant 0 : index
    %94 = vector.load %arg11[%c0_70, %c0_71] : memref<4x384xbf16, #tpu.memory_space<vmem>>, vector<4x324xbf16>
    %cst_72 = arith.constant dense<0.000000e+00> : vector<4x324xf32>
    %95 = tpu.matmul %93, %94, %cst_72 {dimension_numbers = #tpu.dot_dimension_numbers<[1], [0], [0], [1], [0, 0, 1, 1], [], []>} : vector<4x4xbf16>, vector<4x324xbf16>, vector<4x324xf32> -> vector<4x324xf32>
    %96 = arith.addf %91, %95 : vector<4x324xf32>
    %c1_73 = arith.constant 1 : index
    %c0_74 = arith.constant 0 : index
    %c0_75 = arith.constant 0 : index
    %97 = vector.load %arg5[%c1_73, %c0_74, %c0_75] : memref<9x4x4xbf16, #tpu.memory_space<vmem>>, vector<1x4x4xbf16>
    %98 = vector.shape_cast %97 : vector<1x4x4xbf16> to vector<4x4xbf16>
    %c0_76 = arith.constant 0 : index
    %c1_77 = arith.constant 1 : index
    %99 = vector.load %arg10[%c0_76, %c1_77] : memref<4x384xbf16, #tpu.memory_space<vmem>>, vector<4x324xbf16>
    %cst_78 = arith.constant dense<0.000000e+00> : vector<4x324xf32>
    %100 = tpu.matmul %98, %99, %cst_78 {dimension_numbers = #tpu.dot_dimension_numbers<[1], [0], [0], [1], [0, 0, 1, 1], [], []>} : vector<4x4xbf16>, vector<4x324xbf16>, vector<4x324xf32> -> vector<4x324xf32>
    %101 = arith.addf %96, %100 : vector<4x324xf32>
    %c1_79 = arith.constant 1 : index
    %c0_80 = arith.constant 0 : index
    %c0_81 = arith.constant 0 : index
    %102 = vector.load %arg6[%c1_79, %c0_80, %c0_81] : memref<9x4x4xbf16, #tpu.memory_space<vmem>>, vector<1x4x4xbf16>
    %103 = vector.shape_cast %102 : vector<1x4x4xbf16> to vector<4x4xbf16>
    %c0_82 = arith.constant 0 : index
    %c1_83 = arith.constant 1 : index
    %104 = vector.load %arg11[%c0_82, %c1_83] : memref<4x384xbf16, #tpu.memory_space<vmem>>, vector<4x324xbf16>
    %cst_84 = arith.constant dense<0.000000e+00> : vector<4x324xf32>
    %105 = tpu.matmul %103, %104, %cst_84 {dimension_numbers = #tpu.dot_dimension_numbers<[1], [0], [0], [1], [0, 0, 1, 1], [], []>} : vector<4x4xbf16>, vector<4x324xbf16>, vector<4x324xf32> -> vector<4x324xf32>
    %106 = arith.addf %101, %105 : vector<4x324xf32>
    %c2_85 = arith.constant 2 : index
    %c0_86 = arith.constant 0 : index
    %c0_87 = arith.constant 0 : index
    %107 = vector.load %arg5[%c2_85, %c0_86, %c0_87] : memref<9x4x4xbf16, #tpu.memory_space<vmem>>, vector<1x4x4xbf16>
    %108 = vector.shape_cast %107 : vector<1x4x4xbf16> to vector<4x4xbf16>
    %c0_88 = arith.constant 0 : index
    %c2_89 = arith.constant 2 : index
    %109 = vector.load %arg10[%c0_88, %c2_89] : memref<4x384xbf16, #tpu.memory_space<vmem>>, vector<4x324xbf16>
    %cst_90 = arith.constant dense<0.000000e+00> : vector<4x324xf32>
    %110 = tpu.matmul %108, %109, %cst_90 {dimension_numbers = #tpu.dot_dimension_numbers<[1], [0], [0], [1], [0, 0, 1, 1], [], []>} : vector<4x4xbf16>, vector<4x324xbf16>, vector<4x324xf32> -> vector<4x324xf32>
    %111 = arith.addf %106, %110 : vector<4x324xf32>
    %c2_91 = arith.constant 2 : index
    %c0_92 = arith.constant 0 : index
    %c0_93 = arith.constant 0 : index
    %112 = vector.load %arg6[%c2_91, %c0_92, %c0_93] : memref<9x4x4xbf16, #tpu.memory_space<vmem>>, vector<1x4x4xbf16>
    %113 = vector.shape_cast %112 : vector<1x4x4xbf16> to vector<4x4xbf16>
    %c0_94 = arith.constant 0 : index
    %c2_95 = arith.constant 2 : index
    %114 = vector.load %arg11[%c0_94, %c2_95] : memref<4x384xbf16, #tpu.memory_space<vmem>>, vector<4x324xbf16>
    %cst_96 = arith.constant dense<0.000000e+00> : vector<4x324xf32>
    %115 = tpu.matmul %113, %114, %cst_96 {dimension_numbers = #tpu.dot_dimension_numbers<[1], [0], [0], [1], [0, 0, 1, 1], [], []>} : vector<4x4xbf16>, vector<4x324xbf16>, vector<4x324xf32> -> vector<4x324xf32>
    %116 = arith.addf %111, %115 : vector<4x324xf32>
    %c3_97 = arith.constant 3 : index
    %c0_98 = arith.constant 0 : index
    %c0_99 = arith.constant 0 : index
    %117 = vector.load %arg5[%c3_97, %c0_98, %c0_99] : memref<9x4x4xbf16, #tpu.memory_space<vmem>>, vector<1x4x4xbf16>
    %118 = vector.shape_cast %117 : vector<1x4x4xbf16> to vector<4x4xbf16>
    %c0_100 = arith.constant 0 : index
    %c18_101 = arith.constant 18 : index
    %119 = vector.load %arg10[%c0_100, %c18_101] : memref<4x384xbf16, #tpu.memory_space<vmem>>, vector<4x324xbf16>
    %cst_102 = arith.constant dense<0.000000e+00> : vector<4x324xf32>
    %120 = tpu.matmul %118, %119, %cst_102 {dimension_numbers = #tpu.dot_dimension_numbers<[1], [0], [0], [1], [0, 0, 1, 1], [], []>} : vector<4x4xbf16>, vector<4x324xbf16>, vector<4x324xf32> -> vector<4x324xf32>
    %121 = arith.addf %116, %120 : vector<4x324xf32>
    %c3_103 = arith.constant 3 : index
    %c0_104 = arith.constant 0 : index
    %c0_105 = arith.constant 0 : index
    %122 = vector.load %arg6[%c3_103, %c0_104, %c0_105] : memref<9x4x4xbf16, #tpu.memory_space<vmem>>, vector<1x4x4xbf16>
    %123 = vector.shape_cast %122 : vector<1x4x4xbf16> to vector<4x4xbf16>
    %c0_106 = arith.constant 0 : index
    %c18_107 = arith.constant 18 : index
    %124 = vector.load %arg11[%c0_106, %c18_107] : memref<4x384xbf16, #tpu.memory_space<vmem>>, vector<4x324xbf16>
    %cst_108 = arith.constant dense<0.000000e+00> : vector<4x324xf32>
    %125 = tpu.matmul %123, %124, %cst_108 {dimension_numbers = #tpu.dot_dimension_numbers<[1], [0], [0], [1], [0, 0, 1, 1], [], []>} : vector<4x4xbf16>, vector<4x324xbf16>, vector<4x324xf32> -> vector<4x324xf32>
    %126 = arith.addf %121, %125 : vector<4x324xf32>
    %c4_109 = arith.constant 4 : index
    %c0_110 = arith.constant 0 : index
    %c0_111 = arith.constant 0 : index
    %127 = vector.load %arg5[%c4_109, %c0_110, %c0_111] : memref<9x4x4xbf16, #tpu.memory_space<vmem>>, vector<1x4x4xbf16>
    %128 = vector.shape_cast %127 : vector<1x4x4xbf16> to vector<4x4xbf16>
    %c0_112 = arith.constant 0 : index
    %c19_113 = arith.constant 19 : index
    %129 = vector.load %arg10[%c0_112, %c19_113] : memref<4x384xbf16, #tpu.memory_space<vmem>>, vector<4x324xbf16>
    %cst_114 = arith.constant dense<0.000000e+00> : vector<4x324xf32>
    %130 = tpu.matmul %128, %129, %cst_114 {dimension_numbers = #tpu.dot_dimension_numbers<[1], [0], [0], [1], [0, 0, 1, 1], [], []>} : vector<4x4xbf16>, vector<4x324xbf16>, vector<4x324xf32> -> vector<4x324xf32>
    %131 = arith.addf %126, %130 : vector<4x324xf32>
    %c4_115 = arith.constant 4 : index
    %c0_116 = arith.constant 0 : index
    %c0_117 = arith.constant 0 : index
    %132 = vector.load %arg6[%c4_115, %c0_116, %c0_117] : memref<9x4x4xbf16, #tpu.memory_space<vmem>>, vector<1x4x4xbf16>
    %133 = vector.shape_cast %132 : vector<1x4x4xbf16> to vector<4x4xbf16>
    %c0_118 = arith.constant 0 : index
    %c19_119 = arith.constant 19 : index
    %134 = vector.load %arg11[%c0_118, %c19_119] : memref<4x384xbf16, #tpu.memory_space<vmem>>, vector<4x324xbf16>
    %cst_120 = arith.constant dense<0.000000e+00> : vector<4x324xf32>
    %135 = tpu.matmul %133, %134, %cst_120 {dimension_numbers = #tpu.dot_dimension_numbers<[1], [0], [0], [1], [0, 0, 1, 1], [], []>} : vector<4x4xbf16>, vector<4x324xbf16>, vector<4x324xf32> -> vector<4x324xf32>
    %136 = arith.addf %131, %135 : vector<4x324xf32>
    %c5_121 = arith.constant 5 : index
    %c0_122 = arith.constant 0 : index
    %c0_123 = arith.constant 0 : index
    %137 = vector.load %arg5[%c5_121, %c0_122, %c0_123] : memref<9x4x4xbf16, #tpu.memory_space<vmem>>, vector<1x4x4xbf16>
    %138 = vector.shape_cast %137 : vector<1x4x4xbf16> to vector<4x4xbf16>
    %c0_124 = arith.constant 0 : index
    %c20_125 = arith.constant 20 : index
    %139 = vector.load %arg10[%c0_124, %c20_125] : memref<4x384xbf16, #tpu.memory_space<vmem>>, vector<4x324xbf16>
    %cst_126 = arith.constant dense<0.000000e+00> : vector<4x324xf32>
    %140 = tpu.matmul %138, %139, %cst_126 {dimension_numbers = #tpu.dot_dimension_numbers<[1], [0], [0], [1], [0, 0, 1, 1], [], []>} : vector<4x4xbf16>, vector<4x324xbf16>, vector<4x324xf32> -> vector<4x324xf32>
    %141 = arith.addf %136, %140 : vector<4x324xf32>
    %c5_127 = arith.constant 5 : index
    %c0_128 = arith.constant 0 : index
    %c0_129 = arith.constant 0 : index
    %142 = vector.load %arg6[%c5_127, %c0_128, %c0_129] : memref<9x4x4xbf16, #tpu.memory_space<vmem>>, vector<1x4x4xbf16>
    %143 = vector.shape_cast %142 : vector<1x4x4xbf16> to vector<4x4xbf16>
    %c0_130 = arith.constant 0 : index
    %c20_131 = arith.constant 20 : index
    %144 = vector.load %arg11[%c0_130, %c20_131] : memref<4x384xbf16, #tpu.memory_space<vmem>>, vector<4x324xbf16>
    %cst_132 = arith.constant dense<0.000000e+00> : vector<4x324xf32>
    %145 = tpu.matmul %143, %144, %cst_132 {dimension_numbers = #tpu.dot_dimension_numbers<[1], [0], [0], [1], [0, 0, 1, 1], [], []>} : vector<4x4xbf16>, vector<4x324xbf16>, vector<4x324xf32> -> vector<4x324xf32>
    %146 = arith.addf %141, %145 : vector<4x324xf32>
    %c6_133 = arith.constant 6 : index
    %c0_134 = arith.constant 0 : index
    %c0_135 = arith.constant 0 : index
    %147 = vector.load %arg5[%c6_133, %c0_134, %c0_135] : memref<9x4x4xbf16, #tpu.memory_space<vmem>>, vector<1x4x4xbf16>
    %148 = vector.shape_cast %147 : vector<1x4x4xbf16> to vector<4x4xbf16>
    %c0_136 = arith.constant 0 : index
    %c36_137 = arith.constant 36 : index
    %149 = vector.load %arg10[%c0_136, %c36_137] : memref<4x384xbf16, #tpu.memory_space<vmem>>, vector<4x324xbf16>
    %cst_138 = arith.constant dense<0.000000e+00> : vector<4x324xf32>
    %150 = tpu.matmul %148, %149, %cst_138 {dimension_numbers = #tpu.dot_dimension_numbers<[1], [0], [0], [1], [0, 0, 1, 1], [], []>} : vector<4x4xbf16>, vector<4x324xbf16>, vector<4x324xf32> -> vector<4x324xf32>
    %151 = arith.addf %146, %150 : vector<4x324xf32>
    %c6_139 = arith.constant 6 : index
    %c0_140 = arith.constant 0 : index
    %c0_141 = arith.constant 0 : index
    %152 = vector.load %arg6[%c6_139, %c0_140, %c0_141] : memref<9x4x4xbf16, #tpu.memory_space<vmem>>, vector<1x4x4xbf16>
    %153 = vector.shape_cast %152 : vector<1x4x4xbf16> to vector<4x4xbf16>
    %c0_142 = arith.constant 0 : index
    %c36_143 = arith.constant 36 : index
    %154 = vector.load %arg11[%c0_142, %c36_143] : memref<4x384xbf16, #tpu.memory_space<vmem>>, vector<4x324xbf16>
    %cst_144 = arith.constant dense<0.000000e+00> : vector<4x324xf32>
    %155 = tpu.matmul %153, %154, %cst_144 {dimension_numbers = #tpu.dot_dimension_numbers<[1], [0], [0], [1], [0, 0, 1, 1], [], []>} : vector<4x4xbf16>, vector<4x324xbf16>, vector<4x324xf32> -> vector<4x324xf32>
    %156 = arith.addf %151, %155 : vector<4x324xf32>
    %c7_145 = arith.constant 7 : index
    %c0_146 = arith.constant 0 : index
    %c0_147 = arith.constant 0 : index
    %157 = vector.load %arg5[%c7_145, %c0_146, %c0_147] : memref<9x4x4xbf16, #tpu.memory_space<vmem>>, vector<1x4x4xbf16>
    %158 = vector.shape_cast %157 : vector<1x4x4xbf16> to vector<4x4xbf16>
    %c0_148 = arith.constant 0 : index
    %c37_149 = arith.constant 37 : index
    %159 = vector.load %arg10[%c0_148, %c37_149] : memref<4x384xbf16, #tpu.memory_space<vmem>>, vector<4x324xbf16>
    %cst_150 = arith.constant dense<0.000000e+00> : vector<4x324xf32>
    %160 = tpu.matmul %158, %159, %cst_150 {dimension_numbers = #tpu.dot_dimension_numbers<[1], [0], [0], [1], [0, 0, 1, 1], [], []>} : vector<4x4xbf16>, vector<4x324xbf16>, vector<4x324xf32> -> vector<4x324xf32>
    %161 = arith.addf %156, %160 : vector<4x324xf32>
    %c7_151 = arith.constant 7 : index
    %c0_152 = arith.constant 0 : index
    %c0_153 = arith.constant 0 : index
    %162 = vector.load %arg6[%c7_151, %c0_152, %c0_153] : memref<9x4x4xbf16, #tpu.memory_space<vmem>>, vector<1x4x4xbf16>
    %163 = vector.shape_cast %162 : vector<1x4x4xbf16> to vector<4x4xbf16>
    %c0_154 = arith.constant 0 : index
    %c37_155 = arith.constant 37 : index
    %164 = vector.load %arg11[%c0_154, %c37_155] : memref<4x384xbf16, #tpu.memory_space<vmem>>, vector<4x324xbf16>
    %cst_156 = arith.constant dense<0.000000e+00> : vector<4x324xf32>
    %165 = tpu.matmul %163, %164, %cst_156 {dimension_numbers = #tpu.dot_dimension_numbers<[1], [0], [0], [1], [0, 0, 1, 1], [], []>} : vector<4x4xbf16>, vector<4x324xbf16>, vector<4x324xf32> -> vector<4x324xf32>
    %166 = arith.addf %161, %165 : vector<4x324xf32>
    %c8_157 = arith.constant 8 : index
    %c0_158 = arith.constant 0 : index
    %c0_159 = arith.constant 0 : index
    %167 = vector.load %arg5[%c8_157, %c0_158, %c0_159] : memref<9x4x4xbf16, #tpu.memory_space<vmem>>, vector<1x4x4xbf16>
    %168 = vector.shape_cast %167 : vector<1x4x4xbf16> to vector<4x4xbf16>
    %c0_160 = arith.constant 0 : index
    %c38_161 = arith.constant 38 : index
    %169 = vector.load %arg10[%c0_160, %c38_161] : memref<4x384xbf16, #tpu.memory_space<vmem>>, vector<4x324xbf16>
    %cst_162 = arith.constant dense<0.000000e+00> : vector<4x324xf32>
    %170 = tpu.matmul %168, %169, %cst_162 {dimension_numbers = #tpu.dot_dimension_numbers<[1], [0], [0], [1], [0, 0, 1, 1], [], []>} : vector<4x4xbf16>, vector<4x324xbf16>, vector<4x324xf32> -> vector<4x324xf32>
    %171 = arith.addf %166, %170 : vector<4x324xf32>
    %c8_163 = arith.constant 8 : index
    %c0_164 = arith.constant 0 : index
    %c0_165 = arith.constant 0 : index
    %172 = vector.load %arg6[%c8_163, %c0_164, %c0_165] : memref<9x4x4xbf16, #tpu.memory_space<vmem>>, vector<1x4x4xbf16>
    %173 = vector.shape_cast %172 : vector<1x4x4xbf16> to vector<4x4xbf16>
    %c0_166 = arith.constant 0 : index
    %c38_167 = arith.constant 38 : index
    %174 = vector.load %arg11[%c0_166, %c38_167] : memref<4x384xbf16, #tpu.memory_space<vmem>>, vector<4x324xbf16>
    %cst_168 = arith.constant dense<0.000000e+00> : vector<4x324xf32>
    %175 = tpu.matmul %173, %174, %cst_168 {dimension_numbers = #tpu.dot_dimension_numbers<[1], [0], [0], [1], [0, 0, 1, 1], [], []>} : vector<4x4xbf16>, vector<4x324xbf16>, vector<4x324xf32> -> vector<4x324xf32>
    %176 = arith.addf %171, %175 : vector<4x324xf32>
    %c0_169 = arith.constant 0 : index
    %c0_170 = arith.constant 0 : index
    %177 = vector.load %arg7[%c0_169, %c0_170] : memref<4x1xf32, #tpu.memory_space<vmem>>, vector<4x1xf32>
    %178 = vector.broadcast %177 : vector<4x1xf32> to vector<4x324xf32>
    %179 = arith.addf %176, %178 : vector<4x324xf32>
    %cst_171 = arith.constant 5.000000e-01 : f32
    %180 = vector.broadcast %cst_171 : f32 to vector<4x324xf32>
    %181 = arith.mulf %180, %179 : vector<4x324xf32>
    %182 = arith.mulf %179, %179 : vector<4x324xf32>
    %183 = arith.mulf %182, %179 : vector<4x324xf32>
    %cst_172 = arith.constant 4.471500e-02 : f32
    %184 = vector.broadcast %cst_172 : f32 to vector<4x324xf32>
    %185 = arith.mulf %184, %183 : vector<4x324xf32>
    %186 = arith.addf %179, %185 : vector<4x324xf32>
    %cst_173 = arith.constant 0.797884583 : f32
    %187 = vector.broadcast %cst_173 : f32 to vector<4x324xf32>
    %188 = arith.mulf %187, %186 : vector<4x324xf32>
    %189 = math.tanh %188 : vector<4x324xf32>
    %cst_174 = arith.constant 1.000000e+00 : f32
    %190 = vector.broadcast %cst_174 : f32 to vector<4x324xf32>
    %191 = arith.addf %190, %189 : vector<4x324xf32>
    %192 = arith.mulf %181, %191 : vector<4x324xf32>
    %cst_175 = arith.constant 0.000000e+00 : f32
    %193 = vector.broadcast %cst_175 : f32 to vector<4x384xf32>
    %c0_176 = arith.constant 0 : index
    %c0_177 = arith.constant 0 : index
    %194 = vector.load %arg9[%c0_176, %c0_177] : memref<4x384xf32, #tpu.memory_space<vmem>>, vector<4x384xf32>
    tpu.vector_store %arg9[%c0_176, %c0_177], %193 {strides = array<i32>} : memref<4x384xf32, #tpu.memory_space<vmem>>, vector<4x384xf32>,
    %c0_178 = arith.constant 0 : index
    %c19_179 = arith.constant 19 : index
    %195 = vector.load %arg9[%c0_178, %c19_179] : memref<4x384xf32, #tpu.memory_space<vmem>>, vector<4x324xf32>
    tpu.vector_store %arg9[%c0_178, %c19_179], %192 {strides = array<i32>} : memref<4x384xf32, #tpu.memory_space<vmem>>, vector<4x324xf32>,
    return
  }
  func.func @transform_0(%arg0: i32) -> (i32, i32) {
    %c0_i32 = arith.constant 0 : i32
    %c0_i32_0 = arith.constant 0 : i32
    return %c0_i32, %arg0 : i32, i32
  }
  func.func @transform_1(%arg0: i32) -> (i32, i32) {
    %c0_i32 = arith.constant 0 : i32
    %c0_i32_0 = arith.constant 0 : i32
    return %c0_i32, %arg0 : i32, i32
  }
  func.func @transform_2(%arg0: i32) -> (i32, i32, i32) {
    %c0_i32 = arith.constant 0 : i32
    %c0_i32_0 = arith.constant 0 : i32
    %c0_i32_1 = arith.constant 0 : i32
    %c0_i32_2 = arith.constant 0 : i32
    return %c0_i32, %c0_i32_0, %c0_i32_1 : i32, i32, i32
  }
  func.func @transform_3(%arg0: i32) -> (i32, i32) {
    %c0_i32 = arith.constant 0 : i32
    %c0_i32_0 = arith.constant 0 : i32
    %c0_i32_1 = arith.constant 0 : i32
    return %c0_i32, %c0_i32_0 : i32, i32
  }
  func.func @transform_4(%arg0: i32) -> (i32, i32, i32) {
    %c0_i32 = arith.constant 0 : i32
    %c0_i32_0 = arith.constant 0 : i32
    %c0_i32_1 = arith.constant 0 : i32
    %c0_i32_2 = arith.constant 0 : i32
    return %c0_i32, %c0_i32_0, %c0_i32_1 : i32, i32, i32
  }
  func.func @transform_5(%arg0: i32) -> (i32, i32, i32) {
    %c0_i32 = arith.constant 0 : i32
    %c0_i32_0 = arith.constant 0 : i32
    %c0_i32_1 = arith.constant 0 : i32
    %c0_i32_2 = arith.constant 0 : i32
    return %c0_i32, %c0_i32_0, %c0_i32_1 : i32, i32, i32
  }
  func.func @transform_6(%arg0: i32) -> (i32, i32) {
    %c0_i32 = arith.constant 0 : i32
    %c0_i32_0 = arith.constant 0 : i32
    %c0_i32_1 = arith.constant 0 : i32
    return %c0_i32, %c0_i32_0 : i32, i32
  }
  func.func @transform_7(%arg0: i32) -> (i32, i32) {
    %c0_i32 = arith.constant 0 : i32
    %c0_i32_0 = arith.constant 0 : i32
    %c0_i32_1 = arith.constant 0 : i32
    return %c0_i32, %c0_i32_0 : i32, i32
  }
  func.func @transform_8(%arg0: i32) -> (i32, i32) {
    %c0_i32 = arith.constant 0 : i32
    %c0_i32_0 = arith.constant 0 : i32
    return %c0_i32, %arg0 : i32, i32
  }
}

</mosaic_0001>

<llo_original>
// kernel: tpu_custom_call.1
$region0: #{tpu_custom_call.1}
  #allocation0 [shape = 'u32[]', space=smem, size = 0x4, offset = 0x4, fixed_abs, tag = 'smem constant byte address 0x4 - core index']
  #allocation1 [shape = 'u32[144,128]{1,0:T(1,128)}', space=vmem, size = 0x12000, scoped, tag = 'internal scratch']
  #allocation2 [shape = 'bf16[4,384]{1,0:T(4,128)(2,1)}', space=vmem, size = 0xc00, scoped, tag = 'scratch operand']
  #allocation3 [shape = 'bf16[4,384]{1,0:T(4,128)(2,1)}', space=vmem, size = 0xc00, scoped, tag = 'scratch operand']
  %s0 = inlined_call_operand.vmem [shape: bf16[8,768], index: 0, kind: input, shape index: {}]
  %s1 = inlined_call_operand.vmem [shape: bf16[4,768], index: 1, kind: input, shape index: {}]
  %s2 = inlined_call_operand.vmem [shape: bf16[9,4,8], index: 2, kind: input, shape index: {}]
  %s3 = inlined_call_operand.vmem [shape: f32[4,1], index: 3, kind: input, shape index: {}]
  %s4 = inlined_call_operand.vmem [shape: bf16[9,4,4], index: 4, kind: input, shape index: {}]
  %s5 = inlined_call_operand.vmem [shape: bf16[9,4,4], index: 5, kind: input, shape index: {}]
  %s6 = inlined_call_operand.vmem [shape: f32[4,1], index: 6, kind: input, shape index: {}]
  %s7 = inlined_call_operand.vmem [shape: f32[1,324], index: 7, kind: input, shape index: {}]
  %s8 = inlined_call_operand.hbm [shape: f32[4,768], index: 8, kind: output, shape index: {}]
  %s9 = sld [smem:[#allocation0]]
  $region65: #{tpu_custom_call.1} parent=0
    _
  %s11 = ssub.s32 1, %s9
  %s12 = scalar_select 0, %s11, %s9
  $region1: #{tpu_custom_call.1} parent=0
    #allocation4 [shape = 'u8[12288]{0}', space=vmem, size = 0x3000, scoped, tag = 'output window, operand 0']
    #allocation5 [shape = 's32[2]{0}', space=sflag, size = 0x8, scoped, tag = 'scoped memory for tpu_custom_call.1']
    %13 = vsyncpa [#allocation5], 0
    %s14 = scalar_lea.sflag [#allocation5], 1
    %15 = vsyncpa %s14, 0
    loop: start=0, step=1, limit=4
    $region2: #{tpu_custom_call.1} parent=1 // loop_pre_header
      _
    $region3: #{tpu_custom_call.1} parent=1 // loop_header
      %s17 = sphi 0, %s21
      %p18 = scmp.ge.s32.totalorder %s17, 4
      %s27 = sphi 0, %s29
      %s30 = sphi 0, %s27
      %s31 = sphi 0, %s30
      %s47 = sphi 0, %s31
      %s53 = sphi 0, %s55
      %s56 = sphi 0, %s53
      %s57 = sphi 0, %s56
      %s73 = sphi 0, %s57
      %s77 = sphi 0, %s77
      %s79 = sphi 0, %s77
      %s80 = sphi 0, %s79
      %s94 = sphi 0, %s80
      %s98 = sphi 0, %s98
      %s100 = sphi 0, %s98
      %s101 = sphi 0, %s100
      %s115 = sphi 0, %s101
      %s119 = sphi 0, %s119
      %s121 = sphi 0, %s119
      %s122 = sphi 0, %s121
      %s136 = sphi 0, %s122
      %s140 = sphi 0, %s140
      %s142 = sphi 0, %s140
      %s143 = sphi 0, %s142
      %s157 = sphi 0, %s143
      %s161 = sphi 0, %s161
      %s163 = sphi 0, %s161
      %s164 = sphi 0, %s163
      %s178 = sphi 0, %s164
      %s182 = sphi 0, %s182
      %s184 = sphi 0, %s182
      %s185 = sphi 0, %s184
      %s199 = sphi 0, %s185
      %s205 = sphi 0, %s207
      %s208 = sphi 0, %s205
      %s209 = sphi 0, %s208
      %s225 = sphi 0, %s209
    $region4: #{tpu_custom_call.1} parent=1 // loop_header_branch
      %20 = sbr.rel (%p18) target = $region8
    $region5: #{tpu_custom_call.1} parent=1 // loop_body
      %s22 = ssub.s32 %s17, 1
      %s23 = ssub.s32 %s17, 2
      %s24 = sadd.s32 %s17, 1
      %s25 = ssub.s32 %s17, %s24
      %p26 = scmp.eq.s32.totalorder %s25, 0
      %s28 = sadd.s32 %s27, 1
      %s29 = scalar_select %p26, %s27, %s28
      %p32 = pneg %p26
      %p33 = scmp.eq.s32.totalorder %s17, 1
      %p34 = por %p32, %p33
      %p35 = scmp.ne.s32.totalorder %s27, %s30
      %p36 = scmp.eq.s32.totalorder %s17, 0
      %p37 = por %p35, %p36
      %p38 = scmp.ne.s32.totalorder %s27, %s30
      %p39 = scmp.eq.s32.totalorder %s22, 1
      %p40 = por %p38, %p39
      %p41 = scmp.ne.s32.totalorder %s30, %s31
      %p42 = scmp.eq.s32.totalorder %s22, 0
      %p43 = por %p41, %p42
      %p44 = scmp.ne.s32.totalorder %s30, %s31
      %p45 = scmp.eq.s32.totalorder %s23, 1
      %p46 = por %p44, %p45
      %p48 = scmp.ne.s32.totalorder %s31, %s47
      %p49 = scmp.eq.s32.totalorder %s23, 0
      %p50 = por %p48, %p49
      %s51 = ssub.s32 %s17, %s24
      %p52 = scmp.eq.s32.totalorder %s51, 0
      %s54 = sadd.s32 %s53, 1
      %s55 = scalar_select %p52, %s53, %s54
      %p58 = pneg %p52
      %p59 = scmp.eq.s32.totalorder %s17, 1
      %p60 = por %p58, %p59
      %p61 = scmp.ne.s32.totalorder %s53, %s56
      %p62 = scmp.eq.s32.totalorder %s17, 0
      %p63 = por %p61, %p62
      %p64 = scmp.ne.s32.totalorder %s53, %s56
      %p65 = scmp.eq.s32.totalorder %s22, 1
      %p66 = por %p64, %p65
      %p67 = scmp.ne.s32.totalorder %s56, %s57
      %p68 = scmp.eq.s32.totalorder %s22, 0
      %p69 = por %p67, %p68
      %p70 = scmp.ne.s32.totalorder %s56, %s57
      %p71 = scmp.eq.s32.totalorder %s23, 1
      %p72 = por %p70, %p71
      %p74 = scmp.ne.s32.totalorder %s57, %s73
      %p75 = scmp.eq.s32.totalorder %s23, 0
      %p76 = por %p74, %p75
      %s78 = sadd.s32 %s77, 1
      %p81 = scmp.eq.s32.totalorder %s17, 1
      %p82 = scmp.ne.s32.totalorder %s77, %s79
      %p83 = scmp.eq.s32.totalorder %s17, 0
      %p84 = por %p82, %p83
      %p85 = scmp.ne.s32.totalorder %s77, %s79
      %p86 = scmp.eq.s32.totalorder %s22, 1
      %p87 = por %p85, %p86
      %p88 = scmp.ne.s32.totalorder %s79, %s80
      %p89 = scmp.eq.s32.totalorder %s22, 0
      %p90 = por %p88, %p89
      %p91 = scmp.ne.s32.totalorder %s79, %s80
      %p92 = scmp.eq.s32.totalorder %s23, 1
      %p93 = por %p91, %p92
      %p95 = scmp.ne.s32.totalorder %s80, %s94
      %p96 = scmp.eq.s32.totalorder %s23, 0
      %p97 = por %p95, %p96
      %s99 = sadd.s32 %s98, 1
      %p102 = scmp.eq.s32.totalorder %s17, 1
      %p103 = scmp.ne.s32.totalorder %s98, %s100
      %p104 = scmp.eq.s32.totalorder %s17, 0
      %p105 = por %p103, %p104
      %p106 = scmp.ne.s32.totalorder %s98, %s100
      %p107 = scmp.eq.s32.totalorder %s22, 1
      %p108 = por %p106, %p107
      %p109 = scmp.ne.s32.totalorder %s100, %s101
      %p110 = scmp.eq.s32.totalorder %s22, 0
      %p111 = por %p109, %p110
      %p112 = scmp.ne.s32.totalorder %s100, %s101
      %p113 = scmp.eq.s32.totalorder %s23, 1
      %p114 = por %p112, %p113
      %p116 = scmp.ne.s32.totalorder %s101, %s115
      %p117 = scmp.eq.s32.totalorder %s23, 0
      %p118 = por %p116, %p117
      %s120 = sadd.s32 %s119, 1
      %p123 = scmp.eq.s32.totalorder %s17, 1
      %p124 = scmp.ne.s32.totalorder %s119, %s121
      %p125 = scmp.eq.s32.totalorder %s17, 0
      %p126 = por %p124, %p125
      %p127 = scmp.ne.s32.totalorder %s119, %s121
      %p128 = scmp.eq.s32.totalorder %s22, 1
      %p129 = por %p127, %p128
      %p130 = scmp.ne.s32.totalorder %s121, %s122
      %p131 = scmp.eq.s32.totalorder %s22, 0
      %p132 = por %p130, %p131
      %p133 = scmp.ne.s32.totalorder %s121, %s122
      %p134 = scmp.eq.s32.totalorder %s23, 1
      %p135 = por %p133, %p134
      %p137 = scmp.ne.s32.totalorder %s122, %s136
      %p138 = scmp.eq.s32.totalorder %s23, 0
      %p139 = por %p137, %p138
      %s141 = sadd.s32 %s140, 1
      %p144 = scmp.eq.s32.totalorder %s17, 1
      %p145 = scmp.ne.s32.totalorder %s140, %s142
      %p146 = scmp.eq.s32.totalorder %s17, 0
      %p147 = por %p145, %p146
      %p148 = scmp.ne.s32.totalorder %s140, %s142
      %p149 = scmp.eq.s32.totalorder %s22, 1
      %p150 = por %p148, %p149
      %p151 = scmp.ne.s32.totalorder %s142, %s143
      %p152 = scmp.eq.s32.totalorder %s22, 0
      %p153 = por %p151, %p152
      %p154 = scmp.ne.s32.totalorder %s142, %s143
      %p155 = scmp.eq.s32.totalorder %s23, 1
      %p156 = por %p154, %p155
      %p158 = scmp.ne.s32.totalorder %s143, %s157
      %p159 = scmp.eq.s32.totalorder %s23, 0
      %p160 = por %p158, %p159
      %s162 = sadd.s32 %s161, 1
      %p165 = scmp.eq.s32.totalorder %s17, 1
      %p166 = scmp.ne.s32.totalorder %s161, %s163
      %p167 = scmp.eq.s32.totalorder %s17, 0
      %p168 = por %p166, %p167
      %p169 = scmp.ne.s32.totalorder %s161, %s163
      %p170 = scmp.eq.s32.totalorder %s22, 1
      %p171 = por %p169, %p170
      %p172 = scmp.ne.s32.totalorder %s163, %s164
      %p173 = scmp.eq.s32.totalorder %s22, 0
      %p174 = por %p172, %p173
      %p175 = scmp.ne.s32.totalorder %s163, %s164
      %p176 = scmp.eq.s32.totalorder %s23, 1
      %p177 = por %p175, %p176
      %p179 = scmp.ne.s32.totalorder %s164, %s178
      %p180 = scmp.eq.s32.totalorder %s23, 0
      %p181 = por %p179, %p180
      %s183 = sadd.s32 %s182, 1
      %p186 = scmp.eq.s32.totalorder %s17, 1
      %p187 = scmp.ne.s32.totalorder %s182, %s184
      %p188 = scmp.eq.s32.totalorder %s17, 0
      %p189 = por %p187, %p188
      %p190 = scmp.ne.s32.totalorder %s182, %s184
      %p191 = scmp.eq.s32.totalorder %s22, 1
      %p192 = por %p190, %p191
      %p193 = scmp.ne.s32.totalorder %s184, %s185
      %p194 = scmp.eq.s32.totalorder %s22, 0
      %p195 = por %p193, %p194
      %p196 = scmp.ne.s32.totalorder %s184, %s185
      %p197 = scmp.eq.s32.totalorder %s23, 1
      %p198 = por %p196, %p197
      %p200 = scmp.ne.s32.totalorder %s185, %s199
      %p201 = scmp.eq.s32.totalorder %s23, 0
      %p202 = por %p200, %p201
      %s203 = ssub.s32 %s17, %s24
      %p204 = scmp.eq.s32.totalorder %s203, 0
      %s206 = sadd.s32 %s205, 1
      %s207 = scalar_select %p204, %s205, %s206
      %p210 = pneg %p204
      %p211 = scmp.eq.s32.totalorder %s17, 1
      %p212 = por %p210, %p211
      %p213 = scmp.ne.s32.totalorder %s205, %s208
      %p214 = scmp.eq.s32.totalorder %s17, 0
      %p215 = por %p213, %p214
      %p216 = scmp.ne.s32.totalorder %s205, %s208
      %p217 = scmp.eq.s32.totalorder %s22, 1
      %p218 = por %p216, %p217
      %p219 = scmp.ne.s32.totalorder %s208, %s209
      %p220 = scmp.eq.s32.totalorder %s22, 0
      %p221 = por %p219, %p220
      %p222 = scmp.ne.s32.totalorder %s208, %s209
      %p223 = scmp.eq.s32.totalorder %s23, 1
      %p224 = por %p222, %p223
      %p226 = scmp.ne.s32.totalorder %s209, %s225
      %p227 = scmp.eq.s32.totalorder %s23, 0
      %p228 = por %p226, %p227
      %p229 = scmp.le.s32.totalorder 1, %s17
      %p230 = scmp.lt.s32.totalorder %s17, 3
      %p231 = pnand %p229, %p230
      %p232 = pneg %p231
      // Predicated region
      $region9: #{tpu_custom_call.1} parent=5 // pred_check
        _
      $region10: #{tpu_custom_call.1} parent=5 // pred_check_branch
        %234 = sbr.rel (%p231) target = $region12
      $region11: #{tpu_custom_call.1} parent=5 // pred_region
        %s235 = ssub.s32 %s17, 1
        // Predicated region
        $region13: #{tpu_custom_call.1} parent=11 // pred_check
          %p236 = pneg %p90
        $region14: #{tpu_custom_call.1} parent=11 // pred_check_branch
          %238 = sbr.rel (%p236) target = $region16
        $region15: #{tpu_custom_call.1} parent=11 // pred_region
          _
        $region16: #{tpu_custom_call.1} parent=11 // pred_fallthru
          _
        // Predicated region
        $region17: #{tpu_custom_call.1} parent=11 // pred_check
          %p239 = pneg %p111
        $region18: #{tpu_custom_call.1} parent=11 // pred_check_branch
          %241 = sbr.rel (%p239) target = $region20
        $region19: #{tpu_custom_call.1} parent=11 // pred_region
          _
        $region20: #{tpu_custom_call.1} parent=11 // pred_fallthru
          _
        // Predicated region
        $region21: #{tpu_custom_call.1} parent=11 // pred_check
          %p242 = pneg %p132
        $region22: #{tpu_custom_call.1} parent=11 // pred_check_branch
          %244 = sbr.rel (%p242) target = $region24
        $region23: #{tpu_custom_call.1} parent=11 // pred_region
          _
        $region24: #{tpu_custom_call.1} parent=11 // pred_fallthru
          _
        // Predicated region
        $region25: #{tpu_custom_call.1} parent=11 // pred_check
          %p245 = pneg %p153
        $region26: #{tpu_custom_call.1} parent=11 // pred_check_branch
          %247 = sbr.rel (%p245) target = $region28
        $region27: #{tpu_custom_call.1} parent=11 // pred_region
          _
        $region28: #{tpu_custom_call.1} parent=11 // pred_fallthru
          _
        // Predicated region
        $region29: #{tpu_custom_call.1} parent=11 // pred_check
          %p248 = pneg %p174
        $region30: #{tpu_custom_call.1} parent=11 // pred_check_branch
          %250 = sbr.rel (%p248) target = $region32
        $region31: #{tpu_custom_call.1} parent=11 // pred_region
          _
        $region32: #{tpu_custom_call.1} parent=11 // pred_fallthru
          _
        // Predicated region
        $region33: #{tpu_custom_call.1} parent=11 // pred_check
          %p251 = pneg %p195
        $region34: #{tpu_custom_call.1} parent=11 // pred_check_branch
          %253 = sbr.rel (%p251) target = $region36
        $region35: #{tpu_custom_call.1} parent=11 // pred_region
          _
        $region36: #{tpu_custom_call.1} parent=11 // pred_fallthru
          _
      $region12: #{tpu_custom_call.1} parent=5 // pred_fallthru
        _
      %p254 = scmp.lt.s32.totalorder %s17, 2
      // Predicated region
      $region37: #{tpu_custom_call.1} parent=5 // pred_check
        %p255 = pneg %p254
      $region38: #{tpu_custom_call.1} parent=5 // pred_check_branch
        %257 = sbr.rel (%p255) target = $region40
      $region39: #{tpu_custom_call.1} parent=5 // pred_region
        // Predicated region
        $region41: #{tpu_custom_call.1} parent=39 // pred_check
          %p258 = pneg %p37
        $region42: #{tpu_custom_call.1} parent=39 // pred_check_branch
          %260 = sbr.rel (%p258) target = $region44
        $region43: #{tpu_custom_call.1} parent=39 // pred_region
          %s261 = smul.u32 3, %s17
          %p262 = scmp.lt.s32.totalorder %s261, 5
          %s263 = scalar_select %p262, %s261, 5
          %s264 = smul.addr %s263, 4
          %s265 = scalar_lea.vmem %s0, %s264
          %s266 = smul.u32 3, %s17
        $region44: #{tpu_custom_call.1} parent=39 // pred_fallthru
          _
        // Predicated region
        $region45: #{tpu_custom_call.1} parent=39 // pred_check
          %p267 = pneg %p63
        $region46: #{tpu_custom_call.1} parent=39 // pred_check_branch
          %269 = sbr.rel (%p267) target = $region48
        $region47: #{tpu_custom_call.1} parent=39 // pred_region
          %s270 = smul.u32 3, %s17
          %p271 = scmp.lt.s32.totalorder %s270, 5
          %s272 = scalar_select %p271, %s270, 5
          %s273 = smul.addr %s272, 2
          %s274 = scalar_lea.vmem %s1, %s273
          %s275 = smul.u32 3, %s17
        $region48: #{tpu_custom_call.1} parent=39 // pred_fallthru
          _
      $region40: #{tpu_custom_call.1} parent=5 // pred_fallthru
        _
      %p276 = scmp.le.s32.totalorder 1, %s17
      %p277 = scmp.lt.s32.totalorder %s17, 3
      %p278 = pnand %p276, %p277
      %p279 = pneg %p278
      // Predicated region
      $region49: #{tpu_custom_call.1} parent=5 // pred_check
        _
      $region50: #{tpu_custom_call.1} parent=5 // pred_check_branch
        %281 = sbr.rel (%p278) target = $region52
      $region51: #{tpu_custom_call.1} parent=5 // pred_region
        %s282 = ssub.s32 %s17, 1
        %s283 = smul.u32 3, %s22
        %p284 = scmp.lt.s32.totalorder %s283, 5
        %s285 = scalar_select %p284, %s283, 5
        %s286 = smul.addr %s285, 4
        %s287 = scalar_lea.vmem %s0, %s286
        %p288 = pneg %p43
        %p289 = pneg %p40
        %s290 = smul.u32 3, %s22
        %p291 = scmp.lt.s32.totalorder %s290, 5
        %s292 = scalar_select %p291, %s290, 5
        %s293 = smul.addr %s292, 2
        %s294 = scalar_lea.vmem %s1, %s293
        %p295 = pneg %p69
        %p296 = pneg %p66
        %p297 = pneg %p90
        %p298 = pneg %p87
        %p299 = pneg %p111
        %p300 = pneg %p108
        %p301 = pneg %p132
        %p302 = pneg %p129
        %p303 = pneg %p153
        %p304 = pneg %p150
        %p305 = pneg %p174
        %p306 = pneg %p171
        %p307 = pneg %p195
        %p308 = pneg %p192
        %p309 = pneg %p221
        %p310 = pneg %p218
        %s311 = sand.u32 %s208, 1
        %s312 = scalar_lea.sflag [#allocation5], %s311
        %s313 = sand.u32 %s208, 1
        %s314 = smul.addr %s313, 12
        %s315 = scalar_lea.vmem [#allocation4], %s314
        %s316 = smul.u32 3, %s22
        %p317 = scmp.lt.s32.totalorder %s316, 5
        %s318 = scalar_select %p317, %s316, 5
        %s319 = smul.addr %s318, 4
        %s320 = scalar_lea.vmem %s0, %s319
        %s321 = smul.u32 3, %s22
        %s322 = smul.u32 3, %s22
        %p323 = scmp.lt.s32.totalorder %s322, 5
        %s324 = scalar_select %p323, %s322, 5
        %s325 = smul.addr %s324, 2
        %s326 = scalar_lea.vmem %s1, %s325
        %s327 = smul.u32 3, %s22
        %s328 = smul.u32 3, %s22
        %v330 = vld [vmem:[%s320] sm:$0xff]
        %v331 = vld [vmem:[%s320 + $0x8] sm:$0xf]
        %v332 = vld [vmem:[%s2] sm:$0x3]
        %s333 = scalar_lea.vmem %s2, 2
        %v334 = vld [vmem:[%s333] sm:$0x3]
        %v337 = vunpack.c.l.b16 %v330
        %v338 = vunpack.c.h.b16 %v330
        %v339 = vunpack.c.l.b16 %v331
        %v340 = vpack.c.b16 %v337, %v337
        %v341 = vpack.c.b16 %v338, %v338
        %v342 = vpack.c.b16 %v339, %v339
        %343 = vrot.lane.b32.xlu0 %v340, 127
        %v344 = vpop.permute.xlu0 %343
        %345 = vrot.lane.b32.xlu0 %v341, 127
        %v346 = vpop.permute.xlu0 %345
        %347 = vrot.lane.b32.xlu0 %v342, 127
        %v348 = vpop.permute.xlu0 %347
        %vm349 = vcmask 1039360
        %v350 = vsel %vm349, %v344, %v346
        %v351 = vsel %vm349, %v346, %v348
        %vm352 = vcmask 64512
        %v354 = vsel %vm352, %v334, 0
        %vm356 = vcmask 1043456
        %v358 = vsel %vm356, %v350, 0
        %v361 = vsel %vm356, %v351, 0
        %v364 = vsel %vm356, %v348, 0
        %366 = vmatprep.subr.bf16.mxu0 %v361
        %367 = vmatpush1.bf16.msra.mxu0 %v358
        %368 = vmatprep.subr.bf16.mxu0 0
        %369 = vmatpush1.bf16.msra.mxu0 0
        %370 = vmatprep.subr.bf16.mxu0 0
        %371 = vmatpush1.bf16.msra.mxu0 0
        %372 = vmatprep.subr.bf16.mxu0 0
        %373 = vmatpush1.bf16.msra.mxu0 0
        %374 = vmatprep.subr.bf16.mxu0 0
        %375 = vmatpush1.bf16.msra.mxu0 0
        %376 = vmatprep.subr.bf16.mxu0 0
        %377 = vmatpush1.bf16.msra.mxu0 0
        %378 = vmatprep.subr.bf16.mxu0 0
        %379 = vmatpush1.bf16.msra.mxu0 0
        %380 = vmatprep.subr.bf16.mxu0 0
        %381 = vmatpush1.bf16.msra.mxu0 0
        %382 = vmatprep.subr.bf16.mxu0 0
        %383 = vmatpush1.bf16.msra.mxu0 0
        %384 = vmatprep.subr.bf16.mxu0 0
        %385 = vmatpush1.bf16.msra.mxu0 0
        %386 = vmatprep.subr.bf16.mxu0 0
        %387 = vmatpush1.bf16.msra.mxu0 0
        %388 = vmatprep.subr.bf16.mxu0 0
        %389 = vmatpush1.bf16.msra.mxu0 0
        %390 = vmatprep.subr.bf16.mxu0 0
        %391 = vmatpush1.bf16.msra.mxu0 0
        %392 = vmatprep.subr.bf16.mxu0 0
        %393 = vmatpush1.bf16.msra.mxu0 0
        %394 = vmatprep.subr.bf16.mxu0 0
        %395 = vmatpush1.bf16.msra.mxu0 0
        %396 = vmatprep.subr.bf16.mxu0 0
        %397 = vmatpush1.bf16.msra.mxu0 0
        %398 = vmatprep.mubr.bf16.mxu0 0
        %399 = vmatmul.mubr.bf16.gmra.mrb[0].mxu0 %v354
        %v400 = vpop.f32.mrb[0].mxu0
        %v401 = vadd.f32 0.0, %v400
        %v402 = vpop.f32.mrb[0].mxu0
        %v403 = vadd.f32 0.0, %v402
        %v404 = vpop.f32.mrb[0].mxu0
        %v405 = vpop.f32.mrb[0].mxu0
        %406 = vdwg.mxu0
        %407 = vmatprep.subr.bf16.mxu0 0
        %408 = vmatpush1.bf16.msra.mxu0 %v364
        %409 = vmatprep.subr.bf16.mxu0 0
        %410 = vmatpush1.bf16.msra.mxu0 0
        %411 = vmatprep.subr.bf16.mxu0 0
        %412 = vmatpush1.bf16.msra.mxu0 0
        %413 = vmatprep.subr.bf16.mxu0 0
        %414 = vmatpush1.bf16.msra.mxu0 0
        %415 = vmatprep.subr.bf16.mxu0 0
        %416 = vmatpush1.bf16.msra.mxu0 0
        %417 = vmatprep.subr.bf16.mxu0 0
        %418 = vmatpush1.bf16.msra.mxu0 0
        %419 = vmatprep.subr.bf16.mxu0 0
        %420 = vmatpush1.bf16.msra.mxu0 0
        %421 = vmatprep.subr.bf16.mxu0 0
        %422 = vmatpush1.bf16.msra.mxu0 0
        %423 = vmatprep.subr.bf16.mxu0 0
        %424 = vmatpush1.bf16.msra.mxu0 0
        %425 = vmatprep.subr.bf16.mxu0 0
        %426 = vmatpush1.bf16.msra.mxu0 0
        %427 = vmatprep.subr.bf16.mxu0 0
        %428 = vmatpush1.bf16.msra.mxu0 0
        %429 = vmatprep.subr.bf16.mxu0 0
        %430 = vmatpush1.bf16.msra.mxu0 0
        %431 = vmatprep.subr.bf16.mxu0 0
        %432 = vmatpush1.bf16.msra.mxu0 0
        %433 = vmatprep.subr.bf16.mxu0 0
        %434 = vmatpush1.bf16.msra.mxu0 0
        %435 = vmatprep.subr.bf16.mxu0 0
        %436 = vmatpush1.bf16.msra.mxu0 0
        %437 = vmatprep.subr.bf16.mxu0 0
        %438 = vmatpush1.bf16.msra.mxu0 0
        %439 = vmatprep.mubr.bf16.mxu0 0
        %440 = vmatmul.mubr.bf16.gmra.mrb[0].mxu0 %v354
        %v441 = vpop.f32.mrb[0].mxu0
        %v442 = vadd.f32 0.0, %v441
        %v443 = vpop.f32.mrb[0].mxu0
        %v444 = vpop.f32.mrb[0].mxu0
        %v445 = vpop.f32.mrb[0].mxu0
        %446 = vdwg.mxu0
        %v448 = vsel %vm352, %v332, 0
        %v451 = vsel %vm356, %v340, 0
        %v454 = vsel %vm356, %v341, 0
        %v457 = vsel %vm356, %v342, 0
        %459 = vmatprep.subr.bf16.mxu0 %v454
        %460 = vmatpush1.bf16.msra.mxu0 %v451
        %461 = vmatprep.subr.bf16.mxu0 0
        %462 = vmatpush1.bf16.msra.mxu0 0
        %463 = vmatprep.subr.bf16.mxu0 0
        %464 = vmatpush1.bf16.msra.mxu0 0
        %465 = vmatprep.subr.bf16.mxu0 0
        %466 = vmatpush1.bf16.msra.mxu0 0
        %467 = vmatprep.subr.bf16.mxu0 0
        %468 = vmatpush1.bf16.msra.mxu0 0
        %469 = vmatprep.subr.bf16.mxu0 0
        %470 = vmatpush1.bf16.msra.mxu0 0
        %471 = vmatprep.subr.bf16.mxu0 0
        %472 = vmatpush1.bf16.msra.mxu0 0
        %473 = vmatprep.subr.bf16.mxu0 0
        %474 = vmatpush1.bf16.msra.mxu0 0
        %475 = vmatprep.subr.bf16.mxu0 0
        %476 = vmatpush1.bf16.msra.mxu0 0
        %477 = vmatprep.subr.bf16.mxu0 0
        %478 = vmatpush1.bf16.msra.mxu0 0
        %479 = vmatprep.subr.bf16.mxu0 0
        %480 = vmatpush1.bf16.msra.mxu0 0
        %481 = vmatprep.subr.bf16.mxu0 0
        %482 = vmatpush1.bf16.msra.mxu0 0
        %483 = vmatprep.subr.bf16.mxu0 0
        %484 = vmatpush1.bf16.msra.mxu0 0
        %485 = vmatprep.subr.bf16.mxu0 0
        %486 = vmatpush1.bf16.msra.mxu0 0
        %487 = vmatprep.subr.bf16.mxu0 0
        %488 = vmatpush1.bf16.msra.mxu0 0
        %489 = vmatprep.subr.bf16.mxu0 0
        %490 = vmatpush1.bf16.msra.mxu0 0
        %491 = vmatprep.mubr.bf16.mxu0 0
        %492 = vmatmul.mubr.bf16.gmra.mrb[0].mxu0 %v448
        %v493 = vpop.f32.mrb[0].mxu0
        %v494 = vadd.f32 %v401, %v493
        %v495 = vpop.f32.mrb[0].mxu0
        %v496 = vadd.f32 %v403, %v495
        %v497 = vpop.f32.mrb[0].mxu0
        %v498 = vpop.f32.mrb[0].mxu0
        %499 = vdwg.mxu0
        %500 = vmatprep.subr.bf16.mxu0 0
        %501 = vmatpush1.bf16.msra.mxu0 %v457
        %502 = vmatprep.subr.bf16.mxu0 0
        %503 = vmatpush1.bf16.msra.mxu0 0
        %504 = vmatprep.subr.bf16.mxu0 0
        %505 = vmatpush1.bf16.msra.mxu0 0
        %506 = vmatprep.subr.bf16.mxu0 0
        %507 = vmatpush1.bf16.msra.mxu0 0
        %508 = vmatprep.subr.bf16.mxu0 0
        %509 = vmatpush1.bf16.msra.mxu0 0
        %510 = vmatprep.subr.bf16.mxu0 0
        %511 = vmatpush1.bf16.msra.mxu0 0
        %512 = vmatprep.subr.bf16.mxu0 0
        %513 = vmatpush1.bf16.msra.mxu0 0
        %514 = vmatprep.subr.bf16.mxu0 0
        %515 = vmatpush1.bf16.msra.mxu0 0
        %516 = vmatprep.subr.bf16.mxu0 0
        %517 = vmatpush1.bf16.msra.mxu0 0
        %518 = vmatprep.subr.bf16.mxu0 0
        %519 = vmatpush1.bf16.msra.mxu0 0
        %520 = vmatprep.subr.bf16.mxu0 0
        %521 = vmatpush1.bf16.msra.mxu0 0
        %522 = vmatprep.subr.bf16.mxu0 0
        %523 = vmatpush1.bf16.msra.mxu0 0
        %524 = vmatprep.subr.bf16.mxu0 0
        %525 = vmatpush1.bf16.msra.mxu0 0
        %526 = vmatprep.subr.bf16.mxu0 0
        %527 = vmatpush1.bf16.msra.mxu0 0
        %528 = vmatprep.subr.bf16.mxu0 0
        %529 = vmatpush1.bf16.msra.mxu0 0
        %530 = vmatprep.subr.bf16.mxu0 0
        %531 = vmatpush1.bf16.msra.mxu0 0
        %532 = vmatprep.mubr.bf16.mxu0 0
        %533 = vmatmul.mubr.bf16.gmra.mrb[0].mxu0 %v448
        %v534 = vpop.f32.mrb[0].mxu0
        %v535 = vadd.f32 %v442, %v534
        %v536 = vpop.f32.mrb[0].mxu0
        %v537 = vpop.f32.mrb[0].mxu0
        %v538 = vpop.f32.mrb[0].mxu0
        %539 = vdwg.mxu0
        %s540 = scalar_lea.vmem %s2, 4
        %v541 = vld [vmem:[%s540] sm:$0x3]
        %542 = vrot.lane.b32.xlu0 %v340, 126
        %v543 = vpop.permute.xlu0 %542
        %544 = vrot.lane.b32.xlu0 %v341, 126
        %v545 = vpop.permute.xlu0 %544
        %546 = vrot.lane.b32.xlu0 %v342, 126
        %v547 = vpop.permute.xlu0 %546
        %vm548 = vcmask 1031168
        %v549 = vsel %vm548, %v543, %v545
        %v550 = vsel %vm548, %v545, %v547
        %v552 = vsel %vm352, %v541, 0
        %v555 = vsel %vm356, %v549, 0
        %v558 = vsel %vm356, %v550, 0
        %v561 = vsel %vm356, %v547, 0
        %563 = vmatprep.subr.bf16.mxu0 %v558
        %564 = vmatpush1.bf16.msra.mxu0 %v555
        %565 = vmatprep.subr.bf16.mxu0 0
        %566 = vmatpush1.bf16.msra.mxu0 0
        %567 = vmatprep.subr.bf16.mxu0 0
        %568 = vmatpush1.bf16.msra.mxu0 0
        %569 = vmatprep.subr.bf16.mxu0 0
        %570 = vmatpush1.bf16.msra.mxu0 0
        %571 = vmatprep.subr.bf16.mxu0 0
        %572 = vmatpush1.bf16.msra.mxu0 0
        %573 = vmatprep.subr.bf16.mxu0 0
        %574 = vmatpush1.bf16.msra.mxu0 0
        %575 = vmatprep.subr.bf16.mxu0 0
        %576 = vmatpush1.bf16.msra.mxu0 0
        %577 = vmatprep.subr.bf16.mxu0 0
        %578 = vmatpush1.bf16.msra.mxu0 0
        %579 = vmatprep.subr.bf16.mxu0 0
        %580 = vmatpush1.bf16.msra.mxu0 0
        %581 = vmatprep.subr.bf16.mxu0 0
        %582 = vmatpush1.bf16.msra.mxu0 0
        %583 = vmatprep.subr.bf16.mxu0 0
        %584 = vmatpush1.bf16.msra.mxu0 0
        %585 = vmatprep.subr.bf16.mxu0 0
        %586 = vmatpush1.bf16.msra.mxu0 0
        %587 = vmatprep.subr.bf16.mxu0 0
        %588 = vmatpush1.bf16.msra.mxu0 0
        %589 = vmatprep.subr.bf16.mxu0 0
        %590 = vmatpush1.bf16.msra.mxu0 0
        %591 = vmatprep.subr.bf16.mxu0 0
        %592 = vmatpush1.bf16.msra.mxu0 0
        %593 = vmatprep.subr.bf16.mxu0 0
        %594 = vmatpush1.bf16.msra.mxu0 0
        %595 = vmatprep.mubr.bf16.mxu0 0
        %596 = vmatmul.mubr.bf16.gmra.mrb[0].mxu0 %v552
        %v597 = vpop.f32.mrb[0].mxu0
        %v598 = vadd.f32 0.0, %v597
        %v599 = vpop.f32.mrb[0].mxu0
        %v600 = vadd.f32 0.0, %v599
        %v601 = vpop.f32.mrb[0].mxu0
        %v602 = vpop.f32.mrb[0].mxu0
        %603 = vdwg.mxu0
        %604 = vmatprep.subr.bf16.mxu0 0
        %605 = vmatpush1.bf16.msra.mxu0 %v561
        %606 = vmatprep.subr.bf16.mxu0 0
        %607 = vmatpush1.bf16.msra.mxu0 0
        %608 = vmatprep.subr.bf16.mxu0 0
        %609 = vmatpush1.bf16.msra.mxu0 0
        %610 = vmatprep.subr.bf16.mxu0 0
        %611 = vmatpush1.bf16.msra.mxu0 0
        %612 = vmatprep.subr.bf16.mxu0 0
        %613 = vmatpush1.bf16.msra.mxu0 0
        %614 = vmatprep.subr.bf16.mxu0 0
        %615 = vmatpush1.bf16.msra.mxu0 0
        %616 = vmatprep.subr.bf16.mxu0 0
        %617 = vmatpush1.bf16.msra.mxu0 0
        %618 = vmatprep.subr.bf16.mxu0 0
        %619 = vmatpush1.bf16.msra.mxu0 0
        %620 = vmatprep.subr.bf16.mxu0 0
        %621 = vmatpush1.bf16.msra.mxu0 0
        %622 = vmatprep.subr.bf16.mxu0 0
        %623 = vmatpush1.bf16.msra.mxu0 0
        %624 = vmatprep.subr.bf16.mxu0 0
        %625 = vmatpush1.bf16.msra.mxu0 0
        %626 = vmatprep.subr.bf16.mxu0 0
        %627 = vmatpush1.bf16.msra.mxu0 0
        %628 = vmatprep.subr.bf16.mxu0 0
        %629 = vmatpush1.bf16.msra.mxu0 0
        %630 = vmatprep.subr.bf16.mxu0 0
        %631 = vmatpush1.bf16.msra.mxu0 0
        %632 = vmatprep.subr.bf16.mxu0 0
        %633 = vmatpush1.bf16.msra.mxu0 0
        %634 = vmatprep.subr.bf16.mxu0 0
        %635 = vmatpush1.bf16.msra.mxu0 0
        %636 = vmatprep.mubr.bf16.mxu0 0
        %637 = vmatmul.mubr.bf16.gmra.mrb[0].mxu0 %v552
        %v638 = vpop.f32.mrb[0].mxu0
        %v639 = vadd.f32 0.0, %v638
        %v640 = vpop.f32.mrb[0].mxu0
        %v641 = vpop.f32.mrb[0].mxu0
        %v642 = vpop.f32.mrb[0].mxu0
        %643 = vdwg.mxu0
        %v644 = vadd.f32 %v494, %v598
        %v645 = vadd.f32 %v496, %v600
        %v646 = vadd.f32 %v535, %v639
        %s647 = scalar_lea.vmem %s2, 6
        %v648 = vld [vmem:[%s647] sm:$0x3]
        %649 = vrot.lane.b32.xlu0 %v340, 110
        %v650 = vpop.permute.xlu0 %649
        %651 = vrot.lane.b32.xlu0 %v341, 110
        %v652 = vpop.permute.xlu0 %651
        %653 = vrot.lane.b32.xlu0 %v342, 110
        %v654 = vpop.permute.xlu0 %653
        %vm655 = vcmask 900096
        %v656 = vsel %vm655, %v650, %v652
        %v657 = vsel %vm655, %v652, %v654
        %v659 = vsel %vm352, %v648, 0
        %v662 = vsel %vm356, %v656, 0
        %v665 = vsel %vm356, %v657, 0
        %v668 = vsel %vm356, %v654, 0
        %670 = vmatprep.subr.bf16.mxu0 %v665
        %671 = vmatpush1.bf16.msra.mxu0 %v662
        %672 = vmatprep.subr.bf16.mxu0 0
        %673 = vmatpush1.bf16.msra.mxu0 0
        %674 = vmatprep.subr.bf16.mxu0 0
        %675 = vmatpush1.bf16.msra.mxu0 0
        %676 = vmatprep.subr.bf16.mxu0 0
        %677 = vmatpush1.bf16.msra.mxu0 0
        %678 = vmatprep.subr.bf16.mxu0 0
        %679 = vmatpush1.bf16.msra.mxu0 0
        %680 = vmatprep.subr.bf16.mxu0 0
        %681 = vmatpush1.bf16.msra.mxu0 0
        %682 = vmatprep.subr.bf16.mxu0 0
        %683 = vmatpush1.bf16.msra.mxu0 0
        %684 = vmatprep.subr.bf16.mxu0 0
        %685 = vmatpush1.bf16.msra.mxu0 0
        %686 = vmatprep.subr.bf16.mxu0 0
        %687 = vmatpush1.bf16.msra.mxu0 0
        %688 = vmatprep.subr.bf16.mxu0 0
        %689 = vmatpush1.bf16.msra.mxu0 0
        %690 = vmatprep.subr.bf16.mxu0 0
        %691 = vmatpush1.bf16.msra.mxu0 0
        %692 = vmatprep.subr.bf16.mxu0 0
        %693 = vmatpush1.bf16.msra.mxu0 0
        %694 = vmatprep.subr.bf16.mxu0 0
        %695 = vmatpush1.bf16.msra.mxu0 0
        %696 = vmatprep.subr.bf16.mxu0 0
        %697 = vmatpush1.bf16.msra.mxu0 0
        %698 = vmatprep.subr.bf16.mxu0 0
        %699 = vmatpush1.bf16.msra.mxu0 0
        %700 = vmatprep.subr.bf16.mxu0 0
        %701 = vmatpush1.bf16.msra.mxu0 0
        %702 = vmatprep.mubr.bf16.mxu0 0
        %703 = vmatmul.mubr.bf16.gmra.mrb[0].mxu0 %v659
        %v704 = vpop.f32.mrb[0].mxu0
        %v705 = vadd.f32 0.0, %v704
        %v706 = vpop.f32.mrb[0].mxu0
        %v707 = vadd.f32 0.0, %v706
        %v708 = vpop.f32.mrb[0].mxu0
        %v709 = vpop.f32.mrb[0].mxu0
        %710 = vdwg.mxu0
        %711 = vmatprep.subr.bf16.mxu0 0
        %712 = vmatpush1.bf16.msra.mxu0 %v668
        %713 = vmatprep.subr.bf16.mxu0 0
        %714 = vmatpush1.bf16.msra.mxu0 0
        %715 = vmatprep.subr.bf16.mxu0 0
        %716 = vmatpush1.bf16.msra.mxu0 0
        %717 = vmatprep.subr.bf16.mxu0 0
        %718 = vmatpush1.bf16.msra.mxu0 0
        %719 = vmatprep.subr.bf16.mxu0 0
        %720 = vmatpush1.bf16.msra.mxu0 0
        %721 = vmatprep.subr.bf16.mxu0 0
        %722 = vmatpush1.bf16.msra.mxu0 0
        %723 = vmatprep.subr.bf16.mxu0 0
        %724 = vmatpush1.bf16.msra.mxu0 0
        %725 = vmatprep.subr.bf16.mxu0 0
        %726 = vmatpush1.bf16.msra.mxu0 0
        %727 = vmatprep.subr.bf16.mxu0 0
        %728 = vmatpush1.bf16.msra.mxu0 0
        %729 = vmatprep.subr.bf16.mxu0 0
        %730 = vmatpush1.bf16.msra.mxu0 0
        %731 = vmatprep.subr.bf16.mxu0 0
        %732 = vmatpush1.bf16.msra.mxu0 0
        %733 = vmatprep.subr.bf16.mxu0 0
        %734 = vmatpush1.bf16.msra.mxu0 0
        %735 = vmatprep.subr.bf16.mxu0 0
        %736 = vmatpush1.bf16.msra.mxu0 0
        %737 = vmatprep.subr.bf16.mxu0 0
        %738 = vmatpush1.bf16.msra.mxu0 0
        %739 = vmatprep.subr.bf16.mxu0 0
        %740 = vmatpush1.bf16.msra.mxu0 0
        %741 = vmatprep.subr.bf16.mxu0 0
        %742 = vmatpush1.bf16.msra.mxu0 0
        %743 = vmatprep.mubr.bf16.mxu0 0
        %744 = vmatmul.mubr.bf16.gmra.mrb[0].mxu0 %v659
        %v745 = vpop.f32.mrb[0].mxu0
        %v746 = vadd.f32 0.0, %v745
        %v747 = vpop.f32.mrb[0].mxu0
        %v748 = vpop.f32.mrb[0].mxu0
        %v749 = vpop.f32.mrb[0].mxu0
        %750 = vdwg.mxu0
        %v751 = vadd.f32 %v644, %v705
        %v752 = vadd.f32 %v645, %v707
        %v753 = vadd.f32 %v646, %v746
        %s754 = scalar_lea.vmem %s2, 8
        %v755 = vld [vmem:[%s754] sm:$0x3]
        %756 = vrot.lane.b32.xlu0 %v340, 109
        %v757 = vpop.permute.xlu0 %756
        %758 = vrot.lane.b32.xlu0 %v341, 109
        %v759 = vpop.permute.xlu0 %758
        %760 = vrot.lane.b32.xlu0 %v342, 109
        %v761 = vpop.permute.xlu0 %760
        %vm762 = vcmask 891904
        %v763 = vsel %vm762, %v757, %v759
        %v764 = vsel %vm762, %v759, %v761
        %v766 = vsel %vm352, %v755, 0
        %v769 = vsel %vm356, %v763, 0
        %v772 = vsel %vm356, %v764, 0
        %v775 = vsel %vm356, %v761, 0
        %777 = vmatprep.subr.bf16.mxu0 %v772
        %778 = vmatpush1.bf16.msra.mxu0 %v769
        %779 = vmatprep.subr.bf16.mxu0 0
        %780 = vmatpush1.bf16.msra.mxu0 0
        %781 = vmatprep.subr.bf16.mxu0 0
        %782 = vmatpush1.bf16.msra.mxu0 0
        %783 = vmatprep.subr.bf16.mxu0 0
        %784 = vmatpush1.bf16.msra.mxu0 0
        %785 = vmatprep.subr.bf16.mxu0 0
        %786 = vmatpush1.bf16.msra.mxu0 0
        %787 = vmatprep.subr.bf16.mxu0 0
        %788 = vmatpush1.bf16.msra.mxu0 0
        %789 = vmatprep.subr.bf16.mxu0 0
        %790 = vmatpush1.bf16.msra.mxu0 0
        %791 = vmatprep.subr.bf16.mxu0 0
        %792 = vmatpush1.bf16.msra.mxu0 0
        %793 = vmatprep.subr.bf16.mxu0 0
        %794 = vmatpush1.bf16.msra.mxu0 0
        %795 = vmatprep.subr.bf16.mxu0 0
        %796 = vmatpush1.bf16.msra.mxu0 0
        %797 = vmatprep.subr.bf16.mxu0 0
        %798 = vmatpush1.bf16.msra.mxu0 0
        %799 = vmatprep.subr.bf16.mxu0 0
        %800 = vmatpush1.bf16.msra.mxu0 0
        %801 = vmatprep.subr.bf16.mxu0 0
        %802 = vmatpush1.bf16.msra.mxu0 0
        %803 = vmatprep.subr.bf16.mxu0 0
        %804 = vmatpush1.bf16.msra.mxu0 0
        %805 = vmatprep.subr.bf16.mxu0 0
        %806 = vmatpush1.bf16.msra.mxu0 0
        %807 = vmatprep.subr.bf16.mxu0 0
        %808 = vmatpush1.bf16.msra.mxu0 0
        %809 = vmatprep.mubr.bf16.mxu0 0
        %810 = vmatmul.mubr.bf16.gmra.mrb[0].mxu0 %v766
        %v811 = vpop.f32.mrb[0].mxu0
        %v812 = vadd.f32 0.0, %v811
        %v813 = vpop.f32.mrb[0].mxu0
        %v814 = vadd.f32 0.0, %v813
        %v815 = vpop.f32.mrb[0].mxu0
        %v816 = vpop.f32.mrb[0].mxu0
        %817 = vdwg.mxu0
        %818 = vmatprep.subr.bf16.mxu0 0
        %819 = vmatpush1.bf16.msra.mxu0 %v775
        %820 = vmatprep.subr.bf16.mxu0 0
        %821 = vmatpush1.bf16.msra.mxu0 0
        %822 = vmatprep.subr.bf16.mxu0 0
        %823 = vmatpush1.bf16.msra.mxu0 0
        %824 = vmatprep.subr.bf16.mxu0 0
        %825 = vmatpush1.bf16.msra.mxu0 0
        %826 = vmatprep.subr.bf16.mxu0 0
        %827 = vmatpush1.bf16.msra.mxu0 0
        %828 = vmatprep.subr.bf16.mxu0 0
        %829 = vmatpush1.bf16.msra.mxu0 0
        %830 = vmatprep.subr.bf16.mxu0 0
        %831 = vmatpush1.bf16.msra.mxu0 0
        %832 = vmatprep.subr.bf16.mxu0 0
        %833 = vmatpush1.bf16.msra.mxu0 0
        %834 = vmatprep.subr.bf16.mxu0 0
        %835 = vmatpush1.bf16.msra.mxu0 0
        %836 = vmatprep.subr.bf16.mxu0 0
        %837 = vmatpush1.bf16.msra.mxu0 0
        %838 = vmatprep.subr.bf16.mxu0 0
        %839 = vmatpush1.bf16.msra.mxu0 0
        %840 = vmatprep.subr.bf16.mxu0 0
        %841 = vmatpush1.bf16.msra.mxu0 0
        %842 = vmatprep.subr.bf16.mxu0 0
        %843 = vmatpush1.bf16.msra.mxu0 0
        %844 = vmatprep.subr.bf16.mxu0 0
        %845 = vmatpush1.bf16.msra.mxu0 0
        %846 = vmatprep.subr.bf16.mxu0 0
        %847 = vmatpush1.bf16.msra.mxu0 0
        %848 = vmatprep.subr.bf16.mxu0 0
        %849 = vmatpush1.bf16.msra.mxu0 0
        %850 = vmatprep.mubr.bf16.mxu0 0
        %851 = vmatmul.mubr.bf16.gmra.mrb[0].mxu0 %v766
        %v852 = vpop.f32.mrb[0].mxu0
        %v853 = vadd.f32 0.0, %v852
        %v854 = vpop.f32.mrb[0].mxu0
        %v855 = vpop.f32.mrb[0].mxu0
        %v856 = vpop.f32.mrb[0].mxu0
        %857 = vdwg.mxu0
        %v858 = vadd.f32 %v751, %v812
        %v859 = vadd.f32 %v752, %v814
        %v860 = vadd.f32 %v753, %v853
        %s861 = scalar_lea.vmem %s2, 10
        %v862 = vld [vmem:[%s861] sm:$0x3]
        %863 = vrot.lane.b32.xlu0 %v340, 108
        %v864 = vpop.permute.xlu0 %863
        %865 = vrot.lane.b32.xlu0 %v341, 108
        %v866 = vpop.permute.xlu0 %865
        %867 = vrot.lane.b32.xlu0 %v342, 108
        %v868 = vpop.permute.xlu0 %867
        %vm869 = vcmask 883712
        %v870 = vsel %vm869, %v864, %v866
        %v871 = vsel %vm869, %v866, %v868
        %v873 = vsel %vm352, %v862, 0
        %v876 = vsel %vm356, %v870, 0
        %v879 = vsel %vm356, %v871, 0
        %v882 = vsel %vm356, %v868, 0
        %884 = vmatprep.subr.bf16.mxu0 %v879
        %885 = vmatpush1.bf16.msra.mxu0 %v876
        %886 = vmatprep.subr.bf16.mxu0 0
        %887 = vmatpush1.bf16.msra.mxu0 0
        %888 = vmatprep.subr.bf16.mxu0 0
        %889 = vmatpush1.bf16.msra.mxu0 0
        %890 = vmatprep.subr.bf16.mxu0 0
        %891 = vmatpush1.bf16.msra.mxu0 0
        %892 = vmatprep.subr.bf16.mxu0 0
        %893 = vmatpush1.bf16.msra.mxu0 0
        %894 = vmatprep.subr.bf16.mxu0 0
        %895 = vmatpush1.bf16.msra.mxu0 0
        %896 = vmatprep.subr.bf16.mxu0 0
        %897 = vmatpush1.bf16.msra.mxu0 0
        %898 = vmatprep.subr.bf16.mxu0 0
        %899 = vmatpush1.bf16.msra.mxu0 0
        %900 = vmatprep.subr.bf16.mxu0 0
        %901 = vmatpush1.bf16.msra.mxu0 0
        %902 = vmatprep.subr.bf16.mxu0 0
        %903 = vmatpush1.bf16.msra.mxu0 0
        %904 = vmatprep.subr.bf16.mxu0 0
        %905 = vmatpush1.bf16.msra.mxu0 0
        %906 = vmatprep.subr.bf16.mxu0 0
        %907 = vmatpush1.bf16.msra.mxu0 0
        %908 = vmatprep.subr.bf16.mxu0 0
        %909 = vmatpush1.bf16.msra.mxu0 0
        %910 = vmatprep.subr.bf16.mxu0 0
        %911 = vmatpush1.bf16.msra.mxu0 0
        %912 = vmatprep.subr.bf16.mxu0 0
        %913 = vmatpush1.bf16.msra.mxu0 0
        %914 = vmatprep.subr.bf16.mxu0 0
        %915 = vmatpush1.bf16.msra.mxu0 0
        %916 = vmatprep.mubr.bf16.mxu0 0
        %917 = vmatmul.mubr.bf16.gmra.mrb[0].mxu0 %v873
        %v918 = vpop.f32.mrb[0].mxu0
        %v919 = vadd.f32 0.0, %v918
        %v920 = vpop.f32.mrb[0].mxu0
        %v921 = vadd.f32 0.0, %v920
        %v922 = vpop.f32.mrb[0].mxu0
        %v923 = vpop.f32.mrb[0].mxu0
        %924 = vdwg.mxu0
        %925 = vmatprep.subr.bf16.mxu0 0
        %926 = vmatpush1.bf16.msra.mxu0 %v882
        %927 = vmatprep.subr.bf16.mxu0 0
        %928 = vmatpush1.bf16.msra.mxu0 0
        %929 = vmatprep.subr.bf16.mxu0 0
        %930 = vmatpush1.bf16.msra.mxu0 0
        %931 = vmatprep.subr.bf16.mxu0 0
        %932 = vmatpush1.bf16.msra.mxu0 0
        %933 = vmatprep.subr.bf16.mxu0 0
        %934 = vmatpush1.bf16.msra.mxu0 0
        %935 = vmatprep.subr.bf16.mxu0 0
        %936 = vmatpush1.bf16.msra.mxu0 0
        %937 = vmatprep.subr.bf16.mxu0 0
        %938 = vmatpush1.bf16.msra.mxu0 0
        %939 = vmatprep.subr.bf16.mxu0 0
        %940 = vmatpush1.bf16.msra.mxu0 0
        %941 = vmatprep.subr.bf16.mxu0 0
        %942 = vmatpush1.bf16.msra.mxu0 0
        %943 = vmatprep.subr.bf16.mxu0 0
        %944 = vmatpush1.bf16.msra.mxu0 0
        %945 = vmatprep.subr.bf16.mxu0 0
        %946 = vmatpush1.bf16.msra.mxu0 0
        %947 = vmatprep.subr.bf16.mxu0 0
        %948 = vmatpush1.bf16.msra.mxu0 0
        %949 = vmatprep.subr.bf16.mxu0 0
        %950 = vmatpush1.bf16.msra.mxu0 0
        %951 = vmatprep.subr.bf16.mxu0 0
        %952 = vmatpush1.bf16.msra.mxu0 0
        %953 = vmatprep.subr.bf16.mxu0 0
        %954 = vmatpush1.bf16.msra.mxu0 0
        %955 = vmatprep.subr.bf16.mxu0 0
        %956 = vmatpush1.bf16.msra.mxu0 0
        %957 = vmatprep.mubr.bf16.mxu0 0
        %958 = vmatmul.mubr.bf16.gmra.mrb[0].mxu0 %v873
        %v959 = vpop.f32.mrb[0].mxu0
        %v960 = vadd.f32 0.0, %v959
        %v961 = vpop.f32.mrb[0].mxu0
        %v962 = vpop.f32.mrb[0].mxu0
        %v963 = vpop.f32.mrb[0].mxu0
        %964 = vdwg.mxu0
        %v965 = vadd.f32 %v858, %v919
        %v966 = vadd.f32 %v859, %v921
        %v967 = vadd.f32 %v860, %v960
        %s968 = scalar_lea.vmem %s2, 12
        %v969 = vld [vmem:[%s968] sm:$0x3]
        %970 = vrot.lane.b32.xlu0 %v340, 92
        %v971 = vpop.permute.xlu0 %970
        %972 = vrot.lane.b32.xlu0 %v341, 92
        %v973 = vpop.permute.xlu0 %972
        %974 = vrot.lane.b32.xlu0 %v342, 92
        %v975 = vpop.permute.xlu0 %974
        %vm976 = vcmask 752640
        %v977 = vsel %vm976, %v971, %v973
        %v978 = vsel %vm976, %v973, %v975
        %v980 = vsel %vm352, %v969, 0
        %v983 = vsel %vm356, %v977, 0
        %v986 = vsel %vm356, %v978, 0
        %v989 = vsel %vm356, %v975, 0
        %991 = vmatprep.subr.bf16.mxu0 %v986
        %992 = vmatpush1.bf16.msra.mxu0 %v983
        %993 = vmatprep.subr.bf16.mxu0 0
        %994 = vmatpush1.bf16.msra.mxu0 0
        %995 = vmatprep.subr.bf16.mxu0 0
        %996 = vmatpush1.bf16.msra.mxu0 0
        %997 = vmatprep.subr.bf16.mxu0 0
        %998 = vmatpush1.bf16.msra.mxu0 0
        %999 = vmatprep.subr.bf16.mxu0 0
        %1000 = vmatpush1.bf16.msra.mxu0 0
        %1001 = vmatprep.subr.bf16.mxu0 0
        %1002 = vmatpush1.bf16.msra.mxu0 0
        %1003 = vmatprep.subr.bf16.mxu0 0
        %1004 = vmatpush1.bf16.msra.mxu0 0
        %1005 = vmatprep.subr.bf16.mxu0 0
        %1006 = vmatpush1.bf16.msra.mxu0 0
        %1007 = vmatprep.subr.bf16.mxu0 0
        %1008 = vmatpush1.bf16.msra.mxu0 0
        %1009 = vmatprep.subr.bf16.mxu0 0
        %1010 = vmatpush1.bf16.msra.mxu0 0
        %1011 = vmatprep.subr.bf16.mxu0 0
        %1012 = vmatpush1.bf16.msra.mxu0 0
        %1013 = vmatprep.subr.bf16.mxu0 0
        %1014 = vmatpush1.bf16.msra.mxu0 0
        %1015 = vmatprep.subr.bf16.mxu0 0
        %1016 = vmatpush1.bf16.msra.mxu0 0
        %1017 = vmatprep.subr.bf16.mxu0 0
        %1018 = vmatpush1.bf16.msra.mxu0 0
        %1019 = vmatprep.subr.bf16.mxu0 0
        %1020 = vmatpush1.bf16.msra.mxu0 0
        %1021 = vmatprep.subr.bf16.mxu0 0
        %1022 = vmatpush1.bf16.msra.mxu0 0
        %1023 = vmatprep.mubr.bf16.mxu0 0
        %1024 = vmatmul.mubr.bf16.gmra.mrb[0].mxu0 %v980
        %v1025 = vpop.f32.mrb[0].mxu0
        %v1026 = vadd.f32 0.0, %v1025
        %v1027 = vpop.f32.mrb[0].mxu0
        %v1028 = vadd.f32 0.0, %v1027
        %v1029 = vpop.f32.mrb[0].mxu0
        %v1030 = vpop.f32.mrb[0].mxu0
        %1031 = vdwg.mxu0
        %1032 = vmatprep.subr.bf16.mxu0 0
        %1033 = vmatpush1.bf16.msra.mxu0 %v989
        %1034 = vmatprep.subr.bf16.mxu0 0
        %1035 = vmatpush1.bf16.msra.mxu0 0
        %1036 = vmatprep.subr.bf16.mxu0 0
        %1037 = vmatpush1.bf16.msra.mxu0 0
        %1038 = vmatprep.subr.bf16.mxu0 0
        %1039 = vmatpush1.bf16.msra.mxu0 0
        %1040 = vmatprep.subr.bf16.mxu0 0
        %1041 = vmatpush1.bf16.msra.mxu0 0
        %1042 = vmatprep.subr.bf16.mxu0 0
        %1043 = vmatpush1.bf16.msra.mxu0 0
        %1044 = vmatprep.subr.bf16.mxu0 0
        %1045 = vmatpush1.bf16.msra.mxu0 0
        %1046 = vmatprep.subr.bf16.mxu0 0
        %1047 = vmatpush1.bf16.msra.mxu0 0
        %1048 = vmatprep.subr.bf16.mxu0 0
        %1049 = vmatpush1.bf16.msra.mxu0 0
        %1050 = vmatprep.subr.bf16.mxu0 0
        %1051 = vmatpush1.bf16.msra.mxu0 0
        %1052 = vmatprep.subr.bf16.mxu0 0
        %1053 = vmatpush1.bf16.msra.mxu0 0
        %1054 = vmatprep.subr.bf16.mxu0 0
        %1055 = vmatpush1.bf16.msra.mxu0 0
        %1056 = vmatprep.subr.bf16.mxu0 0
        %1057 = vmatpush1.bf16.msra.mxu0 0
        %1058 = vmatprep.subr.bf16.mxu0 0
        %1059 = vmatpush1.bf16.msra.mxu0 0
        %1060 = vmatprep.subr.bf16.mxu0 0
        %1061 = vmatpush1.bf16.msra.mxu0 0
        %1062 = vmatprep.subr.bf16.mxu0 0
        %1063 = vmatpush1.bf16.msra.mxu0 0
        %1064 = vmatprep.mubr.bf16.mxu0 0
        %1065 = vmatmul.mubr.bf16.gmra.mrb[0].mxu0 %v980
        %v1066 = vpop.f32.mrb[0].mxu0
        %v1067 = vadd.f32 0.0, %v1066
        %v1068 = vpop.f32.mrb[0].mxu0
        %v1069 = vpop.f32.mrb[0].mxu0
        %v1070 = vpop.f32.mrb[0].mxu0
        %1071 = vdwg.mxu0
        %v1072 = vadd.f32 %v965, %v1026
        %v1073 = vadd.f32 %v966, %v1028
        %v1074 = vadd.f32 %v967, %v1067
        %s1075 = scalar_lea.vmem %s2, 14
        %v1076 = vld [vmem:[%s1075] sm:$0x3]
        %1077 = vrot.lane.b32.xlu0 %v340, 91
        %v1078 = vpop.permute.xlu0 %1077
        %1079 = vrot.lane.b32.xlu0 %v341, 91
        %v1080 = vpop.permute.xlu0 %1079
        %1081 = vrot.lane.b32.xlu0 %v342, 91
        %v1082 = vpop.permute.xlu0 %1081
        %vm1083 = vcmask 744448
        %v1084 = vsel %vm1083, %v1078, %v1080
        %v1085 = vsel %vm1083, %v1080, %v1082
        %v1087 = vsel %vm352, %v1076, 0
        %v1090 = vsel %vm356, %v1084, 0
        %v1093 = vsel %vm356, %v1085, 0
        %v1096 = vsel %vm356, %v1082, 0
        %1098 = vmatprep.subr.bf16.mxu0 %v1093
        %1099 = vmatpush1.bf16.msra.mxu0 %v1090
        %1100 = vmatprep.subr.bf16.mxu0 0
        %1101 = vmatpush1.bf16.msra.mxu0 0
        %1102 = vmatprep.subr.bf16.mxu0 0
        %1103 = vmatpush1.bf16.msra.mxu0 0
        %1104 = vmatprep.subr.bf16.mxu0 0
        %1105 = vmatpush1.bf16.msra.mxu0 0
        %1106 = vmatprep.subr.bf16.mxu0 0
        %1107 = vmatpush1.bf16.msra.mxu0 0
        %1108 = vmatprep.subr.bf16.mxu0 0
        %1109 = vmatpush1.bf16.msra.mxu0 0
        %1110 = vmatprep.subr.bf16.mxu0 0
        %1111 = vmatpush1.bf16.msra.mxu0 0
        %1112 = vmatprep.subr.bf16.mxu0 0
        %1113 = vmatpush1.bf16.msra.mxu0 0
        %1114 = vmatprep.subr.bf16.mxu0 0
        %1115 = vmatpush1.bf16.msra.mxu0 0
        %1116 = vmatprep.subr.bf16.mxu0 0
        %1117 = vmatpush1.bf16.msra.mxu0 0
        %1118 = vmatprep.subr.bf16.mxu0 0
        %1119 = vmatpush1.bf16.msra.mxu0 0
        %1120 = vmatprep.subr.bf16.mxu0 0
        %1121 = vmatpush1.bf16.msra.mxu0 0
        %1122 = vmatprep.subr.bf16.mxu0 0
        %1123 = vmatpush1.bf16.msra.mxu0 0
        %1124 = vmatprep.subr.bf16.mxu0 0
        %1125 = vmatpush1.bf16.msra.mxu0 0
        %1126 = vmatprep.subr.bf16.mxu0 0
        %1127 = vmatpush1.bf16.msra.mxu0 0
        %1128 = vmatprep.subr.bf16.mxu0 0
        %1129 = vmatpush1.bf16.msra.mxu0 0
        %1130 = vmatprep.mubr.bf16.mxu0 0
        %1131 = vmatmul.mubr.bf16.gmra.mrb[0].mxu0 %v1087
        %v1132 = vpop.f32.mrb[0].mxu0
        %v1133 = vadd.f32 0.0, %v1132
        %v1134 = vpop.f32.mrb[0].mxu0
        %v1135 = vadd.f32 0.0, %v1134
        %v1136 = vpop.f32.mrb[0].mxu0
        %v1137 = vpop.f32.mrb[0].mxu0
        %1138 = vdwg.mxu0
        %1139 = vmatprep.subr.bf16.mxu0 0
        %1140 = vmatpush1.bf16.msra.mxu0 %v1096
        %1141 = vmatprep.subr.bf16.mxu0 0
        %1142 = vmatpush1.bf16.msra.mxu0 0
        %1143 = vmatprep.subr.bf16.mxu0 0
        %1144 = vmatpush1.bf16.msra.mxu0 0
        %1145 = vmatprep.subr.bf16.mxu0 0
        %1146 = vmatpush1.bf16.msra.mxu0 0
        %1147 = vmatprep.subr.bf16.mxu0 0
        %1148 = vmatpush1.bf16.msra.mxu0 0
        %1149 = vmatprep.subr.bf16.mxu0 0
        %1150 = vmatpush1.bf16.msra.mxu0 0
        %1151 = vmatprep.subr.bf16.mxu0 0
        %1152 = vmatpush1.bf16.msra.mxu0 0
        %1153 = vmatprep.subr.bf16.mxu0 0
        %1154 = vmatpush1.bf16.msra.mxu0 0
        %1155 = vmatprep.subr.bf16.mxu0 0
        %1156 = vmatpush1.bf16.msra.mxu0 0
        %1157 = vmatprep.subr.bf16.mxu0 0
        %1158 = vmatpush1.bf16.msra.mxu0 0
        %1159 = vmatprep.subr.bf16.mxu0 0
        %1160 = vmatpush1.bf16.msra.mxu0 0
        %1161 = vmatprep.subr.bf16.mxu0 0
        %1162 = vmatpush1.bf16.msra.mxu0 0
        %1163 = vmatprep.subr.bf16.mxu0 0
        %1164 = vmatpush1.bf16.msra.mxu0 0
        %1165 = vmatprep.subr.bf16.mxu0 0
        %1166 = vmatpush1.bf16.msra.mxu0 0
        %1167 = vmatprep.subr.bf16.mxu0 0
        %1168 = vmatpush1.bf16.msra.mxu0 0
        %1169 = vmatprep.subr.bf16.mxu0 0
        %1170 = vmatpush1.bf16.msra.mxu0 0
        %1171 = vmatprep.mubr.bf16.mxu0 0
        %1172 = vmatmul.mubr.bf16.gmra.mrb[0].mxu0 %v1087
        %v1173 = vpop.f32.mrb[0].mxu0
        %v1174 = vadd.f32 0.0, %v1173
        %v1175 = vpop.f32.mrb[0].mxu0
        %v1176 = vpop.f32.mrb[0].mxu0
        %v1177 = vpop.f32.mrb[0].mxu0
        %1178 = vdwg.mxu0
        %v1179 = vadd.f32 %v1072, %v1133
        %v1180 = vadd.f32 %v1073, %v1135
        %v1181 = vadd.f32 %v1074, %v1174
        %s1182 = scalar_lea.vmem %s2, 16
        %v1183 = vld [vmem:[%s1182] sm:$0x3]
        %1184 = vrot.lane.b32.xlu0 %v340, 90
        %v1185 = vpop.permute.xlu0 %1184
        %1186 = vrot.lane.b32.xlu0 %v341, 90
        %v1187 = vpop.permute.xlu0 %1186
        %1188 = vrot.lane.b32.xlu0 %v342, 90
        %v1189 = vpop.permute.xlu0 %1188
        %vm1190 = vcmask 736256
        %v1191 = vsel %vm1190, %v1185, %v1187
        %v1192 = vsel %vm1190, %v1187, %v1189
        %v1194 = vsel %vm352, %v1183, 0
        %v1197 = vsel %vm356, %v1191, 0
        %v1200 = vsel %vm356, %v1192, 0
        %v1203 = vsel %vm356, %v1189, 0
        %1205 = vmatprep.subr.bf16.mxu0 %v1200
        %1206 = vmatpush1.bf16.msra.mxu0 %v1197
        %1207 = vmatprep.subr.bf16.mxu0 0
        %1208 = vmatpush1.bf16.msra.mxu0 0
        %1209 = vmatprep.subr.bf16.mxu0 0
        %1210 = vmatpush1.bf16.msra.mxu0 0
        %1211 = vmatprep.subr.bf16.mxu0 0
        %1212 = vmatpush1.bf16.msra.mxu0 0
        %1213 = vmatprep.subr.bf16.mxu0 0
        %1214 = vmatpush1.bf16.msra.mxu0 0
        %1215 = vmatprep.subr.bf16.mxu0 0
        %1216 = vmatpush1.bf16.msra.mxu0 0
        %1217 = vmatprep.subr.bf16.mxu0 0
        %1218 = vmatpush1.bf16.msra.mxu0 0
        %1219 = vmatprep.subr.bf16.mxu0 0
        %1220 = vmatpush1.bf16.msra.mxu0 0
        %1221 = vmatprep.subr.bf16.mxu0 0
        %1222 = vmatpush1.bf16.msra.mxu0 0
        %1223 = vmatprep.subr.bf16.mxu0 0
        %1224 = vmatpush1.bf16.msra.mxu0 0
        %1225 = vmatprep.subr.bf16.mxu0 0
        %1226 = vmatpush1.bf16.msra.mxu0 0
        %1227 = vmatprep.subr.bf16.mxu0 0
        %1228 = vmatpush1.bf16.msra.mxu0 0
        %1229 = vmatprep.subr.bf16.mxu0 0
        %1230 = vmatpush1.bf16.msra.mxu0 0
        %1231 = vmatprep.subr.bf16.mxu0 0
        %1232 = vmatpush1.bf16.msra.mxu0 0
        %1233 = vmatprep.subr.bf16.mxu0 0
        %1234 = vmatpush1.bf16.msra.mxu0 0
        %1235 = vmatprep.subr.bf16.mxu0 0
        %1236 = vmatpush1.bf16.msra.mxu0 0
        %1237 = vmatprep.mubr.bf16.mxu0 0
        %1238 = vmatmul.mubr.bf16.gmra.mrb[0].mxu0 %v1194
        %v1239 = vpop.f32.mrb[0].mxu0
        %v1240 = vadd.f32 0.0, %v1239
        %v1241 = vpop.f32.mrb[0].mxu0
        %v1242 = vadd.f32 0.0, %v1241
        %v1243 = vpop.f32.mrb[0].mxu0
        %v1244 = vpop.f32.mrb[0].mxu0
        %1245 = vdwg.mxu0
        %1246 = vmatprep.subr.bf16.mxu0 0
        %1247 = vmatpush1.bf16.msra.mxu0 %v1203
        %1248 = vmatprep.subr.bf16.mxu0 0
        %1249 = vmatpush1.bf16.msra.mxu0 0
        %1250 = vmatprep.subr.bf16.mxu0 0
        %1251 = vmatpush1.bf16.msra.mxu0 0
        %1252 = vmatprep.subr.bf16.mxu0 0
        %1253 = vmatpush1.bf16.msra.mxu0 0
        %1254 = vmatprep.subr.bf16.mxu0 0
        %1255 = vmatpush1.bf16.msra.mxu0 0
        %1256 = vmatprep.subr.bf16.mxu0 0
        %1257 = vmatpush1.bf16.msra.mxu0 0
        %1258 = vmatprep.subr.bf16.mxu0 0
        %1259 = vmatpush1.bf16.msra.mxu0 0
        %1260 = vmatprep.subr.bf16.mxu0 0
        %1261 = vmatpush1.bf16.msra.mxu0 0
        %1262 = vmatprep.subr.bf16.mxu0 0
        %1263 = vmatpush1.bf16.msra.mxu0 0
        %1264 = vmatprep.subr.bf16.mxu0 0
        %1265 = vmatpush1.bf16.msra.mxu0 0
        %1266 = vmatprep.subr.bf16.mxu0 0
        %1267 = vmatpush1.bf16.msra.mxu0 0
        %1268 = vmatprep.subr.bf16.mxu0 0
        %1269 = vmatpush1.bf16.msra.mxu0 0
        %1270 = vmatprep.subr.bf16.mxu0 0
        %1271 = vmatpush1.bf16.msra.mxu0 0
        %1272 = vmatprep.subr.bf16.mxu0 0
        %1273 = vmatpush1.bf16.msra.mxu0 0
        %1274 = vmatprep.subr.bf16.mxu0 0
        %1275 = vmatpush1.bf16.msra.mxu0 0
        %1276 = vmatprep.subr.bf16.mxu0 0
        %1277 = vmatpush1.bf16.msra.mxu0 0
        %1278 = vmatprep.mubr.bf16.mxu0 0
        %1279 = vmatmul.mubr.bf16.gmra.mrb[0].mxu0 %v1194
        %v1280 = vpop.f32.mrb[0].mxu0
        %v1281 = vadd.f32 0.0, %v1280
        %v1282 = vpop.f32.mrb[0].mxu0
        %v1283 = vpop.f32.mrb[0].mxu0
        %v1284 = vpop.f32.mrb[0].mxu0
        %1285 = vdwg.mxu0
        %v1286 = vadd.f32 %v1179, %v1240
        %v1287 = vadd.f32 %v1180, %v1242
        %v1288 = vadd.f32 %v1181, %v1281
        %v1289 = vld [vmem:[%s3] sm:$0xf]
        %1291 = vset.pattern.permute.xlu0 0
        %1292 = vperm.xlu0 %1291, %v1289
        %v1293 = vpop.permute.xlu0 %1292
        %v1295 = vadd.f32 %v1286, %v1293
        %v1296 = vadd.f32 %v1287, %v1293
        %v1297 = vadd.f32 %v1288, %v1293
        %v1298 = vld [vmem:[%s7] sm:$0x7]
        %v1300 = vlaneseq
        %v1301 = vshrl.u32 %v1300, 7
        %v1302 = vsub.s32 0, %v1301
        %v1303 = vrot.slane %v1298, %v1302
        %v1304 = vlaneseq
        %v1305 = vshrl.u32 %v1304, 7
        %v1306 = vsub.s32 1, %v1305
        %v1307 = vrot.slane %v1298, %v1306
        %v1308 = vlaneseq
        %v1309 = vshrl.u32 %v1308, 7
        %v1310 = vsub.s32 2, %v1309
        %v1311 = vrot.slane %v1298, %v1310
        %v1315 = vmul.f32 %v1295, %v1303
        %v1316 = vmul.f32 %v1296, %v1307
        %v1317 = vmul.f32 %v1297, %v1311
        %1318 = vst [vmem:[#allocation2] sm:$0x3f] 0
        %v1319 = vmul.f32 %v1315, 0.5
        %v1320 = vmul.f32 %v1316, 0.5
        %v1321 = vmul.f32 %v1317, 0.5
        %v1322 = vmul.f32 %v1315, %v1315
        %v1323 = vmul.f32 %v1316, %v1316
        %v1324 = vmul.f32 %v1317, %v1317
        %v1325 = vmul.f32 %v1322, %v1315
        %v1326 = vmul.f32 %v1323, %v1316
        %v1327 = vmul.f32 %v1324, %v1317
        %v1328 = vmul.f32 %v1325, 0.044715
        %v1329 = vmul.f32 %v1326, 0.044715
        %v1330 = vmul.f32 %v1327, 0.044715
        %v1331 = vadd.f32 %v1315, %v1328
        %v1332 = vadd.f32 %v1316, %v1329
        %v1333 = vadd.f32 %v1317, %v1330
        %v1334 = vmul.f32 %v1331, 0.7978846
        %v1335 = vmul.f32 %v1332, 0.7978846
        %v1336 = vmul.f32 %v1333, 0.7978846
        %v1337 = vtanh.pop %v1334
        %v1338 = vtanh.pop %v1335
        %v1339 = vtanh.pop %v1336
        %v1340 = vadd.f32 %v1337, 1.0
        %v1341 = vadd.f32 %v1338, 1.0
        %v1342 = vadd.f32 %v1339, 1.0
        %v1343 = vmul.f32 %v1319, %v1340
        %v1344 = vmul.f32 %v1320, %v1341
        %v1345 = vmul.f32 %v1321, %v1342
        %v1346 = vpack.c.bf16 %v1343, %v1343
        %v1347 = vpack.c.bf16 %v1344, %v1344
        %v1348 = vpack.c.bf16 %v1345, %v1345
        %v1352 = vcombine.low %v1346, %v1347
        %v1354 = vunpack.c.l.s4 1983009808
        %v1355 = vunpack.c.0.s8 %v1354
        %v1356 = vlaneseq
        %v1357 = vshrl.u32 %v1356, 7
        %v1358 = vsub.s32 %v1355, %v1357
        %v1359 = vrot.slane %v1352, %v1358
        %v1361 = vunpack.c.l.s4 1983009808
        %v1362 = vunpack.c.0.s8 %v1361
        %v1363 = vlaneseq
        %v1364 = vshrl.u32 %v1363, 7
        %v1365 = vsub.s32 %v1362, %v1364
        %v1366 = vrot.slane %v1348, %v1365
        %v1367 = vcombine.low %v1359, %v1366
        %1368 = vrot.lane.b32.xlu0 %v1367, 19
        %v1369 = vpop.permute.xlu0 %1368
        %v1370 = vrot.slane %v1369, 6
        %vm1371 = vcmask 154624
        %v1372 = vsel %vm1371, %v1370, %v1369
        %vm1374 = vcmask 1041560
        %vm1375 = vcmask 1043458
        %vm1376 = vmor %vm1375, %vm1374
        %vm1377 = vcmask 709636
        %vm1378 = vmor %vm1377, %vm1376
        %1379 = vst.msk [vmem:[#allocation2] sm:$0x3f] %vm1378, %v1372
        %v1380 = vld [vmem:[%s326] sm:$0x3f]
        %v1381 = vunpack.c.l.bf16 %v1380
        %v1382 = vunpack.c.h.bf16 %v1380
        %v1383 = vmul.f32 %v1381, 0.5
        %v1384 = vmul.f32 %v1382, 0.5
        %v1385 = vmul.f32 %v1381, %v1381
        %v1386 = vmul.f32 %v1382, %v1382
        %v1387 = vmul.f32 %v1385, %v1381
        %v1388 = vmul.f32 %v1386, %v1382
        %v1389 = vmul.f32 %v1387, 0.044715
        %v1390 = vmul.f32 %v1388, 0.044715
        %v1391 = vadd.f32 %v1381, %v1389
        %v1392 = vadd.f32 %v1382, %v1390
        %v1393 = vmul.f32 %v1391, 0.7978846
        %v1394 = vmul.f32 %v1392, 0.7978846
        %v1395 = vtanh.pop %v1393
        %v1396 = vtanh.pop %v1394
        %v1397 = vadd.f32 %v1395, 1.0
        %v1398 = vadd.f32 %v1396, 1.0
        %v1399 = vmul.f32 %v1383, %v1397
        %v1400 = vmul.f32 %v1384, %v1398
        %v1402 = vcombine.high %v1399, %v1399
        %v1404 = vpack.c.bf16 %v1399, %v1399
        %v1405 = vpack.c.bf16 %v1402, %v1402
        %v1406 = vpack.c.bf16 %v1400, %v1400
        %v1410 = vcombine.low %v1404, %v1405
        %v1412 = vunpack.c.l.s4 1983009808
        %v1413 = vunpack.c.0.s8 %v1412
        %v1414 = vlaneseq
        %v1415 = vshrl.u32 %v1414, 7
        %v1416 = vsub.s32 %v1413, %v1415
        %v1417 = vrot.slane %v1410, %v1416
        %v1419 = vunpack.c.l.s4 1983009808
        %v1420 = vunpack.c.0.s8 %v1419
        %v1421 = vlaneseq
        %v1422 = vshrl.u32 %v1421, 7
        %v1423 = vsub.s32 %v1420, %v1422
        %v1424 = vrot.slane %v1406, %v1423
        %v1425 = vcombine.low %v1417, %v1424
        %1427 = vst [vmem:[#allocation3] sm:$0x3f] %v1425
        %v1428 = vld [vmem:[%s4] sm:$0x3]
        %v1429 = vld [vmem:[#allocation2] sm:$0x3f]
        %v1430 = vld [vmem:[%s5] sm:$0x3]
        %v1431 = vld [vmem:[#allocation3] sm:$0x3f]
        %v1433 = vcombine.high %v1431, %v1431
        %v1435 = vunpack.c.l.s4 1983009808
        %v1436 = vunpack.c.0.s8 %v1435
        %v1437 = vlaneseq
        %v1438 = vshrl.u32 %v1437, 7
        %v1439 = vsub.s32 %v1436, %v1438
        %v1440 = vrot.slane %v1431, %v1439
        %v1442 = vunpack.c.l.s4 1983009808
        %v1443 = vunpack.c.0.s8 %v1442
        %v1444 = vlaneseq
        %v1445 = vshrl.u32 %v1444, 7
        %v1446 = vsub.s32 %v1443, %v1445
        %v1447 = vrot.slane %v1433, %v1446
        %v1448 = vcombine.high %v1440, %v1440
        %vm1449 = vcmask 31744
        %v1451 = vsel %vm1449, %v1430, 0
        %vm1453 = vcmask 1041408
        %v1455 = vsel %vm1453, %v1440, 0
        %v1458 = vsel %vm1453, %v1448, 0
        %v1461 = vsel %vm1453, %v1447, 0
        %1463 = vmatprep.subr.bf16.mxu0 %v1458
        %1464 = vmatpush1.bf16.msra.mxu0 %v1455
        %1465 = vmatprep.subr.bf16.mxu0 0
        %1466 = vmatpush1.bf16.msra.mxu0 0
        %1467 = vmatprep.subr.bf16.mxu0 0
        %1468 = vmatpush1.bf16.msra.mxu0 0
        %1469 = vmatprep.subr.bf16.mxu0 0
        %1470 = vmatpush1.bf16.msra.mxu0 0
        %1471 = vmatprep.subr.bf16.mxu0 0
        %1472 = vmatpush1.bf16.msra.mxu0 0
        %1473 = vmatprep.subr.bf16.mxu0 0
        %1474 = vmatpush1.bf16.msra.mxu0 0
        %1475 = vmatprep.subr.bf16.mxu0 0
        %1476 = vmatpush1.bf16.msra.mxu0 0
        %1477 = vmatprep.subr.bf16.mxu0 0
        %1478 = vmatpush1.bf16.msra.mxu0 0
        %1479 = vmatprep.subr.bf16.mxu0 0
        %1480 = vmatpush1.bf16.msra.mxu0 0
        %1481 = vmatprep.subr.bf16.mxu0 0
        %1482 = vmatpush1.bf16.msra.mxu0 0
        %1483 = vmatprep.subr.bf16.mxu0 0
        %1484 = vmatpush1.bf16.msra.mxu0 0
        %1485 = vmatprep.subr.bf16.mxu0 0
        %1486 = vmatpush1.bf16.msra.mxu0 0
        %1487 = vmatprep.subr.bf16.mxu0 0
        %1488 = vmatpush1.bf16.msra.mxu0 0
        %1489 = vmatprep.subr.bf16.mxu0 0
        %1490 = vmatpush1.bf16.msra.mxu0 0
        %1491 = vmatprep.subr.bf16.mxu0 0
        %1492 = vmatpush1.bf16.msra.mxu0 0
        %1493 = vmatprep.subr.bf16.mxu0 0
        %1494 = vmatpush1.bf16.msra.mxu0 0
        %1495 = vmatprep.mubr.bf16.mxu0 0
        %1496 = vmatmul.mubr.bf16.gmra.mrb[0].mxu0 %v1451
        %v1497 = vpop.f32.mrb[0].mxu0
        %v1498 = vadd.f32 0.0, %v1497
        %v1499 = vpop.f32.mrb[0].mxu0
        %v1500 = vadd.f32 0.0, %v1499
        %v1501 = vpop.f32.mrb[0].mxu0
        %v1502 = vpop.f32.mrb[0].mxu0
        %1503 = vdwg.mxu0
        %1504 = vmatprep.subr.bf16.mxu0 0
        %1505 = vmatpush1.bf16.msra.mxu0 %v1461
        %1506 = vmatprep.subr.bf16.mxu0 0
        %1507 = vmatpush1.bf16.msra.mxu0 0
        %1508 = vmatprep.subr.bf16.mxu0 0
        %1509 = vmatpush1.bf16.msra.mxu0 0
        %1510 = vmatprep.subr.bf16.mxu0 0
        %1511 = vmatpush1.bf16.msra.mxu0 0
        %1512 = vmatprep.subr.bf16.mxu0 0
        %1513 = vmatpush1.bf16.msra.mxu0 0
        %1514 = vmatprep.subr.bf16.mxu0 0
        %1515 = vmatpush1.bf16.msra.mxu0 0
        %1516 = vmatprep.subr.bf16.mxu0 0
        %1517 = vmatpush1.bf16.msra.mxu0 0
        %1518 = vmatprep.subr.bf16.mxu0 0
        %1519 = vmatpush1.bf16.msra.mxu0 0
        %1520 = vmatprep.subr.bf16.mxu0 0
        %1521 = vmatpush1.bf16.msra.mxu0 0
        %1522 = vmatprep.subr.bf16.mxu0 0
        %1523 = vmatpush1.bf16.msra.mxu0 0
        %1524 = vmatprep.subr.bf16.mxu0 0
        %1525 = vmatpush1.bf16.msra.mxu0 0
        %1526 = vmatprep.subr.bf16.mxu0 0
        %1527 = vmatpush1.bf16.msra.mxu0 0
        %1528 = vmatprep.subr.bf16.mxu0 0
        %1529 = vmatpush1.bf16.msra.mxu0 0
        %1530 = vmatprep.subr.bf16.mxu0 0
        %1531 = vmatpush1.bf16.msra.mxu0 0
        %1532 = vmatprep.subr.bf16.mxu0 0
        %1533 = vmatpush1.bf16.msra.mxu0 0
        %1534 = vmatprep.subr.bf16.mxu0 0
        %1535 = vmatpush1.bf16.msra.mxu0 0
        %1536 = vmatprep.mubr.bf16.mxu0 0
        %1537 = vmatmul.mubr.bf16.gmra.mrb[0].mxu0 %v1451
        %v1538 = vpop.f32.mrb[0].mxu0
        %v1539 = vadd.f32 0.0, %v1538
        %v1540 = vpop.f32.mrb[0].mxu0
        %v1541 = vpop.f32.mrb[0].mxu0
        %v1542 = vpop.f32.mrb[0].mxu0
        %1543 = vdwg.mxu0
        %v1545 = vcombine.high %v1429, %v1429
        %v1547 = vunpack.c.l.s4 1983009808
        %v1548 = vunpack.c.0.s8 %v1547
        %v1549 = vlaneseq
        %v1550 = vshrl.u32 %v1549, 7
        %v1551 = vsub.s32 %v1548, %v1550
        %v1552 = vrot.slane %v1429, %v1551
        %v1554 = vunpack.c.l.s4 1983009808
        %v1555 = vunpack.c.0.s8 %v1554
        %v1556 = vlaneseq
        %v1557 = vshrl.u32 %v1556, 7
        %v1558 = vsub.s32 %v1555, %v1557
        %v1559 = vrot.slane %v1545, %v1558
        %v1560 = vcombine.high %v1552, %v1552
        %v1562 = vsel %vm1449, %v1428, 0
        %v1565 = vsel %vm1453, %v1552, 0
        %v1568 = vsel %vm1453, %v1560, 0
        %v1571 = vsel %vm1453, %v1559, 0
        %1573 = vmatprep.subr.bf16.mxu0 %v1568
        %1574 = vmatpush1.bf16.msra.mxu0 %v1565
        %1575 = vmatprep.subr.bf16.mxu0 0
        %1576 = vmatpush1.bf16.msra.mxu0 0
        %1577 = vmatprep.subr.bf16.mxu0 0
        %1578 = vmatpush1.bf16.msra.mxu0 0
        %1579 = vmatprep.subr.bf16.mxu0 0
        %1580 = vmatpush1.bf16.msra.mxu0 0
        %1581 = vmatprep.subr.bf16.mxu0 0
        %1582 = vmatpush1.bf16.msra.mxu0 0
        %1583 = vmatprep.subr.bf16.mxu0 0
        %1584 = vmatpush1.bf16.msra.mxu0 0
        %1585 = vmatprep.subr.bf16.mxu0 0
        %1586 = vmatpush1.bf16.msra.mxu0 0
        %1587 = vmatprep.subr.bf16.mxu0 0
        %1588 = vmatpush1.bf16.msra.mxu0 0
        %1589 = vmatprep.subr.bf16.mxu0 0
        %1590 = vmatpush1.bf16.msra.mxu0 0
        %1591 = vmatprep.subr.bf16.mxu0 0
        %1592 = vmatpush1.bf16.msra.mxu0 0
        %1593 = vmatprep.subr.bf16.mxu0 0
        %1594 = vmatpush1.bf16.msra.mxu0 0
        %1595 = vmatprep.subr.bf16.mxu0 0
        %1596 = vmatpush1.bf16.msra.mxu0 0
        %1597 = vmatprep.subr.bf16.mxu0 0
        %1598 = vmatpush1.bf16.msra.mxu0 0
        %1599 = vmatprep.subr.bf16.mxu0 0
        %1600 = vmatpush1.bf16.msra.mxu0 0
        %1601 = vmatprep.subr.bf16.mxu0 0
        %1602 = vmatpush1.bf16.msra.mxu0 0
        %1603 = vmatprep.subr.bf16.mxu0 0
        %1604 = vmatpush1.bf16.msra.mxu0 0
        %1605 = vmatprep.mubr.bf16.mxu0 0
        %1606 = vmatmul.mubr.bf16.gmra.mrb[0].mxu0 %v1562
        %v1607 = vpop.f32.mrb[0].mxu0
        %v1608 = vadd.f32 %v1498, %v1607
        %v1609 = vpop.f32.mrb[0].mxu0
        %v1610 = vadd.f32 %v1500, %v1609
        %v1611 = vpop.f32.mrb[0].mxu0
        %v1612 = vpop.f32.mrb[0].mxu0
        %1613 = vdwg.mxu0
        %1614 = vmatprep.subr.bf16.mxu0 0
        %1615 = vmatpush1.bf16.msra.mxu0 %v1571
        %1616 = vmatprep.subr.bf16.mxu0 0
        %1617 = vmatpush1.bf16.msra.mxu0 0
        %1618 = vmatprep.subr.bf16.mxu0 0
        %1619 = vmatpush1.bf16.msra.mxu0 0
        %1620 = vmatprep.subr.bf16.mxu0 0
        %1621 = vmatpush1.bf16.msra.mxu0 0
        %1622 = vmatprep.subr.bf16.mxu0 0
        %1623 = vmatpush1.bf16.msra.mxu0 0
        %1624 = vmatprep.subr.bf16.mxu0 0
        %1625 = vmatpush1.bf16.msra.mxu0 0
        %1626 = vmatprep.subr.bf16.mxu0 0
        %1627 = vmatpush1.bf16.msra.mxu0 0
        %1628 = vmatprep.subr.bf16.mxu0 0
        %1629 = vmatpush1.bf16.msra.mxu0 0
        %1630 = vmatprep.subr.bf16.mxu0 0
        %1631 = vmatpush1.bf16.msra.mxu0 0
        %1632 = vmatprep.subr.bf16.mxu0 0
        %1633 = vmatpush1.bf16.msra.mxu0 0
        %1634 = vmatprep.subr.bf16.mxu0 0
        %1635 = vmatpush1.bf16.msra.mxu0 0
        %1636 = vmatprep.subr.bf16.mxu0 0
        %1637 = vmatpush1.bf16.msra.mxu0 0
        %1638 = vmatprep.subr.bf16.mxu0 0
        %1639 = vmatpush1.bf16.msra.mxu0 0
        %1640 = vmatprep.subr.bf16.mxu0 0
        %1641 = vmatpush1.bf16.msra.mxu0 0
        %1642 = vmatprep.subr.bf16.mxu0 0
        %1643 = vmatpush1.bf16.msra.mxu0 0
        %1644 = vmatprep.subr.bf16.mxu0 0
        %1645 = vmatpush1.bf16.msra.mxu0 0
        %1646 = vmatprep.mubr.bf16.mxu0 0
        %1647 = vmatmul.mubr.bf16.gmra.mrb[0].mxu0 %v1562
        %v1648 = vpop.f32.mrb[0].mxu0
        %v1649 = vadd.f32 %v1539, %v1648
        %v1650 = vpop.f32.mrb[0].mxu0
        %v1651 = vpop.f32.mrb[0].mxu0
        %v1652 = vpop.f32.mrb[0].mxu0
        %1653 = vdwg.mxu0
        %s1654 = scalar_lea.vmem %s4, 2
        %v1655 = vld [vmem:[%s1654] sm:$0x3]
        %v1656 = vld [vmem:[#allocation2] sm:$0x3f]
        %v1658 = vcombine.high %v1656, %v1656
        %v1660 = vunpack.c.l.s4 1983009808
        %v1661 = vunpack.c.0.s8 %v1660
        %v1662 = vlaneseq
        %v1663 = vshrl.u32 %v1662, 7
        %v1664 = vsub.s32 %v1661, %v1663
        %v1665 = vrot.slane %v1656, %v1664
        %v1667 = vunpack.c.l.s4 1983009808
        %v1668 = vunpack.c.0.s8 %v1667
        %v1669 = vlaneseq
        %v1670 = vshrl.u32 %v1669, 7
        %v1671 = vsub.s32 %v1668, %v1670
        %v1672 = vrot.slane %v1658, %v1671
        %v1673 = vcombine.high %v1665, %v1665
        %1674 = vrot.lane.b32.xlu0 %v1665, 127
        %v1675 = vpop.permute.xlu0 %1674
        %1676 = vrot.lane.b32.xlu0 %v1673, 127
        %v1677 = vpop.permute.xlu0 %1676
        %1678 = vrot.lane.b32.xlu0 %v1672, 127
        %v1679 = vpop.permute.xlu0 %1678
        %v1680 = vsel %vm349, %v1675, %v1677
        %v1681 = vsel %vm349, %v1677, %v1679
        %v1683 = vsel %vm1449, %v1655, 0
        %v1686 = vsel %vm1453, %v1680, 0
        %v1689 = vsel %vm1453, %v1681, 0
        %v1692 = vsel %vm1453, %v1679, 0
        %1694 = vmatprep.subr.bf16.mxu0 %v1689
        %1695 = vmatpush1.bf16.msra.mxu0 %v1686
        %1696 = vmatprep.subr.bf16.mxu0 0
        %1697 = vmatpush1.bf16.msra.mxu0 0
        %1698 = vmatprep.subr.bf16.mxu0 0
        %1699 = vmatpush1.bf16.msra.mxu0 0
        %1700 = vmatprep.subr.bf16.mxu0 0
        %1701 = vmatpush1.bf16.msra.mxu0 0
        %1702 = vmatprep.subr.bf16.mxu0 0
        %1703 = vmatpush1.bf16.msra.mxu0 0
        %1704 = vmatprep.subr.bf16.mxu0 0
        %1705 = vmatpush1.bf16.msra.mxu0 0
        %1706 = vmatprep.subr.bf16.mxu0 0
        %1707 = vmatpush1.bf16.msra.mxu0 0
        %1708 = vmatprep.subr.bf16.mxu0 0
        %1709 = vmatpush1.bf16.msra.mxu0 0
        %1710 = vmatprep.subr.bf16.mxu0 0
        %1711 = vmatpush1.bf16.msra.mxu0 0
        %1712 = vmatprep.subr.bf16.mxu0 0
        %1713 = vmatpush1.bf16.msra.mxu0 0
        %1714 = vmatprep.subr.bf16.mxu0 0
        %1715 = vmatpush1.bf16.msra.mxu0 0
        %1716 = vmatprep.subr.bf16.mxu0 0
        %1717 = vmatpush1.bf16.msra.mxu0 0
        %1718 = vmatprep.subr.bf16.mxu0 0
        %1719 = vmatpush1.bf16.msra.mxu0 0
        %1720 = vmatprep.subr.bf16.mxu0 0
        %1721 = vmatpush1.bf16.msra.mxu0 0
        %1722 = vmatprep.subr.bf16.mxu0 0
        %1723 = vmatpush1.bf16.msra.mxu0 0
        %1724 = vmatprep.subr.bf16.mxu0 0
        %1725 = vmatpush1.bf16.msra.mxu0 0
        %1726 = vmatprep.mubr.bf16.mxu0 0
        %1727 = vmatmul.mubr.bf16.gmra.mrb[0].mxu0 %v1683
        %v1728 = vpop.f32.mrb[0].mxu0
        %v1729 = vadd.f32 0.0, %v1728
        %v1730 = vpop.f32.mrb[0].mxu0
        %v1731 = vadd.f32 0.0, %v1730
        %v1732 = vpop.f32.mrb[0].mxu0
        %v1733 = vpop.f32.mrb[0].mxu0
        %1734 = vdwg.mxu0
        %1735 = vmatprep.subr.bf16.mxu0 0
        %1736 = vmatpush1.bf16.msra.mxu0 %v1692
        %1737 = vmatprep.subr.bf16.mxu0 0
        %1738 = vmatpush1.bf16.msra.mxu0 0
        %1739 = vmatprep.subr.bf16.mxu0 0
        %1740 = vmatpush1.bf16.msra.mxu0 0
        %1741 = vmatprep.subr.bf16.mxu0 0
        %1742 = vmatpush1.bf16.msra.mxu0 0
        %1743 = vmatprep.subr.bf16.mxu0 0
        %1744 = vmatpush1.bf16.msra.mxu0 0
        %1745 = vmatprep.subr.bf16.mxu0 0
        %1746 = vmatpush1.bf16.msra.mxu0 0
        %1747 = vmatprep.subr.bf16.mxu0 0
        %1748 = vmatpush1.bf16.msra.mxu0 0
        %1749 = vmatprep.subr.bf16.mxu0 0
        %1750 = vmatpush1.bf16.msra.mxu0 0
        %1751 = vmatprep.subr.bf16.mxu0 0
        %1752 = vmatpush1.bf16.msra.mxu0 0
        %1753 = vmatprep.subr.bf16.mxu0 0
        %1754 = vmatpush1.bf16.msra.mxu0 0
        %1755 = vmatprep.subr.bf16.mxu0 0
        %1756 = vmatpush1.bf16.msra.mxu0 0
        %1757 = vmatprep.subr.bf16.mxu0 0
        %1758 = vmatpush1.bf16.msra.mxu0 0
        %1759 = vmatprep.subr.bf16.mxu0 0
        %1760 = vmatpush1.bf16.msra.mxu0 0
        %1761 = vmatprep.subr.bf16.mxu0 0
        %1762 = vmatpush1.bf16.msra.mxu0 0
        %1763 = vmatprep.subr.bf16.mxu0 0
        %1764 = vmatpush1.bf16.msra.mxu0 0
        %1765 = vmatprep.subr.bf16.mxu0 0
        %1766 = vmatpush1.bf16.msra.mxu0 0
        %1767 = vmatprep.mubr.bf16.mxu0 0
        %1768 = vmatmul.mubr.bf16.gmra.mrb[0].mxu0 %v1683
        %v1769 = vpop.f32.mrb[0].mxu0
        %v1770 = vadd.f32 0.0, %v1769
        %v1771 = vpop.f32.mrb[0].mxu0
        %v1772 = vpop.f32.mrb[0].mxu0
        %v1773 = vpop.f32.mrb[0].mxu0
        %1774 = vdwg.mxu0
        %v1775 = vadd.f32 %v1608, %v1729
        %v1776 = vadd.f32 %v1610, %v1731
        %v1777 = vadd.f32 %v1649, %v1770
        %s1778 = scalar_lea.vmem %s5, 2
        %v1779 = vld [vmem:[%s1778] sm:$0x3]
        %v1780 = vld [vmem:[#allocation3] sm:$0x3f]
        %v1782 = vcombine.high %v1780, %v1780
        %v1784 = vunpack.c.l.s4 1983009808
        %v1785 = vunpack.c.0.s8 %v1784
        %v1786 = vlaneseq
        %v1787 = vshrl.u32 %v1786, 7
        %v1788 = vsub.s32 %v1785, %v1787
        %v1789 = vrot.slane %v1780, %v1788
        %v1791 = vunpack.c.l.s4 1983009808
        %v1792 = vunpack.c.0.s8 %v1791
        %v1793 = vlaneseq
        %v1794 = vshrl.u32 %v1793, 7
        %v1795 = vsub.s32 %v1792, %v1794
        %v1796 = vrot.slane %v1782, %v1795
        %v1797 = vcombine.high %v1789, %v1789
        %1798 = vrot.lane.b32.xlu0 %v1789, 127
        %v1799 = vpop.permute.xlu0 %1798
        %1800 = vrot.lane.b32.xlu0 %v1797, 127
        %v1801 = vpop.permute.xlu0 %1800
        %1802 = vrot.lane.b32.xlu0 %v1796, 127
        %v1803 = vpop.permute.xlu0 %1802
        %v1804 = vsel %vm349, %v1799, %v1801
        %v1805 = vsel %vm349, %v1801, %v1803
        %v1807 = vsel %vm1449, %v1779, 0
        %v1810 = vsel %vm1453, %v1804, 0
        %v1813 = vsel %vm1453, %v1805, 0
        %v1816 = vsel %vm1453, %v1803, 0
        %1818 = vmatprep.subr.bf16.mxu0 %v1813
        %1819 = vmatpush1.bf16.msra.mxu0 %v1810
        %1820 = vmatprep.subr.bf16.mxu0 0
        %1821 = vmatpush1.bf16.msra.mxu0 0
        %1822 = vmatprep.subr.bf16.mxu0 0
        %1823 = vmatpush1.bf16.msra.mxu0 0
        %1824 = vmatprep.subr.bf16.mxu0 0
        %1825 = vmatpush1.bf16.msra.mxu0 0
        %1826 = vmatprep.subr.bf16.mxu0 0
        %1827 = vmatpush1.bf16.msra.mxu0 0
        %1828 = vmatprep.subr.bf16.mxu0 0
        %1829 = vmatpush1.bf16.msra.mxu0 0
        %1830 = vmatprep.subr.bf16.mxu0 0
        %1831 = vmatpush1.bf16.msra.mxu0 0
        %1832 = vmatprep.subr.bf16.mxu0 0
        %1833 = vmatpush1.bf16.msra.mxu0 0
        %1834 = vmatprep.subr.bf16.mxu0 0
        %1835 = vmatpush1.bf16.msra.mxu0 0
        %1836 = vmatprep.subr.bf16.mxu0 0
        %1837 = vmatpush1.bf16.msra.mxu0 0
        %1838 = vmatprep.subr.bf16.mxu0 0
        %1839 = vmatpush1.bf16.msra.mxu0 0
        %1840 = vmatprep.subr.bf16.mxu0 0
        %1841 = vmatpush1.bf16.msra.mxu0 0
        %1842 = vmatprep.subr.bf16.mxu0 0
        %1843 = vmatpush1.bf16.msra.mxu0 0
        %1844 = vmatprep.subr.bf16.mxu0 0
        %1845 = vmatpush1.bf16.msra.mxu0 0
        %1846 = vmatprep.subr.bf16.mxu0 0
        %1847 = vmatpush1.bf16.msra.mxu0 0
        %1848 = vmatprep.subr.bf16.mxu0 0
        %1849 = vmatpush1.bf16.msra.mxu0 0
        %1850 = vmatprep.mubr.bf16.mxu0 0
        %1851 = vmatmul.mubr.bf16.gmra.mrb[0].mxu0 %v1807
        %v1852 = vpop.f32.mrb[0].mxu0
        %v1853 = vadd.f32 0.0, %v1852
        %v1854 = vpop.f32.mrb[0].mxu0
        %v1855 = vadd.f32 0.0, %v1854
        %v1856 = vpop.f32.mrb[0].mxu0
        %v1857 = vpop.f32.mrb[0].mxu0
        %1858 = vdwg.mxu0
        %1859 = vmatprep.subr.bf16.mxu0 0
        %1860 = vmatpush1.bf16.msra.mxu0 %v1816
        %1861 = vmatprep.subr.bf16.mxu0 0
        %1862 = vmatpush1.bf16.msra.mxu0 0
        %1863 = vmatprep.subr.bf16.mxu0 0
        %1864 = vmatpush1.bf16.msra.mxu0 0
        %1865 = vmatprep.subr.bf16.mxu0 0
        %1866 = vmatpush1.bf16.msra.mxu0 0
        %1867 = vmatprep.subr.bf16.mxu0 0
        %1868 = vmatpush1.bf16.msra.mxu0 0
        %1869 = vmatprep.subr.bf16.mxu0 0
        %1870 = vmatpush1.bf16.msra.mxu0 0
        %1871 = vmatprep.subr.bf16.mxu0 0
        %1872 = vmatpush1.bf16.msra.mxu0 0
        %1873 = vmatprep.subr.bf16.mxu0 0
        %1874 = vmatpush1.bf16.msra.mxu0 0
        %1875 = vmatprep.subr.bf16.mxu0 0
        %1876 = vmatpush1.bf16.msra.mxu0 0
        %1877 = vmatprep.subr.bf16.mxu0 0
        %1878 = vmatpush1.bf16.msra.mxu0 0
        %1879 = vmatprep.subr.bf16.mxu0 0
        %1880 = vmatpush1.bf16.msra.mxu0 0
        %1881 = vmatprep.subr.bf16.mxu0 0
        %1882 = vmatpush1.bf16.msra.mxu0 0
        %1883 = vmatprep.subr.bf16.mxu0 0
        %1884 = vmatpush1.bf16.msra.mxu0 0
        %1885 = vmatprep.subr.bf16.mxu0 0
        %1886 = vmatpush1.bf16.msra.mxu0 0
        %1887 = vmatprep.subr.bf16.mxu0 0
        %1888 = vmatpush1.bf16.msra.mxu0 0
        %1889 = vmatprep.subr.bf16.mxu0 0
        %1890 = vmatpush1.bf16.msra.mxu0 0
        %1891 = vmatprep.mubr.bf16.mxu0 0
        %1892 = vmatmul.mubr.bf16.gmra.mrb[0].mxu0 %v1807
        %v1893 = vpop.f32.mrb[0].mxu0
        %v1894 = vadd.f32 0.0, %v1893
        %v1895 = vpop.f32.mrb[0].mxu0
        %v1896 = vpop.f32.mrb[0].mxu0
        %v1897 = vpop.f32.mrb[0].mxu0
        %1898 = vdwg.mxu0
        %v1899 = vadd.f32 %v1775, %v1853
        %v1900 = vadd.f32 %v1776, %v1855
        %v1901 = vadd.f32 %v1777, %v1894
        %s1902 = scalar_lea.vmem %s4, 4
        %v1903 = vld [vmem:[%s1902] sm:$0x3]
        %v1904 = vld [vmem:[#allocation2] sm:$0x3f]
        %v1906 = vcombine.high %v1904, %v1904
        %v1908 = vunpack.c.l.s4 1983009808
        %v1909 = vunpack.c.0.s8 %v1908
        %v1910 = vlaneseq
        %v1911 = vshrl.u32 %v1910, 7
        %v1912 = vsub.s32 %v1909, %v1911
        %v1913 = vrot.slane %v1904, %v1912
        %v1915 = vunpack.c.l.s4 1983009808
        %v1916 = vunpack.c.0.s8 %v1915
        %v1917 = vlaneseq
        %v1918 = vshrl.u32 %v1917, 7
        %v1919 = vsub.s32 %v1916, %v1918
        %v1920 = vrot.slane %v1906, %v1919
        %v1921 = vcombine.high %v1913, %v1913
        %1922 = vrot.lane.b32.xlu0 %v1913, 126
        %v1923 = vpop.permute.xlu0 %1922
        %1924 = vrot.lane.b32.xlu0 %v1921, 126
        %v1925 = vpop.permute.xlu0 %1924
        %1926 = vrot.lane.b32.xlu0 %v1920, 126
        %v1927 = vpop.permute.xlu0 %1926
        %v1928 = vsel %vm548, %v1923, %v1925
        %v1929 = vsel %vm548, %v1925, %v1927
        %v1931 = vsel %vm1449, %v1903, 0
        %v1934 = vsel %vm1453, %v1928, 0
        %v1937 = vsel %vm1453, %v1929, 0
        %v1940 = vsel %vm1453, %v1927, 0
        %1942 = vmatprep.subr.bf16.mxu0 %v1937
        %1943 = vmatpush1.bf16.msra.mxu0 %v1934
        %1944 = vmatprep.subr.bf16.mxu0 0
        %1945 = vmatpush1.bf16.msra.mxu0 0
        %1946 = vmatprep.subr.bf16.mxu0 0
        %1947 = vmatpush1.bf16.msra.mxu0 0
        %1948 = vmatprep.subr.bf16.mxu0 0
        %1949 = vmatpush1.bf16.msra.mxu0 0
        %1950 = vmatprep.subr.bf16.mxu0 0
        %1951 = vmatpush1.bf16.msra.mxu0 0
        %1952 = vmatprep.subr.bf16.mxu0 0
        %1953 = vmatpush1.bf16.msra.mxu0 0
        %1954 = vmatprep.subr.bf16.mxu0 0
        %1955 = vmatpush1.bf16.msra.mxu0 0
        %1956 = vmatprep.subr.bf16.mxu0 0
        %1957 = vmatpush1.bf16.msra.mxu0 0
        %1958 = vmatprep.subr.bf16.mxu0 0
        %1959 = vmatpush1.bf16.msra.mxu0 0
        %1960 = vmatprep.subr.bf16.mxu0 0
        %1961 = vmatpush1.bf16.msra.mxu0 0
        %1962 = vmatprep.subr.bf16.mxu0 0
        %1963 = vmatpush1.bf16.msra.mxu0 0
        %1964 = vmatprep.subr.bf16.mxu0 0
        %1965 = vmatpush1.bf16.msra.mxu0 0
        %1966 = vmatprep.subr.bf16.mxu0 0
        %1967 = vmatpush1.bf16.msra.mxu0 0
        %1968 = vmatprep.subr.bf16.mxu0 0
        %1969 = vmatpush1.bf16.msra.mxu0 0
        %1970 = vmatprep.subr.bf16.mxu0 0
        %1971 = vmatpush1.bf16.msra.mxu0 0
        %1972 = vmatprep.subr.bf16.mxu0 0
        %1973 = vmatpush1.bf16.msra.mxu0 0
        %1974 = vmatprep.mubr.bf16.mxu0 0
        %1975 = vmatmul.mubr.bf16.gmra.mrb[0].mxu0 %v1931
        %v1976 = vpop.f32.mrb[0].mxu0
        %v1977 = vadd.f32 0.0, %v1976
        %v1978 = vpop.f32.mrb[0].mxu0
        %v1979 = vadd.f32 0.0, %v1978
        %v1980 = vpop.f32.mrb[0].mxu0
        %v1981 = vpop.f32.mrb[0].mxu0
        %1982 = vdwg.mxu0
        %1983 = vmatprep.subr.bf16.mxu0 0
        %1984 = vmatpush1.bf16.msra.mxu0 %v1940
        %1985 = vmatprep.subr.bf16.mxu0 0
        %1986 = vmatpush1.bf16.msra.mxu0 0
        %1987 = vmatprep.subr.bf16.mxu0 0
        %1988 = vmatpush1.bf16.msra.mxu0 0
        %1989 = vmatprep.subr.bf16.mxu0 0
        %1990 = vmatpush1.bf16.msra.mxu0 0
        %1991 = vmatprep.subr.bf16.mxu0 0
        %1992 = vmatpush1.bf16.msra.mxu0 0
        %1993 = vmatprep.subr.bf16.mxu0 0
        %1994 = vmatpush1.bf16.msra.mxu0 0
        %1995 = vmatprep.subr.bf16.mxu0 0
        %1996 = vmatpush1.bf16.msra.mxu0 0
        %1997 = vmatprep.subr.bf16.mxu0 0
        %1998 = vmatpush1.bf16.msra.mxu0 0
        %1999 = vmatprep.subr.bf16.mxu0 0
        %2000 = vmatpush1.bf16.msra.mxu0 0
        %2001 = vmatprep.subr.bf16.mxu0 0
        %2002 = vmatpush1.bf16.msra.mxu0 0
        %2003 = vmatprep.subr.bf16.mxu0 0
        %2004 = vmatpush1.bf16.msra.mxu0 0
        %2005 = vmatprep.subr.bf16.mxu0 0
        %2006 = vmatpush1.bf16.msra.mxu0 0
        %2007 = vmatprep.subr.bf16.mxu0 0
        %2008 = vmatpush1.bf16.msra.mxu0 0
        %2009 = vmatprep.subr.bf16.mxu0 0
        %2010 = vmatpush1.bf16.msra.mxu0 0
        %2011 = vmatprep.subr.bf16.mxu0 0
        %2012 = vmatpush1.bf16.msra.mxu0 0
        %2013 = vmatprep.subr.bf16.mxu0 0
        %2014 = vmatpush1.bf16.msra.mxu0 0
        %2015 = vmatprep.mubr.bf16.mxu0 0
        %2016 = vmatmul.mubr.bf16.gmra.mrb[0].mxu0 %v1931
        %v2017 = vpop.f32.mrb[0].mxu0
        %v2018 = vadd.f32 0.0, %v2017
        %v2019 = vpop.f32.mrb[0].mxu0
        %v2020 = vpop.f32.mrb[0].mxu0
        %v2021 = vpop.f32.mrb[0].mxu0
        %2022 = vdwg.mxu0
        %v2023 = vadd.f32 %v1899, %v1977
        %v2024 = vadd.f32 %v1900, %v1979
        %v2025 = vadd.f32 %v1901, %v2018
        %s2026 = scalar_lea.vmem %s5, 4
        %v2027 = vld [vmem:[%s2026] sm:$0x3]
        %v2028 = vld [vmem:[#allocation3] sm:$0x3f]
        %v2030 = vcombine.high %v2028, %v2028
        %v2032 = vunpack.c.l.s4 1983009808
        %v2033 = vunpack.c.0.s8 %v2032
        %v2034 = vlaneseq
        %v2035 = vshrl.u32 %v2034, 7
        %v2036 = vsub.s32 %v2033, %v2035
        %v2037 = vrot.slane %v2028, %v2036
        %v2039 = vunpack.c.l.s4 1983009808
        %v2040 = vunpack.c.0.s8 %v2039
        %v2041 = vlaneseq
        %v2042 = vshrl.u32 %v2041, 7
        %v2043 = vsub.s32 %v2040, %v2042
        %v2044 = vrot.slane %v2030, %v2043
        %v2045 = vcombine.high %v2037, %v2037
        %2046 = vrot.lane.b32.xlu0 %v2037, 126
        %v2047 = vpop.permute.xlu0 %2046
        %2048 = vrot.lane.b32.xlu0 %v2045, 126
        %v2049 = vpop.permute.xlu0 %2048
        %2050 = vrot.lane.b32.xlu0 %v2044, 126
        %v2051 = vpop.permute.xlu0 %2050
        %v2052 = vsel %vm548, %v2047, %v2049
        %v2053 = vsel %vm548, %v2049, %v2051
        %v2055 = vsel %vm1449, %v2027, 0
        %v2058 = vsel %vm1453, %v2052, 0
        %v2061 = vsel %vm1453, %v2053, 0
        %v2064 = vsel %vm1453, %v2051, 0
        %2066 = vmatprep.subr.bf16.mxu0 %v2061
        %2067 = vmatpush1.bf16.msra.mxu0 %v2058
        %2068 = vmatprep.subr.bf16.mxu0 0
        %2069 = vmatpush1.bf16.msra.mxu0 0
        %2070 = vmatprep.subr.bf16.mxu0 0
        %2071 = vmatpush1.bf16.msra.mxu0 0
        %2072 = vmatprep.subr.bf16.mxu0 0
        %2073 = vmatpush1.bf16.msra.mxu0 0
        %2074 = vmatprep.subr.bf16.mxu0 0
        %2075 = vmatpush1.bf16.msra.mxu0 0
        %2076 = vmatprep.subr.bf16.mxu0 0
        %2077 = vmatpush1.bf16.msra.mxu0 0
        %2078 = vmatprep.subr.bf16.mxu0 0
        %2079 = vmatpush1.bf16.msra.mxu0 0
        %2080 = vmatprep.subr.bf16.mxu0 0
        %2081 = vmatpush1.bf16.msra.mxu0 0
        %2082 = vmatprep.subr.bf16.mxu0 0
        %2083 = vmatpush1.bf16.msra.mxu0 0
        %2084 = vmatprep.subr.bf16.mxu0 0
        %2085 = vmatpush1.bf16.msra.mxu0 0
        %2086 = vmatprep.subr.bf16.mxu0 0
        %2087 = vmatpush1.bf16.msra.mxu0 0
        %2088 = vmatprep.subr.bf16.mxu0 0
        %2089 = vmatpush1.bf16.msra.mxu0 0
        %2090 = vmatprep.subr.bf16.mxu0 0
        %2091 = vmatpush1.bf16.msra.mxu0 0
        %2092 = vmatprep.subr.bf16.mxu0 0
        %2093 = vmatpush1.bf16.msra.mxu0 0
        %2094 = vmatprep.subr.bf16.mxu0 0
        %2095 = vmatpush1.bf16.msra.mxu0 0
        %2096 = vmatprep.subr.bf16.mxu0 0
        %2097 = vmatpush1.bf16.msra.mxu0 0
        %2098 = vmatprep.mubr.bf16.mxu0 0
        %2099 = vmatmul.mubr.bf16.gmra.mrb[0].mxu0 %v2055
        %v2100 = vpop.f32.mrb[0].mxu0
        %v2101 = vadd.f32 0.0, %v2100
        %v2102 = vpop.f32.mrb[0].mxu0
        %v2103 = vadd.f32 0.0, %v2102
        %v2104 = vpop.f32.mrb[0].mxu0
        %v2105 = vpop.f32.mrb[0].mxu0
        %2106 = vdwg.mxu0
        %2107 = vmatprep.subr.bf16.mxu0 0
        %2108 = vmatpush1.bf16.msra.mxu0 %v2064
        %2109 = vmatprep.subr.bf16.mxu0 0
        %2110 = vmatpush1.bf16.msra.mxu0 0
        %2111 = vmatprep.subr.bf16.mxu0 0
        %2112 = vmatpush1.bf16.msra.mxu0 0
        %2113 = vmatprep.subr.bf16.mxu0 0
        %2114 = vmatpush1.bf16.msra.mxu0 0
        %2115 = vmatprep.subr.bf16.mxu0 0
        %2116 = vmatpush1.bf16.msra.mxu0 0
        %2117 = vmatprep.subr.bf16.mxu0 0
        %2118 = vmatpush1.bf16.msra.mxu0 0
        %2119 = vmatprep.subr.bf16.mxu0 0
        %2120 = vmatpush1.bf16.msra.mxu0 0
        %2121 = vmatprep.subr.bf16.mxu0 0
        %2122 = vmatpush1.bf16.msra.mxu0 0
        %2123 = vmatprep.subr.bf16.mxu0 0
        %2124 = vmatpush1.bf16.msra.mxu0 0
        %2125 = vmatprep.subr.bf16.mxu0 0
        %2126 = vmatpush1.bf16.msra.mxu0 0
        %2127 = vmatprep.subr.bf16.mxu0 0
        %2128 = vmatpush1.bf16.msra.mxu0 0
        %2129 = vmatprep.subr.bf16.mxu0 0
        %2130 = vmatpush1.bf16.msra.mxu0 0
        %2131 = vmatprep.subr.bf16.mxu0 0
        %2132 = vmatpush1.bf16.msra.mxu0 0
        %2133 = vmatprep.subr.bf16.mxu0 0
        %2134 = vmatpush1.bf16.msra.mxu0 0
        %2135 = vmatprep.subr.bf16.mxu0 0
        %2136 = vmatpush1.bf16.msra.mxu0 0
        %2137 = vmatprep.subr.bf16.mxu0 0
        %2138 = vmatpush1.bf16.msra.mxu0 0
        %2139 = vmatprep.mubr.bf16.mxu0 0
        %2140 = vmatmul.mubr.bf16.gmra.mrb[0].mxu0 %v2055
        %v2141 = vpop.f32.mrb[0].mxu0
        %v2142 = vadd.f32 0.0, %v2141
        %v2143 = vpop.f32.mrb[0].mxu0
        %v2144 = vpop.f32.mrb[0].mxu0
        %v2145 = vpop.f32.mrb[0].mxu0
        %2146 = vdwg.mxu0
        %v2147 = vadd.f32 %v2023, %v2101
        %v2148 = vadd.f32 %v2024, %v2103
        %v2149 = vadd.f32 %v2025, %v2142
        %s2150 = scalar_lea.vmem %s4, 6
        %v2151 = vld [vmem:[%s2150] sm:$0x3]
        %v2152 = vld [vmem:[#allocation2] sm:$0x3f]
        %v2154 = vcombine.high %v2152, %v2152
        %v2156 = vunpack.c.l.s4 1983009808
        %v2157 = vunpack.c.0.s8 %v2156
        %v2158 = vlaneseq
        %v2159 = vshrl.u32 %v2158, 7
        %v2160 = vsub.s32 %v2157, %v2159
        %v2161 = vrot.slane %v2152, %v2160
        %v2163 = vunpack.c.l.s4 1983009808
        %v2164 = vunpack.c.0.s8 %v2163
        %v2165 = vlaneseq
        %v2166 = vshrl.u32 %v2165, 7
        %v2167 = vsub.s32 %v2164, %v2166
        %v2168 = vrot.slane %v2154, %v2167
        %v2169 = vcombine.high %v2161, %v2161
        %2170 = vrot.lane.b32.xlu0 %v2161, 110
        %v2171 = vpop.permute.xlu0 %2170
        %2172 = vrot.lane.b32.xlu0 %v2169, 110
        %v2173 = vpop.permute.xlu0 %2172
        %2174 = vrot.lane.b32.xlu0 %v2168, 110
        %v2175 = vpop.permute.xlu0 %2174
        %v2176 = vsel %vm655, %v2171, %v2173
        %v2177 = vsel %vm655, %v2173, %v2175
        %v2179 = vsel %vm1449, %v2151, 0
        %v2182 = vsel %vm1453, %v2176, 0
        %v2185 = vsel %vm1453, %v2177, 0
        %v2188 = vsel %vm1453, %v2175, 0
        %2190 = vmatprep.subr.bf16.mxu0 %v2185
        %2191 = vmatpush1.bf16.msra.mxu0 %v2182
        %2192 = vmatprep.subr.bf16.mxu0 0
        %2193 = vmatpush1.bf16.msra.mxu0 0
        %2194 = vmatprep.subr.bf16.mxu0 0
        %2195 = vmatpush1.bf16.msra.mxu0 0
        %2196 = vmatprep.subr.bf16.mxu0 0
        %2197 = vmatpush1.bf16.msra.mxu0 0
        %2198 = vmatprep.subr.bf16.mxu0 0
        %2199 = vmatpush1.bf16.msra.mxu0 0
        %2200 = vmatprep.subr.bf16.mxu0 0
        %2201 = vmatpush1.bf16.msra.mxu0 0
        %2202 = vmatprep.subr.bf16.mxu0 0
        %2203 = vmatpush1.bf16.msra.mxu0 0
        %2204 = vmatprep.subr.bf16.mxu0 0
        %2205 = vmatpush1.bf16.msra.mxu0 0
        %2206 = vmatprep.subr.bf16.mxu0 0
        %2207 = vmatpush1.bf16.msra.mxu0 0
        %2208 = vmatprep.subr.bf16.mxu0 0
        %2209 = vmatpush1.bf16.msra.mxu0 0
        %2210 = vmatprep.subr.bf16.mxu0 0
        %2211 = vmatpush1.bf16.msra.mxu0 0
        %2212 = vmatprep.subr.bf16.mxu0 0
        %2213 = vmatpush1.bf16.msra.mxu0 0
        %2214 = vmatprep.subr.bf16.mxu0 0
        %2215 = vmatpush1.bf16.msra.mxu0 0
        %2216 = vmatprep.subr.bf16.mxu0 0
        %2217 = vmatpush1.bf16.msra.mxu0 0
        %2218 = vmatprep.subr.bf16.mxu0 0
        %2219 = vmatpush1.bf16.msra.mxu0 0
        %2220 = vmatprep.subr.bf16.mxu0 0
        %2221 = vmatpush1.bf16.msra.mxu0 0
        %2222 = vmatprep.mubr.bf16.mxu0 0
        %2223 = vmatmul.mubr.bf16.gmra.mrb[0].mxu0 %v2179
        %v2224 = vpop.f32.mrb[0].mxu0
        %v2225 = vadd.f32 0.0, %v2224
        %v2226 = vpop.f32.mrb[0].mxu0
        %v2227 = vadd.f32 0.0, %v2226
        %v2228 = vpop.f32.mrb[0].mxu0
        %v2229 = vpop.f32.mrb[0].mxu0
        %2230 = vdwg.mxu0
        %2231 = vmatprep.subr.bf16.mxu0 0
        %2232 = vmatpush1.bf16.msra.mxu0 %v2188
        %2233 = vmatprep.subr.bf16.mxu0 0
        %2234 = vmatpush1.bf16.msra.mxu0 0
        %2235 = vmatprep.subr.bf16.mxu0 0
        %2236 = vmatpush1.bf16.msra.mxu0 0
        %2237 = vmatprep.subr.bf16.mxu0 0
        %2238 = vmatpush1.bf16.msra.mxu0 0
        %2239 = vmatprep.subr.bf16.mxu0 0
        %2240 = vmatpush1.bf16.msra.mxu0 0
        %2241 = vmatprep.subr.bf16.mxu0 0
        %2242 = vmatpush1.bf16.msra.mxu0 0
        %2243 = vmatprep.subr.bf16.mxu0 0
        %2244 = vmatpush1.bf16.msra.mxu0 0
        %2245 = vmatprep.subr.bf16.mxu0 0
        %2246 = vmatpush1.bf16.msra.mxu0 0
        %2247 = vmatprep.subr.bf16.mxu0 0
        %2248 = vmatpush1.bf16.msra.mxu0 0
        %2249 = vmatprep.subr.bf16.mxu0 0
        %2250 = vmatpush1.bf16.msra.mxu0 0
        %2251 = vmatprep.subr.bf16.mxu0 0
        %2252 = vmatpush1.bf16.msra.mxu0 0
        %2253 = vmatprep.subr.bf16.mxu0 0
        %2254 = vmatpush1.bf16.msra.mxu0 0
        %2255 = vmatprep.subr.bf16.mxu0 0
        %2256 = vmatpush1.bf16.msra.mxu0 0
        %2257 = vmatprep.subr.bf16.mxu0 0
        %2258 = vmatpush1.bf16.msra.mxu0 0
        %2259 = vmatprep.subr.bf16.mxu0 0
        %2260 = vmatpush1.bf16.msra.mxu0 0
        %2261 = vmatprep.subr.bf16.mxu0 0
        %2262 = vmatpush1.bf16.msra.mxu0 0
        %2263 = vmatprep.mubr.bf16.mxu0 0
        %2264 = vmatmul.mubr.bf16.gmra.mrb[0].mxu0 %v2179
        %v2265 = vpop.f32.mrb[0].mxu0
        %v2266 = vadd.f32 0.0, %v2265
        %v2267 = vpop.f32.mrb[0].mxu0
        %v2268 = vpop.f32.mrb[0].mxu0
        %v2269 = vpop.f32.mrb[0].mxu0
        %2270 = vdwg.mxu0
        %v2271 = vadd.f32 %v2147, %v2225
        %v2272 = vadd.f32 %v2148, %v2227
        %v2273 = vadd.f32 %v2149, %v2266
        %s2274 = scalar_lea.vmem %s5, 6
        %v2275 = vld [vmem:[%s2274] sm:$0x3]
        %v2276 = vld [vmem:[#allocation3] sm:$0x3f]
        %v2278 = vcombine.high %v2276, %v2276
        %v2280 = vunpack.c.l.s4 1983009808
        %v2281 = vunpack.c.0.s8 %v2280
        %v2282 = vlaneseq
        %v2283 = vshrl.u32 %v2282, 7
        %v2284 = vsub.s32 %v2281, %v2283
        %v2285 = vrot.slane %v2276, %v2284
        %v2287 = vunpack.c.l.s4 1983009808
        %v2288 = vunpack.c.0.s8 %v2287
        %v2289 = vlaneseq
        %v2290 = vshrl.u32 %v2289, 7
        %v2291 = vsub.s32 %v2288, %v2290
        %v2292 = vrot.slane %v2278, %v2291
        %v2293 = vcombine.high %v2285, %v2285
        %2294 = vrot.lane.b32.xlu0 %v2285, 110
        %v2295 = vpop.permute.xlu0 %2294
        %2296 = vrot.lane.b32.xlu0 %v2293, 110
        %v2297 = vpop.permute.xlu0 %2296
        %2298 = vrot.lane.b32.xlu0 %v2292, 110
        %v2299 = vpop.permute.xlu0 %2298
        %v2300 = vsel %vm655, %v2295, %v2297
        %v2301 = vsel %vm655, %v2297, %v2299
        %v2303 = vsel %vm1449, %v2275, 0
        %v2306 = vsel %vm1453, %v2300, 0
        %v2309 = vsel %vm1453, %v2301, 0
        %v2312 = vsel %vm1453, %v2299, 0
        %2314 = vmatprep.subr.bf16.mxu0 %v2309
        %2315 = vmatpush1.bf16.msra.mxu0 %v2306
        %2316 = vmatprep.subr.bf16.mxu0 0
        %2317 = vmatpush1.bf16.msra.mxu0 0
        %2318 = vmatprep.subr.bf16.mxu0 0
        %2319 = vmatpush1.bf16.msra.mxu0 0
        %2320 = vmatprep.subr.bf16.mxu0 0
        %2321 = vmatpush1.bf16.msra.mxu0 0
        %2322 = vmatprep.subr.bf16.mxu0 0
        %2323 = vmatpush1.bf16.msra.mxu0 0
        %2324 = vmatprep.subr.bf16.mxu0 0
        %2325 = vmatpush1.bf16.msra.mxu0 0
        %2326 = vmatprep.subr.bf16.mxu0 0
        %2327 = vmatpush1.bf16.msra.mxu0 0
        %2328 = vmatprep.subr.bf16.mxu0 0
        %2329 = vmatpush1.bf16.msra.mxu0 0
        %2330 = vmatprep.subr.bf16.mxu0 0
        %2331 = vmatpush1.bf16.msra.mxu0 0
        %2332 = vmatprep.subr.bf16.mxu0 0
        %2333 = vmatpush1.bf16.msra.mxu0 0
        %2334 = vmatprep.subr.bf16.mxu0 0
        %2335 = vmatpush1.bf16.msra.mxu0 0
        %2336 = vmatprep.subr.bf16.mxu0 0
        %2337 = vmatpush1.bf16.msra.mxu0 0
        %2338 = vmatprep.subr.bf16.mxu0 0
        %2339 = vmatpush1.bf16.msra.mxu0 0
        %2340 = vmatprep.subr.bf16.mxu0 0
        %2341 = vmatpush1.bf16.msra.mxu0 0
        %2342 = vmatprep.subr.bf16.mxu0 0
        %2343 = vmatpush1.bf16.msra.mxu0 0
        %2344 = vmatprep.subr.bf16.mxu0 0
        %2345 = vmatpush1.bf16.msra.mxu0 0
        %2346 = vmatprep.mubr.bf16.mxu0 0
        %2347 = vmatmul.mubr.bf16.gmra.mrb[0].mxu0 %v2303
        %v2348 = vpop.f32.mrb[0].mxu0
        %v2349 = vadd.f32 0.0, %v2348
        %v2350 = vpop.f32.mrb[0].mxu0
        %v2351 = vadd.f32 0.0, %v2350
        %v2352 = vpop.f32.mrb[0].mxu0
        %v2353 = vpop.f32.mrb[0].mxu0
        %2354 = vdwg.mxu0
        %2355 = vmatprep.subr.bf16.mxu0 0
        %2356 = vmatpush1.bf16.msra.mxu0 %v2312
        %2357 = vmatprep.subr.bf16.mxu0 0
        %2358 = vmatpush1.bf16.msra.mxu0 0
        %2359 = vmatprep.subr.bf16.mxu0 0
        %2360 = vmatpush1.bf16.msra.mxu0 0
        %2361 = vmatprep.subr.bf16.mxu0 0
        %2362 = vmatpush1.bf16.msra.mxu0 0
        %2363 = vmatprep.subr.bf16.mxu0 0
        %2364 = vmatpush1.bf16.msra.mxu0 0
        %2365 = vmatprep.subr.bf16.mxu0 0
        %2366 = vmatpush1.bf16.msra.mxu0 0
        %2367 = vmatprep.subr.bf16.mxu0 0
        %2368 = vmatpush1.bf16.msra.mxu0 0
        %2369 = vmatprep.subr.bf16.mxu0 0
        %2370 = vmatpush1.bf16.msra.mxu0 0
        %2371 = vmatprep.subr.bf16.mxu0 0
        %2372 = vmatpush1.bf16.msra.mxu0 0
        %2373 = vmatprep.subr.bf16.mxu0 0
        %2374 = vmatpush1.bf16.msra.mxu0 0
        %2375 = vmatprep.subr.bf16.mxu0 0
        %2376 = vmatpush1.bf16.msra.mxu0 0
        %2377 = vmatprep.subr.bf16.mxu0 0
        %2378 = vmatpush1.bf16.msra.mxu0 0
        %2379 = vmatprep.subr.bf16.mxu0 0
        %2380 = vmatpush1.bf16.msra.mxu0 0
        %2381 = vmatprep.subr.bf16.mxu0 0
        %2382 = vmatpush1.bf16.msra.mxu0 0
        %2383 = vmatprep.subr.bf16.mxu0 0
        %2384 = vmatpush1.bf16.msra.mxu0 0
        %2385 = vmatprep.subr.bf16.mxu0 0
        %2386 = vmatpush1.bf16.msra.mxu0 0
        %2387 = vmatprep.mubr.bf16.mxu0 0
        %2388 = vmatmul.mubr.bf16.gmra.mrb[0].mxu0 %v2303
        %v2389 = vpop.f32.mrb[0].mxu0
        %v2390 = vadd.f32 0.0, %v2389
        %v2391 = vpop.f32.mrb[0].mxu0
        %v2392 = vpop.f32.mrb[0].mxu0
        %v2393 = vpop.f32.mrb[0].mxu0
        %2394 = vdwg.mxu0
        %v2395 = vadd.f32 %v2271, %v2349
        %v2396 = vadd.f32 %v2272, %v2351
        %v2397 = vadd.f32 %v2273, %v2390
        %s2398 = scalar_lea.vmem %s4, 8
        %v2399 = vld [vmem:[%s2398] sm:$0x3]
        %v2400 = vld [vmem:[#allocation2] sm:$0x3f]
        %v2402 = vcombine.high %v2400, %v2400
        %v2404 = vunpack.c.l.s4 1983009808
        %v2405 = vunpack.c.0.s8 %v2404
        %v2406 = vlaneseq
        %v2407 = vshrl.u32 %v2406, 7
        %v2408 = vsub.s32 %v2405, %v2407
        %v2409 = vrot.slane %v2400, %v2408
        %v2411 = vunpack.c.l.s4 1983009808
        %v2412 = vunpack.c.0.s8 %v2411
        %v2413 = vlaneseq
        %v2414 = vshrl.u32 %v2413, 7
        %v2415 = vsub.s32 %v2412, %v2414
        %v2416 = vrot.slane %v2402, %v2415
        %v2417 = vcombine.high %v2409, %v2409
        %2418 = vrot.lane.b32.xlu0 %v2409, 109
        %v2419 = vpop.permute.xlu0 %2418
        %2420 = vrot.lane.b32.xlu0 %v2417, 109
        %v2421 = vpop.permute.xlu0 %2420
        %2422 = vrot.lane.b32.xlu0 %v2416, 109
        %v2423 = vpop.permute.xlu0 %2422
        %v2424 = vsel %vm762, %v2419, %v2421
        %v2425 = vsel %vm762, %v2421, %v2423
        %v2427 = vsel %vm1449, %v2399, 0
        %v2430 = vsel %vm1453, %v2424, 0
        %v2433 = vsel %vm1453, %v2425, 0
        %v2436 = vsel %vm1453, %v2423, 0
        %2438 = vmatprep.subr.bf16.mxu0 %v2433
        %2439 = vmatpush1.bf16.msra.mxu0 %v2430
        %2440 = vmatprep.subr.bf16.mxu0 0
        %2441 = vmatpush1.bf16.msra.mxu0 0
        %2442 = vmatprep.subr.bf16.mxu0 0
        %2443 = vmatpush1.bf16.msra.mxu0 0
        %2444 = vmatprep.subr.bf16.mxu0 0
        %2445 = vmatpush1.bf16.msra.mxu0 0
        %2446 = vmatprep.subr.bf16.mxu0 0
        %2447 = vmatpush1.bf16.msra.mxu0 0
        %2448 = vmatprep.subr.bf16.mxu0 0
        %2449 = vmatpush1.bf16.msra.mxu0 0
        %2450 = vmatprep.subr.bf16.mxu0 0
        %2451 = vmatpush1.bf16.msra.mxu0 0
        %2452 = vmatprep.subr.bf16.mxu0 0
        %2453 = vmatpush1.bf16.msra.mxu0 0
        %2454 = vmatprep.subr.bf16.mxu0 0
        %2455 = vmatpush1.bf16.msra.mxu0 0
        %2456 = vmatprep.subr.bf16.mxu0 0
        %2457 = vmatpush1.bf16.msra.mxu0 0
        %2458 = vmatprep.subr.bf16.mxu0 0
        %2459 = vmatpush1.bf16.msra.mxu0 0
        %2460 = vmatprep.subr.bf16.mxu0 0
        %2461 = vmatpush1.bf16.msra.mxu0 0
        %2462 = vmatprep.subr.bf16.mxu0 0
        %2463 = vmatpush1.bf16.msra.mxu0 0
        %2464 = vmatprep.subr.bf16.mxu0 0
        %2465 = vmatpush1.bf16.msra.mxu0 0
        %2466 = vmatprep.subr.bf16.mxu0 0
        %2467 = vmatpush1.bf16.msra.mxu0 0
        %2468 = vmatprep.subr.bf16.mxu0 0
        %2469 = vmatpush1.bf16.msra.mxu0 0
        %2470 = vmatprep.mubr.bf16.mxu0 0
        %2471 = vmatmul.mubr.bf16.gmra.mrb[0].mxu0 %v2427
        %v2472 = vpop.f32.mrb[0].mxu0
        %v2473 = vadd.f32 0.0, %v2472
        %v2474 = vpop.f32.mrb[0].mxu0
        %v2475 = vadd.f32 0.0, %v2474
        %v2476 = vpop.f32.mrb[0].mxu0
        %v2477 = vpop.f32.mrb[0].mxu0
        %2478 = vdwg.mxu0
        %2479 = vmatprep.subr.bf16.mxu0 0
        %2480 = vmatpush1.bf16.msra.mxu0 %v2436
        %2481 = vmatprep.subr.bf16.mxu0 0
        %2482 = vmatpush1.bf16.msra.mxu0 0
        %2483 = vmatprep.subr.bf16.mxu0 0
        %2484 = vmatpush1.bf16.msra.mxu0 0
        %2485 = vmatprep.subr.bf16.mxu0 0
        %2486 = vmatpush1.bf16.msra.mxu0 0
        %2487 = vmatprep.subr.bf16.mxu0 0
        %2488 = vmatpush1.bf16.msra.mxu0 0
        %2489 = vmatprep.subr.bf16.mxu0 0
        %2490 = vmatpush1.bf16.msra.mxu0 0
        %2491 = vmatprep.subr.bf16.mxu0 0
        %2492 = vmatpush1.bf16.msra.mxu0 0
        %2493 = vmatprep.subr.bf16.mxu0 0
        %2494 = vmatpush1.bf16.msra.mxu0 0
        %2495 = vmatprep.subr.bf16.mxu0 0
        %2496 = vmatpush1.bf16.msra.mxu0 0
        %2497 = vmatprep.subr.bf16.mxu0 0
        %2498 = vmatpush1.bf16.msra.mxu0 0
        %2499 = vmatprep.subr.bf16.mxu0 0
        %2500 = vmatpush1.bf16.msra.mxu0 0
        %2501 = vmatprep.subr.bf16.mxu0 0
        %2502 = vmatpush1.bf16.msra.mxu0 0
        %2503 = vmatprep.subr.bf16.mxu0 0
        %2504 = vmatpush1.bf16.msra.mxu0 0
        %2505 = vmatprep.subr.bf16.mxu0 0
        %2506 = vmatpush1.bf16.msra.mxu0 0
        %2507 = vmatprep.subr.bf16.mxu0 0
        %2508 = vmatpush1.bf16.msra.mxu0 0
        %2509 = vmatprep.subr.bf16.mxu0 0
        %2510 = vmatpush1.bf16.msra.mxu0 0
        %2511 = vmatprep.mubr.bf16.mxu0 0
        %2512 = vmatmul.mubr.bf16.gmra.mrb[0].mxu0 %v2427
        %v2513 = vpop.f32.mrb[0].mxu0
        %v2514 = vadd.f32 0.0, %v2513
        %v2515 = vpop.f32.mrb[0].mxu0
        %v2516 = vpop.f32.mrb[0].mxu0
        %v2517 = vpop.f32.mrb[0].mxu0
        %2518 = vdwg.mxu0
        %v2519 = vadd.f32 %v2395, %v2473
        %v2520 = vadd.f32 %v2396, %v2475
        %v2521 = vadd.f32 %v2397, %v2514
        %s2522 = scalar_lea.vmem %s5, 8
        %v2523 = vld [vmem:[%s2522] sm:$0x3]
        %v2524 = vld [vmem:[#allocation3] sm:$0x3f]
        %v2526 = vcombine.high %v2524, %v2524
        %v2528 = vunpack.c.l.s4 1983009808
        %v2529 = vunpack.c.0.s8 %v2528
        %v2530 = vlaneseq
        %v2531 = vshrl.u32 %v2530, 7
        %v2532 = vsub.s32 %v2529, %v2531
        %v2533 = vrot.slane %v2524, %v2532
        %v2535 = vunpack.c.l.s4 1983009808
        %v2536 = vunpack.c.0.s8 %v2535
        %v2537 = vlaneseq
        %v2538 = vshrl.u32 %v2537, 7
        %v2539 = vsub.s32 %v2536, %v2538
        %v2540 = vrot.slane %v2526, %v2539
        %v2541 = vcombine.high %v2533, %v2533
        %2542 = vrot.lane.b32.xlu0 %v2533, 109
        %v2543 = vpop.permute.xlu0 %2542
        %2544 = vrot.lane.b32.xlu0 %v2541, 109
        %v2545 = vpop.permute.xlu0 %2544
        %2546 = vrot.lane.b32.xlu0 %v2540, 109
        %v2547 = vpop.permute.xlu0 %2546
        %v2548 = vsel %vm762, %v2543, %v2545
        %v2549 = vsel %vm762, %v2545, %v2547
        %v2551 = vsel %vm1449, %v2523, 0
        %v2554 = vsel %vm1453, %v2548, 0
        %v2557 = vsel %vm1453, %v2549, 0
        %v2560 = vsel %vm1453, %v2547, 0
        %2562 = vmatprep.subr.bf16.mxu0 %v2557
        %2563 = vmatpush1.bf16.msra.mxu0 %v2554
        %2564 = vmatprep.subr.bf16.mxu0 0
        %2565 = vmatpush1.bf16.msra.mxu0 0
        %2566 = vmatprep.subr.bf16.mxu0 0
        %2567 = vmatpush1.bf16.msra.mxu0 0
        %2568 = vmatprep.subr.bf16.mxu0 0
        %2569 = vmatpush1.bf16.msra.mxu0 0
        %2570 = vmatprep.subr.bf16.mxu0 0
        %2571 = vmatpush1.bf16.msra.mxu0 0
        %2572 = vmatprep.subr.bf16.mxu0 0
        %2573 = vmatpush1.bf16.msra.mxu0 0
        %2574 = vmatprep.subr.bf16.mxu0 0
        %2575 = vmatpush1.bf16.msra.mxu0 0
        %2576 = vmatprep.subr.bf16.mxu0 0
        %2577 = vmatpush1.bf16.msra.mxu0 0
        %2578 = vmatprep.subr.bf16.mxu0 0
        %2579 = vmatpush1.bf16.msra.mxu0 0
        %2580 = vmatprep.subr.bf16.mxu0 0
        %2581 = vmatpush1.bf16.msra.mxu0 0
        %2582 = vmatprep.subr.bf16.mxu0 0
        %2583 = vmatpush1.bf16.msra.mxu0 0
        %2584 = vmatprep.subr.bf16.mxu0 0
        %2585 = vmatpush1.bf16.msra.mxu0 0
        %2586 = vmatprep.subr.bf16.mxu0 0
        %2587 = vmatpush1.bf16.msra.mxu0 0
        %2588 = vmatprep.subr.bf16.mxu0 0
        %2589 = vmatpush1.bf16.msra.mxu0 0
        %2590 = vmatprep.subr.bf16.mxu0 0
        %2591 = vmatpush1.bf16.msra.mxu0 0
        %2592 = vmatprep.subr.bf16.mxu0 0
        %2593 = vmatpush1.bf16.msra.mxu0 0
        %2594 = vmatprep.mubr.bf16.mxu0 0
        %2595 = vmatmul.mubr.bf16.gmra.mrb[0].mxu0 %v2551
        %v2596 = vpop.f32.mrb[0].mxu0
        %v2597 = vadd.f32 0.0, %v2596
        %v2598 = vpop.f32.mrb[0].mxu0
        %v2599 = vadd.f32 0.0, %v2598
        %v2600 = vpop.f32.mrb[0].mxu0
        %v2601 = vpop.f32.mrb[0].mxu0
        %2602 = vdwg.mxu0
        %2603 = vmatprep.subr.bf16.mxu0 0
        %2604 = vmatpush1.bf16.msra.mxu0 %v2560
        %2605 = vmatprep.subr.bf16.mxu0 0
        %2606 = vmatpush1.bf16.msra.mxu0 0
        %2607 = vmatprep.subr.bf16.mxu0 0
        %2608 = vmatpush1.bf16.msra.mxu0 0
        %2609 = vmatprep.subr.bf16.mxu0 0
        %2610 = vmatpush1.bf16.msra.mxu0 0
        %2611 = vmatprep.subr.bf16.mxu0 0
        %2612 = vmatpush1.bf16.msra.mxu0 0
        %2613 = vmatprep.subr.bf16.mxu0 0
        %2614 = vmatpush1.bf16.msra.mxu0 0
        %2615 = vmatprep.subr.bf16.mxu0 0
        %2616 = vmatpush1.bf16.msra.mxu0 0
        %2617 = vmatprep.subr.bf16.mxu0 0
        %2618 = vmatpush1.bf16.msra.mxu0 0
        %2619 = vmatprep.subr.bf16.mxu0 0
        %2620 = vmatpush1.bf16.msra.mxu0 0
        %2621 = vmatprep.subr.bf16.mxu0 0
        %2622 = vmatpush1.bf16.msra.mxu0 0
        %2623 = vmatprep.subr.bf16.mxu0 0
        %2624 = vmatpush1.bf16.msra.mxu0 0
        %2625 = vmatprep.subr.bf16.mxu0 0
        %2626 = vmatpush1.bf16.msra.mxu0 0
        %2627 = vmatprep.subr.bf16.mxu0 0
        %2628 = vmatpush1.bf16.msra.mxu0 0
        %2629 = vmatprep.subr.bf16.mxu0 0
        %2630 = vmatpush1.bf16.msra.mxu0 0
        %2631 = vmatprep.subr.bf16.mxu0 0
        %2632 = vmatpush1.bf16.msra.mxu0 0
        %2633 = vmatprep.subr.bf16.mxu0 0
        %2634 = vmatpush1.bf16.msra.mxu0 0
        %2635 = vmatprep.mubr.bf16.mxu0 0
        %2636 = vmatmul.mubr.bf16.gmra.mrb[0].mxu0 %v2551
        %v2637 = vpop.f32.mrb[0].mxu0
        %v2638 = vadd.f32 0.0, %v2637
        %v2639 = vpop.f32.mrb[0].mxu0
        %v2640 = vpop.f32.mrb[0].mxu0
        %v2641 = vpop.f32.mrb[0].mxu0
        %2642 = vdwg.mxu0
        %v2643 = vadd.f32 %v2519, %v2597
        %v2644 = vadd.f32 %v2520, %v2599
        %v2645 = vadd.f32 %v2521, %v2638
        %s2646 = scalar_lea.vmem %s4, 10
        %v2647 = vld [vmem:[%s2646] sm:$0x3]
        %v2648 = vld [vmem:[#allocation2] sm:$0x3f]
        %v2650 = vcombine.high %v2648, %v2648
        %v2652 = vunpack.c.l.s4 1983009808
        %v2653 = vunpack.c.0.s8 %v2652
        %v2654 = vlaneseq
        %v2655 = vshrl.u32 %v2654, 7
        %v2656 = vsub.s32 %v2653, %v2655
        %v2657 = vrot.slane %v2648, %v2656
        %v2659 = vunpack.c.l.s4 1983009808
        %v2660 = vunpack.c.0.s8 %v2659
        %v2661 = vlaneseq
        %v2662 = vshrl.u32 %v2661, 7
        %v2663 = vsub.s32 %v2660, %v2662
        %v2664 = vrot.slane %v2650, %v2663
        %v2665 = vcombine.high %v2657, %v2657
        %2666 = vrot.lane.b32.xlu0 %v2657, 108
        %v2667 = vpop.permute.xlu0 %2666
        %2668 = vrot.lane.b32.xlu0 %v2665, 108
        %v2669 = vpop.permute.xlu0 %2668
        %2670 = vrot.lane.b32.xlu0 %v2664, 108
        %v2671 = vpop.permute.xlu0 %2670
        %v2672 = vsel %vm869, %v2667, %v2669
        %v2673 = vsel %vm869, %v2669, %v2671
        %v2675 = vsel %vm1449, %v2647, 0
        %v2678 = vsel %vm1453, %v2672, 0
        %v2681 = vsel %vm1453, %v2673, 0
        %v2684 = vsel %vm1453, %v2671, 0
        %2686 = vmatprep.subr.bf16.mxu0 %v2681
        %2687 = vmatpush1.bf16.msra.mxu0 %v2678
        %2688 = vmatprep.subr.bf16.mxu0 0
        %2689 = vmatpush1.bf16.msra.mxu0 0
        %2690 = vmatprep.subr.bf16.mxu0 0
        %2691 = vmatpush1.bf16.msra.mxu0 0
        %2692 = vmatprep.subr.bf16.mxu0 0
        %2693 = vmatpush1.bf16.msra.mxu0 0
        %2694 = vmatprep.subr.bf16.mxu0 0
        %2695 = vmatpush1.bf16.msra.mxu0 0
        %2696 = vmatprep.subr.bf16.mxu0 0
        %2697 = vmatpush1.bf16.msra.mxu0 0
        %2698 = vmatprep.subr.bf16.mxu0 0
        %2699 = vmatpush1.bf16.msra.mxu0 0
        %2700 = vmatprep.subr.bf16.mxu0 0
        %2701 = vmatpush1.bf16.msra.mxu0 0
        %2702 = vmatprep.subr.bf16.mxu0 0
        %2703 = vmatpush1.bf16.msra.mxu0 0
        %2704 = vmatprep.subr.bf16.mxu0 0
        %2705 = vmatpush1.bf16.msra.mxu0 0
        %2706 = vmatprep.subr.bf16.mxu0 0
        %2707 = vmatpush1.bf16.msra.mxu0 0
        %2708 = vmatprep.subr.bf16.mxu0 0
        %2709 = vmatpush1.bf16.msra.mxu0 0
        %2710 = vmatprep.subr.bf16.mxu0 0
        %2711 = vmatpush1.bf16.msra.mxu0 0
        %2712 = vmatprep.subr.bf16.mxu0 0
        %2713 = vmatpush1.bf16.msra.mxu0 0
        %2714 = vmatprep.subr.bf16.mxu0 0
        %2715 = vmatpush1.bf16.msra.mxu0 0
        %2716 = vmatprep.subr.bf16.mxu0 0
        %2717 = vmatpush1.bf16.msra.mxu0 0
        %2718 = vmatprep.mubr.bf16.mxu0 0
        %2719 = vmatmul.mubr.bf16.gmra.mrb[0].mxu0 %v2675
        %v2720 = vpop.f32.mrb[0].mxu0
        %v2721 = vadd.f32 0.0, %v2720
        %v2722 = vpop.f32.mrb[0].mxu0
        %v2723 = vadd.f32 0.0, %v2722
        %v2724 = vpop.f32.mrb[0].mxu0
        %v2725 = vpop.f32.mrb[0].mxu0
        %2726 = vdwg.mxu0
        %2727 = vmatprep.subr.bf16.mxu0 0
        %2728 = vmatpush1.bf16.msra.mxu0 %v2684
        %2729 = vmatprep.subr.bf16.mxu0 0
        %2730 = vmatpush1.bf16.msra.mxu0 0
        %2731 = vmatprep.subr.bf16.mxu0 0
        %2732 = vmatpush1.bf16.msra.mxu0 0
        %2733 = vmatprep.subr.bf16.mxu0 0
        %2734 = vmatpush1.bf16.msra.mxu0 0
        %2735 = vmatprep.subr.bf16.mxu0 0
        %2736 = vmatpush1.bf16.msra.mxu0 0
        %2737 = vmatprep.subr.bf16.mxu0 0
        %2738 = vmatpush1.bf16.msra.mxu0 0
        %2739 = vmatprep.subr.bf16.mxu0 0
        %2740 = vmatpush1.bf16.msra.mxu0 0
        %2741 = vmatprep.subr.bf16.mxu0 0
        %2742 = vmatpush1.bf16.msra.mxu0 0
        %2743 = vmatprep.subr.bf16.mxu0 0
        %2744 = vmatpush1.bf16.msra.mxu0 0
        %2745 = vmatprep.subr.bf16.mxu0 0
        %2746 = vmatpush1.bf16.msra.mxu0 0
        %2747 = vmatprep.subr.bf16.mxu0 0
        %2748 = vmatpush1.bf16.msra.mxu0 0
        %2749 = vmatprep.subr.bf16.mxu0 0
        %2750 = vmatpush1.bf16.msra.mxu0 0
        %2751 = vmatprep.subr.bf16.mxu0 0
        %2752 = vmatpush1.bf16.msra.mxu0 0
        %2753 = vmatprep.subr.bf16.mxu0 0
        %2754 = vmatpush1.bf16.msra.mxu0 0
        %2755 = vmatprep.subr.bf16.mxu0 0
        %2756 = vmatpush1.bf16.msra.mxu0 0
        %2757 = vmatprep.subr.bf16.mxu0 0
        %2758 = vmatpush1.bf16.msra.mxu0 0
        %2759 = vmatprep.mubr.bf16.mxu0 0
        %2760 = vmatmul.mubr.bf16.gmra.mrb[0].mxu0 %v2675
        %v2761 = vpop.f32.mrb[0].mxu0
        %v2762 = vadd.f32 0.0, %v2761
        %v2763 = vpop.f32.mrb[0].mxu0
        %v2764 = vpop.f32.mrb[0].mxu0
        %v2765 = vpop.f32.mrb[0].mxu0
        %2766 = vdwg.mxu0
        %v2767 = vadd.f32 %v2643, %v2721
        %v2768 = vadd.f32 %v2644, %v2723
        %v2769 = vadd.f32 %v2645, %v2762
        %s2770 = scalar_lea.vmem %s5, 10
        %v2771 = vld [vmem:[%s2770] sm:$0x3]
        %v2772 = vld [vmem:[#allocation3] sm:$0x3f]
        %v2774 = vcombine.high %v2772, %v2772
        %v2776 = vunpack.c.l.s4 1983009808
        %v2777 = vunpack.c.0.s8 %v2776
        %v2778 = vlaneseq
        %v2779 = vshrl.u32 %v2778, 7
        %v2780 = vsub.s32 %v2777, %v2779
        %v2781 = vrot.slane %v2772, %v2780
        %v2783 = vunpack.c.l.s4 1983009808
        %v2784 = vunpack.c.0.s8 %v2783
        %v2785 = vlaneseq
        %v2786 = vshrl.u32 %v2785, 7
        %v2787 = vsub.s32 %v2784, %v2786
        %v2788 = vrot.slane %v2774, %v2787
        %v2789 = vcombine.high %v2781, %v2781
        %2790 = vrot.lane.b32.xlu0 %v2781, 108
        %v2791 = vpop.permute.xlu0 %2790
        %2792 = vrot.lane.b32.xlu0 %v2789, 108
        %v2793 = vpop.permute.xlu0 %2792
        %2794 = vrot.lane.b32.xlu0 %v2788, 108
        %v2795 = vpop.permute.xlu0 %2794
        %v2796 = vsel %vm869, %v2791, %v2793
        %v2797 = vsel %vm869, %v2793, %v2795
        %v2799 = vsel %vm1449, %v2771, 0
        %v2802 = vsel %vm1453, %v2796, 0
        %v2805 = vsel %vm1453, %v2797, 0
        %v2808 = vsel %vm1453, %v2795, 0
        %2810 = vmatprep.subr.bf16.mxu0 %v2805
        %2811 = vmatpush1.bf16.msra.mxu0 %v2802
        %2812 = vmatprep.subr.bf16.mxu0 0
        %2813 = vmatpush1.bf16.msra.mxu0 0
        %2814 = vmatprep.subr.bf16.mxu0 0
        %2815 = vmatpush1.bf16.msra.mxu0 0
        %2816 = vmatprep.subr.bf16.mxu0 0
        %2817 = vmatpush1.bf16.msra.mxu0 0
        %2818 = vmatprep.subr.bf16.mxu0 0
        %2819 = vmatpush1.bf16.msra.mxu0 0
        %2820 = vmatprep.subr.bf16.mxu0 0
        %2821 = vmatpush1.bf16.msra.mxu0 0
        %2822 = vmatprep.subr.bf16.mxu0 0
        %2823 = vmatpush1.bf16.msra.mxu0 0
        %2824 = vmatprep.subr.bf16.mxu0 0
        %2825 = vmatpush1.bf16.msra.mxu0 0
        %2826 = vmatprep.subr.bf16.mxu0 0
        %2827 = vmatpush1.bf16.msra.mxu0 0
        %2828 = vmatprep.subr.bf16.mxu0 0
        %2829 = vmatpush1.bf16.msra.mxu0 0
        %2830 = vmatprep.subr.bf16.mxu0 0
        %2831 = vmatpush1.bf16.msra.mxu0 0
        %2832 = vmatprep.subr.bf16.mxu0 0
        %2833 = vmatpush1.bf16.msra.mxu0 0
        %2834 = vmatprep.subr.bf16.mxu0 0
        %2835 = vmatpush1.bf16.msra.mxu0 0
        %2836 = vmatprep.subr.bf16.mxu0 0
        %2837 = vmatpush1.bf16.msra.mxu0 0
        %2838 = vmatprep.subr.bf16.mxu0 0
        %2839 = vmatpush1.bf16.msra.mxu0 0
        %2840 = vmatprep.subr.bf16.mxu0 0
        %2841 = vmatpush1.bf16.msra.mxu0 0
        %2842 = vmatprep.mubr.bf16.mxu0 0
        %2843 = vmatmul.mubr.bf16.gmra.mrb[0].mxu0 %v2799
        %v2844 = vpop.f32.mrb[0].mxu0
        %v2845 = vadd.f32 0.0, %v2844
        %v2846 = vpop.f32.mrb[0].mxu0
        %v2847 = vadd.f32 0.0, %v2846
        %v2848 = vpop.f32.mrb[0].mxu0
        %v2849 = vpop.f32.mrb[0].mxu0
        %2850 = vdwg.mxu0
        %2851 = vmatprep.subr.bf16.mxu0 0
        %2852 = vmatpush1.bf16.msra.mxu0 %v2808
        %2853 = vmatprep.subr.bf16.mxu0 0
        %2854 = vmatpush1.bf16.msra.mxu0 0
        %2855 = vmatprep.subr.bf16.mxu0 0
        %2856 = vmatpush1.bf16.msra.mxu0 0
        %2857 = vmatprep.subr.bf16.mxu0 0
        %2858 = vmatpush1.bf16.msra.mxu0 0
        %2859 = vmatprep.subr.bf16.mxu0 0
        %2860 = vmatpush1.bf16.msra.mxu0 0
        %2861 = vmatprep.subr.bf16.mxu0 0
        %2862 = vmatpush1.bf16.msra.mxu0 0
        %2863 = vmatprep.subr.bf16.mxu0 0
        %2864 = vmatpush1.bf16.msra.mxu0 0
        %2865 = vmatprep.subr.bf16.mxu0 0
        %2866 = vmatpush1.bf16.msra.mxu0 0
        %2867 = vmatprep.subr.bf16.mxu0 0
        %2868 = vmatpush1.bf16.msra.mxu0 0
        %2869 = vmatprep.subr.bf16.mxu0 0
        %2870 = vmatpush1.bf16.msra.mxu0 0
        %2871 = vmatprep.subr.bf16.mxu0 0
        %2872 = vmatpush1.bf16.msra.mxu0 0
        %2873 = vmatprep.subr.bf16.mxu0 0
        %2874 = vmatpush1.bf16.msra.mxu0 0
        %2875 = vmatprep.subr.bf16.mxu0 0
        %2876 = vmatpush1.bf16.msra.mxu0 0
        %2877 = vmatprep.subr.bf16.mxu0 0
        %2878 = vmatpush1.bf16.msra.mxu0 0
        %2879 = vmatprep.subr.bf16.mxu0 0
        %2880 = vmatpush1.bf16.msra.mxu0 0
        %2881 = vmatprep.subr.bf16.mxu0 0
        %2882 = vmatpush1.bf16.msra.mxu0 0
        %2883 = vmatprep.mubr.bf16.mxu0 0
        %2884 = vmatmul.mubr.bf16.gmra.mrb[0].mxu0 %v2799
        %v2885 = vpop.f32.mrb[0].mxu0
        %v2886 = vadd.f32 0.0, %v2885
        %v2887 = vpop.f32.mrb[0].mxu0
        %v2888 = vpop.f32.mrb[0].mxu0
        %v2889 = vpop.f32.mrb[0].mxu0
        %2890 = vdwg.mxu0
        %v2891 = vadd.f32 %v2767, %v2845
        %v2892 = vadd.f32 %v2768, %v2847
        %v2893 = vadd.f32 %v2769, %v2886
        %s2894 = scalar_lea.vmem %s4, 12
        %v2895 = vld [vmem:[%s2894] sm:$0x3]
        %v2896 = vld [vmem:[#allocation2] sm:$0x3f]
        %v2898 = vcombine.high %v2896, %v2896
        %v2900 = vunpack.c.l.s4 1983009808
        %v2901 = vunpack.c.0.s8 %v2900
        %v2902 = vlaneseq
        %v2903 = vshrl.u32 %v2902, 7
        %v2904 = vsub.s32 %v2901, %v2903
        %v2905 = vrot.slane %v2896, %v2904
        %v2907 = vunpack.c.l.s4 1983009808
        %v2908 = vunpack.c.0.s8 %v2907
        %v2909 = vlaneseq
        %v2910 = vshrl.u32 %v2909, 7
        %v2911 = vsub.s32 %v2908, %v2910
        %v2912 = vrot.slane %v2898, %v2911
        %v2913 = vcombine.high %v2905, %v2905
        %2914 = vrot.lane.b32.xlu0 %v2905, 92
        %v2915 = vpop.permute.xlu0 %2914
        %2916 = vrot.lane.b32.xlu0 %v2913, 92
        %v2917 = vpop.permute.xlu0 %2916
        %2918 = vrot.lane.b32.xlu0 %v2912, 92
        %v2919 = vpop.permute.xlu0 %2918
        %v2920 = vsel %vm976, %v2915, %v2917
        %v2921 = vsel %vm976, %v2917, %v2919
        %v2923 = vsel %vm1449, %v2895, 0
        %v2926 = vsel %vm1453, %v2920, 0
        %v2929 = vsel %vm1453, %v2921, 0
        %v2932 = vsel %vm1453, %v2919, 0
        %2934 = vmatprep.subr.bf16.mxu0 %v2929
        %2935 = vmatpush1.bf16.msra.mxu0 %v2926
        %2936 = vmatprep.subr.bf16.mxu0 0
        %2937 = vmatpush1.bf16.msra.mxu0 0
        %2938 = vmatprep.subr.bf16.mxu0 0
        %2939 = vmatpush1.bf16.msra.mxu0 0
        %2940 = vmatprep.subr.bf16.mxu0 0
        %2941 = vmatpush1.bf16.msra.mxu0 0
        %2942 = vmatprep.subr.bf16.mxu0 0
        %2943 = vmatpush1.bf16.msra.mxu0 0
        %2944 = vmatprep.subr.bf16.mxu0 0
        %2945 = vmatpush1.bf16.msra.mxu0 0
        %2946 = vmatprep.subr.bf16.mxu0 0
        %2947 = vmatpush1.bf16.msra.mxu0 0
        %2948 = vmatprep.subr.bf16.mxu0 0
        %2949 = vmatpush1.bf16.msra.mxu0 0
        %2950 = vmatprep.subr.bf16.mxu0 0
        %2951 = vmatpush1.bf16.msra.mxu0 0
        %2952 = vmatprep.subr.bf16.mxu0 0
        %2953 = vmatpush1.bf16.msra.mxu0 0
        %2954 = vmatprep.subr.bf16.mxu0 0
        %2955 = vmatpush1.bf16.msra.mxu0 0
        %2956 = vmatprep.subr.bf16.mxu0 0
        %2957 = vmatpush1.bf16.msra.mxu0 0
        %2958 = vmatprep.subr.bf16.mxu0 0
        %2959 = vmatpush1.bf16.msra.mxu0 0
        %2960 = vmatprep.subr.bf16.mxu0 0
        %2961 = vmatpush1.bf16.msra.mxu0 0
        %2962 = vmatprep.subr.bf16.mxu0 0
        %2963 = vmatpush1.bf16.msra.mxu0 0
        %2964 = vmatprep.subr.bf16.mxu0 0
        %2965 = vmatpush1.bf16.msra.mxu0 0
        %2966 = vmatprep.mubr.bf16.mxu0 0
        %2967 = vmatmul.mubr.bf16.gmra.mrb[0].mxu0 %v2923
        %v2968 = vpop.f32.mrb[0].mxu0
        %v2969 = vadd.f32 0.0, %v2968
        %v2970 = vpop.f32.mrb[0].mxu0
        %v2971 = vadd.f32 0.0, %v2970
        %v2972 = vpop.f32.mrb[0].mxu0
        %v2973 = vpop.f32.mrb[0].mxu0
        %2974 = vdwg.mxu0
        %2975 = vmatprep.subr.bf16.mxu0 0
        %2976 = vmatpush1.bf16.msra.mxu0 %v2932
        %2977 = vmatprep.subr.bf16.mxu0 0
        %2978 = vmatpush1.bf16.msra.mxu0 0
        %2979 = vmatprep.subr.bf16.mxu0 0
        %2980 = vmatpush1.bf16.msra.mxu0 0
        %2981 = vmatprep.subr.bf16.mxu0 0
        %2982 = vmatpush1.bf16.msra.mxu0 0
        %2983 = vmatprep.subr.bf16.mxu0 0
        %2984 = vmatpush1.bf16.msra.mxu0 0
        %2985 = vmatprep.subr.bf16.mxu0 0
        %2986 = vmatpush1.bf16.msra.mxu0 0
        %2987 = vmatprep.subr.bf16.mxu0 0
        %2988 = vmatpush1.bf16.msra.mxu0 0
        %2989 = vmatprep.subr.bf16.mxu0 0
        %2990 = vmatpush1.bf16.msra.mxu0 0
        %2991 = vmatprep.subr.bf16.mxu0 0
        %2992 = vmatpush1.bf16.msra.mxu0 0
        %2993 = vmatprep.subr.bf16.mxu0 0
        %2994 = vmatpush1.bf16.msra.mxu0 0
        %2995 = vmatprep.subr.bf16.mxu0 0
        %2996 = vmatpush1.bf16.msra.mxu0 0
        %2997 = vmatprep.subr.bf16.mxu0 0
        %2998 = vmatpush1.bf16.msra.mxu0 0
        %2999 = vmatprep.subr.bf16.mxu0 0
        %3000 = vmatpush1.bf16.msra.mxu0 0
        %3001 = vmatprep.subr.bf16.mxu0 0
        %3002 = vmatpush1.bf16.msra.mxu0 0
        %3003 = vmatprep.subr.bf16.mxu0 0
        %3004 = vmatpush1.bf16.msra.mxu0 0
        %3005 = vmatprep.subr.bf16.mxu0 0
        %3006 = vmatpush1.bf16.msra.mxu0 0
        %3007 = vmatprep.mubr.bf16.mxu0 0
        %3008 = vmatmul.mubr.bf16.gmra.mrb[0].mxu0 %v2923
        %v3009 = vpop.f32.mrb[0].mxu0
        %v3010 = vadd.f32 0.0, %v3009
        %v3011 = vpop.f32.mrb[0].mxu0
        %v3012 = vpop.f32.mrb[0].mxu0
        %v3013 = vpop.f32.mrb[0].mxu0
        %3014 = vdwg.mxu0
        %v3015 = vadd.f32 %v2891, %v2969
        %v3016 = vadd.f32 %v2892, %v2971
        %v3017 = vadd.f32 %v2893, %v3010
        %s3018 = scalar_lea.vmem %s5, 12
        %v3019 = vld [vmem:[%s3018] sm:$0x3]
        %v3020 = vld [vmem:[#allocation3] sm:$0x3f]
        %v3022 = vcombine.high %v3020, %v3020
        %v3024 = vunpack.c.l.s4 1983009808
        %v3025 = vunpack.c.0.s8 %v3024
        %v3026 = vlaneseq
        %v3027 = vshrl.u32 %v3026, 7
        %v3028 = vsub.s32 %v3025, %v3027
        %v3029 = vrot.slane %v3020, %v3028
        %v3031 = vunpack.c.l.s4 1983009808
        %v3032 = vunpack.c.0.s8 %v3031
        %v3033 = vlaneseq
        %v3034 = vshrl.u32 %v3033, 7
        %v3035 = vsub.s32 %v3032, %v3034
        %v3036 = vrot.slane %v3022, %v3035
        %v3037 = vcombine.high %v3029, %v3029
        %3038 = vrot.lane.b32.xlu0 %v3029, 92
        %v3039 = vpop.permute.xlu0 %3038
        %3040 = vrot.lane.b32.xlu0 %v3037, 92
        %v3041 = vpop.permute.xlu0 %3040
        %3042 = vrot.lane.b32.xlu0 %v3036, 92
        %v3043 = vpop.permute.xlu0 %3042
        %v3044 = vsel %vm976, %v3039, %v3041
        %v3045 = vsel %vm976, %v3041, %v3043
        %v3047 = vsel %vm1449, %v3019, 0
        %v3050 = vsel %vm1453, %v3044, 0
        %v3053 = vsel %vm1453, %v3045, 0
        %v3056 = vsel %vm1453, %v3043, 0
        %3058 = vmatprep.subr.bf16.mxu0 %v3053
        %3059 = vmatpush1.bf16.msra.mxu0 %v3050
        %3060 = vmatprep.subr.bf16.mxu0 0
        %3061 = vmatpush1.bf16.msra.mxu0 0
        %3062 = vmatprep.subr.bf16.mxu0 0
        %3063 = vmatpush1.bf16.msra.mxu0 0
        %3064 = vmatprep.subr.bf16.mxu0 0
        %3065 = vmatpush1.bf16.msra.mxu0 0
        %3066 = vmatprep.subr.bf16.mxu0 0
        %3067 = vmatpush1.bf16.msra.mxu0 0
        %3068 = vmatprep.subr.bf16.mxu0 0
        %3069 = vmatpush1.bf16.msra.mxu0 0
        %3070 = vmatprep.subr.bf16.mxu0 0
        %3071 = vmatpush1.bf16.msra.mxu0 0
        %3072 = vmatprep.subr.bf16.mxu0 0
        %3073 = vmatpush1.bf16.msra.mxu0 0
        %3074 = vmatprep.subr.bf16.mxu0 0
        %3075 = vmatpush1.bf16.msra.mxu0 0
        %3076 = vmatprep.subr.bf16.mxu0 0
        %3077 = vmatpush1.bf16.msra.mxu0 0
        %3078 = vmatprep.subr.bf16.mxu0 0
        %3079 = vmatpush1.bf16.msra.mxu0 0
        %3080 = vmatprep.subr.bf16.mxu0 0
        %3081 = vmatpush1.bf16.msra.mxu0 0
        %3082 = vmatprep.subr.bf16.mxu0 0
        %3083 = vmatpush1.bf16.msra.mxu0 0
        %3084 = vmatprep.subr.bf16.mxu0 0
        %3085 = vmatpush1.bf16.msra.mxu0 0
        %3086 = vmatprep.subr.bf16.mxu0 0
        %3087 = vmatpush1.bf16.msra.mxu0 0
        %3088 = vmatprep.subr.bf16.mxu0 0
        %3089 = vmatpush1.bf16.msra.mxu0 0
        %3090 = vmatprep.mubr.bf16.mxu0 0
        %3091 = vmatmul.mubr.bf16.gmra.mrb[0].mxu0 %v3047
        %v3092 = vpop.f32.mrb[0].mxu0
        %v3093 = vadd.f32 0.0, %v3092
        %v3094 = vpop.f32.mrb[0].mxu0
        %v3095 = vadd.f32 0.0, %v3094
        %v3096 = vpop.f32.mrb[0].mxu0
        %v3097 = vpop.f32.mrb[0].mxu0
        %3098 = vdwg.mxu0
        %3099 = vmatprep.subr.bf16.mxu0 0
        %3100 = vmatpush1.bf16.msra.mxu0 %v3056
        %3101 = vmatprep.subr.bf16.mxu0 0
        %3102 = vmatpush1.bf16.msra.mxu0 0
        %3103 = vmatprep.subr.bf16.mxu0 0
        %3104 = vmatpush1.bf16.msra.mxu0 0
        %3105 = vmatprep.subr.bf16.mxu0 0
        %3106 = vmatpush1.bf16.msra.mxu0 0
        %3107 = vmatprep.subr.bf16.mxu0 0
        %3108 = vmatpush1.bf16.msra.mxu0 0
        %3109 = vmatprep.subr.bf16.mxu0 0
        %3110 = vmatpush1.bf16.msra.mxu0 0
        %3111 = vmatprep.subr.bf16.mxu0 0
        %3112 = vmatpush1.bf16.msra.mxu0 0
        %3113 = vmatprep.subr.bf16.mxu0 0
        %3114 = vmatpush1.bf16.msra.mxu0 0
        %3115 = vmatprep.subr.bf16.mxu0 0
        %3116 = vmatpush1.bf16.msra.mxu0 0
        %3117 = vmatprep.subr.bf16.mxu0 0
        %3118 = vmatpush1.bf16.msra.mxu0 0
        %3119 = vmatprep.subr.bf16.mxu0 0
        %3120 = vmatpush1.bf16.msra.mxu0 0
        %3121 = vmatprep.subr.bf16.mxu0 0
        %3122 = vmatpush1.bf16.msra.mxu0 0
        %3123 = vmatprep.subr.bf16.mxu0 0
        %3124 = vmatpush1.bf16.msra.mxu0 0
        %3125 = vmatprep.subr.bf16.mxu0 0
        %3126 = vmatpush1.bf16.msra.mxu0 0
        %3127 = vmatprep.subr.bf16.mxu0 0
        %3128 = vmatpush1.bf16.msra.mxu0 0
        %3129 = vmatprep.subr.bf16.mxu0 0
        %3130 = vmatpush1.bf16.msra.mxu0 0
        %3131 = vmatprep.mubr.bf16.mxu0 0
        %3132 = vmatmul.mubr.bf16.gmra.mrb[0].mxu0 %v3047
        %v3133 = vpop.f32.mrb[0].mxu0
        %v3134 = vadd.f32 0.0, %v3133
        %v3135 = vpop.f32.mrb[0].mxu0
        %v3136 = vpop.f32.mrb[0].mxu0
        %v3137 = vpop.f32.mrb[0].mxu0
        %3138 = vdwg.mxu0
        %v3139 = vadd.f32 %v3015, %v3093
        %v3140 = vadd.f32 %v3016, %v3095
        %v3141 = vadd.f32 %v3017, %v3134
        %s3142 = scalar_lea.vmem %s4, 14
        %v3143 = vld [vmem:[%s3142] sm:$0x3]
        %v3144 = vld [vmem:[#allocation2] sm:$0x3f]
        %v3146 = vcombine.high %v3144, %v3144
        %v3148 = vunpack.c.l.s4 1983009808
        %v3149 = vunpack.c.0.s8 %v3148
        %v3150 = vlaneseq
        %v3151 = vshrl.u32 %v3150, 7
        %v3152 = vsub.s32 %v3149, %v3151
        %v3153 = vrot.slane %v3144, %v3152
        %v3155 = vunpack.c.l.s4 1983009808
        %v3156 = vunpack.c.0.s8 %v3155
        %v3157 = vlaneseq
        %v3158 = vshrl.u32 %v3157, 7
        %v3159 = vsub.s32 %v3156, %v3158
        %v3160 = vrot.slane %v3146, %v3159
        %v3161 = vcombine.high %v3153, %v3153
        %3162 = vrot.lane.b32.xlu0 %v3153, 91
        %v3163 = vpop.permute.xlu0 %3162
        %3164 = vrot.lane.b32.xlu0 %v3161, 91
        %v3165 = vpop.permute.xlu0 %3164
        %3166 = vrot.lane.b32.xlu0 %v3160, 91
        %v3167 = vpop.permute.xlu0 %3166
        %v3168 = vsel %vm1083, %v3163, %v3165
        %v3169 = vsel %vm1083, %v3165, %v3167
        %v3171 = vsel %vm1449, %v3143, 0
        %v3174 = vsel %vm1453, %v3168, 0
        %v3177 = vsel %vm1453, %v3169, 0
        %v3180 = vsel %vm1453, %v3167, 0
        %3182 = vmatprep.subr.bf16.mxu0 %v3177
        %3183 = vmatpush1.bf16.msra.mxu0 %v3174
        %3184 = vmatprep.subr.bf16.mxu0 0
        %3185 = vmatpush1.bf16.msra.mxu0 0
        %3186 = vmatprep.subr.bf16.mxu0 0
        %3187 = vmatpush1.bf16.msra.mxu0 0
        %3188 = vmatprep.subr.bf16.mxu0 0
        %3189 = vmatpush1.bf16.msra.mxu0 0
        %3190 = vmatprep.subr.bf16.mxu0 0
        %3191 = vmatpush1.bf16.msra.mxu0 0
        %3192 = vmatprep.subr.bf16.mxu0 0
        %3193 = vmatpush1.bf16.msra.mxu0 0
        %3194 = vmatprep.subr.bf16.mxu0 0
        %3195 = vmatpush1.bf16.msra.mxu0 0
        %3196 = vmatprep.subr.bf16.mxu0 0
        %3197 = vmatpush1.bf16.msra.mxu0 0
        %3198 = vmatprep.subr.bf16.mxu0 0
        %3199 = vmatpush1.bf16.msra.mxu0 0
        %3200 = vmatprep.subr.bf16.mxu0 0
        %3201 = vmatpush1.bf16.msra.mxu0 0
        %3202 = vmatprep.subr.bf16.mxu0 0
        %3203 = vmatpush1.bf16.msra.mxu0 0
        %3204 = vmatprep.subr.bf16.mxu0 0
        %3205 = vmatpush1.bf16.msra.mxu0 0
        %3206 = vmatprep.subr.bf16.mxu0 0
        %3207 = vmatpush1.bf16.msra.mxu0 0
        %3208 = vmatprep.subr.bf16.mxu0 0
        %3209 = vmatpush1.bf16.msra.mxu0 0
        %3210 = vmatprep.subr.bf16.mxu0 0
        %3211 = vmatpush1.bf16.msra.mxu0 0
        %3212 = vmatprep.subr.bf16.mxu0 0
        %3213 = vmatpush1.bf16.msra.mxu0 0
        %3214 = vmatprep.mubr.bf16.mxu0 0
        %3215 = vmatmul.mubr.bf16.gmra.mrb[0].mxu0 %v3171
        %v3216 = vpop.f32.mrb[0].mxu0
        %v3217 = vadd.f32 0.0, %v3216
        %v3218 = vpop.f32.mrb[0].mxu0
        %v3219 = vadd.f32 0.0, %v3218
        %v3220 = vpop.f32.mrb[0].mxu0
        %v3221 = vpop.f32.mrb[0].mxu0
        %3222 = vdwg.mxu0
        %3223 = vmatprep.subr.bf16.mxu0 0
        %3224 = vmatpush1.bf16.msra.mxu0 %v3180
        %3225 = vmatprep.subr.bf16.mxu0 0
        %3226 = vmatpush1.bf16.msra.mxu0 0
        %3227 = vmatprep.subr.bf16.mxu0 0
        %3228 = vmatpush1.bf16.msra.mxu0 0
        %3229 = vmatprep.subr.bf16.mxu0 0
        %3230 = vmatpush1.bf16.msra.mxu0 0
        %3231 = vmatprep.subr.bf16.mxu0 0
        %3232 = vmatpush1.bf16.msra.mxu0 0
        %3233 = vmatprep.subr.bf16.mxu0 0
        %3234 = vmatpush1.bf16.msra.mxu0 0
        %3235 = vmatprep.subr.bf16.mxu0 0
        %3236 = vmatpush1.bf16.msra.mxu0 0
        %3237 = vmatprep.subr.bf16.mxu0 0
        %3238 = vmatpush1.bf16.msra.mxu0 0
        %3239 = vmatprep.subr.bf16.mxu0 0
        %3240 = vmatpush1.bf16.msra.mxu0 0
        %3241 = vmatprep.subr.bf16.mxu0 0
        %3242 = vmatpush1.bf16.msra.mxu0 0
        %3243 = vmatprep.subr.bf16.mxu0 0
        %3244 = vmatpush1.bf16.msra.mxu0 0
        %3245 = vmatprep.subr.bf16.mxu0 0
        %3246 = vmatpush1.bf16.msra.mxu0 0
        %3247 = vmatprep.subr.bf16.mxu0 0
        %3248 = vmatpush1.bf16.msra.mxu0 0
        %3249 = vmatprep.subr.bf16.mxu0 0
        %3250 = vmatpush1.bf16.msra.mxu0 0
        %3251 = vmatprep.subr.bf16.mxu0 0
        %3252 = vmatpush1.bf16.msra.mxu0 0
        %3253 = vmatprep.subr.bf16.mxu0 0
        %3254 = vmatpush1.bf16.msra.mxu0 0
        %3255 = vmatprep.mubr.bf16.mxu0 0
        %3256 = vmatmul.mubr.bf16.gmra.mrb[0].mxu0 %v3171
        %v3257 = vpop.f32.mrb[0].mxu0
        %v3258 = vadd.f32 0.0, %v3257
        %v3259 = vpop.f32.mrb[0].mxu0
        %v3260 = vpop.f32.mrb[0].mxu0
        %v3261 = vpop.f32.mrb[0].mxu0
        %3262 = vdwg.mxu0
        %v3263 = vadd.f32 %v3139, %v3217
        %v3264 = vadd.f32 %v3140, %v3219
        %v3265 = vadd.f32 %v3141, %v3258
        %s3266 = scalar_lea.vmem %s5, 14
        %v3267 = vld [vmem:[%s3266] sm:$0x3]
        %v3268 = vld [vmem:[#allocation3] sm:$0x3f]
        %v3270 = vcombine.high %v3268, %v3268
        %v3272 = vunpack.c.l.s4 1983009808
        %v3273 = vunpack.c.0.s8 %v3272
        %v3274 = vlaneseq
        %v3275 = vshrl.u32 %v3274, 7
        %v3276 = vsub.s32 %v3273, %v3275
        %v3277 = vrot.slane %v3268, %v3276
        %v3279 = vunpack.c.l.s4 1983009808
        %v3280 = vunpack.c.0.s8 %v3279
        %v3281 = vlaneseq
        %v3282 = vshrl.u32 %v3281, 7
        %v3283 = vsub.s32 %v3280, %v3282
        %v3284 = vrot.slane %v3270, %v3283
        %v3285 = vcombine.high %v3277, %v3277
        %3286 = vrot.lane.b32.xlu0 %v3277, 91
        %v3287 = vpop.permute.xlu0 %3286
        %3288 = vrot.lane.b32.xlu0 %v3285, 91
        %v3289 = vpop.permute.xlu0 %3288
        %3290 = vrot.lane.b32.xlu0 %v3284, 91
        %v3291 = vpop.permute.xlu0 %3290
        %v3292 = vsel %vm1083, %v3287, %v3289
        %v3293 = vsel %vm1083, %v3289, %v3291
        %v3295 = vsel %vm1449, %v3267, 0
        %v3298 = vsel %vm1453, %v3292, 0
        %v3301 = vsel %vm1453, %v3293, 0
        %v3304 = vsel %vm1453, %v3291, 0
        %3306 = vmatprep.subr.bf16.mxu0 %v3301
        %3307 = vmatpush1.bf16.msra.mxu0 %v3298
        %3308 = vmatprep.subr.bf16.mxu0 0
        %3309 = vmatpush1.bf16.msra.mxu0 0
        %3310 = vmatprep.subr.bf16.mxu0 0
        %3311 = vmatpush1.bf16.msra.mxu0 0
        %3312 = vmatprep.subr.bf16.mxu0 0
        %3313 = vmatpush1.bf16.msra.mxu0 0
        %3314 = vmatprep.subr.bf16.mxu0 0
        %3315 = vmatpush1.bf16.msra.mxu0 0
        %3316 = vmatprep.subr.bf16.mxu0 0
        %3317 = vmatpush1.bf16.msra.mxu0 0
        %3318 = vmatprep.subr.bf16.mxu0 0
        %3319 = vmatpush1.bf16.msra.mxu0 0
        %3320 = vmatprep.subr.bf16.mxu0 0
        %3321 = vmatpush1.bf16.msra.mxu0 0
        %3322 = vmatprep.subr.bf16.mxu0 0
        %3323 = vmatpush1.bf16.msra.mxu0 0
        %3324 = vmatprep.subr.bf16.mxu0 0
        %3325 = vmatpush1.bf16.msra.mxu0 0
        %3326 = vmatprep.subr.bf16.mxu0 0
        %3327 = vmatpush1.bf16.msra.mxu0 0
        %3328 = vmatprep.subr.bf16.mxu0 0
        %3329 = vmatpush1.bf16.msra.mxu0 0
        %3330 = vmatprep.subr.bf16.mxu0 0
        %3331 = vmatpush1.bf16.msra.mxu0 0
        %3332 = vmatprep.subr.bf16.mxu0 0
        %3333 = vmatpush1.bf16.msra.mxu0 0
        %3334 = vmatprep.subr.bf16.mxu0 0
        %3335 = vmatpush1.bf16.msra.mxu0 0
        %3336 = vmatprep.subr.bf16.mxu0 0
        %3337 = vmatpush1.bf16.msra.mxu0 0
        %3338 = vmatprep.mubr.bf16.mxu0 0
        %3339 = vmatmul.mubr.bf16.gmra.mrb[0].mxu0 %v3295
        %v3340 = vpop.f32.mrb[0].mxu0
        %v3341 = vadd.f32 0.0, %v3340
        %v3342 = vpop.f32.mrb[0].mxu0
        %v3343 = vadd.f32 0.0, %v3342
        %v3344 = vpop.f32.mrb[0].mxu0
        %v3345 = vpop.f32.mrb[0].mxu0
        %3346 = vdwg.mxu0
        %3347 = vmatprep.subr.bf16.mxu0 0
        %3348 = vmatpush1.bf16.msra.mxu0 %v3304
        %3349 = vmatprep.subr.bf16.mxu0 0
        %3350 = vmatpush1.bf16.msra.mxu0 0
        %3351 = vmatprep.subr.bf16.mxu0 0
        %3352 = vmatpush1.bf16.msra.mxu0 0
        %3353 = vmatprep.subr.bf16.mxu0 0
        %3354 = vmatpush1.bf16.msra.mxu0 0
        %3355 = vmatprep.subr.bf16.mxu0 0
        %3356 = vmatpush1.bf16.msra.mxu0 0
        %3357 = vmatprep.subr.bf16.mxu0 0
        %3358 = vmatpush1.bf16.msra.mxu0 0
        %3359 = vmatprep.subr.bf16.mxu0 0
        %3360 = vmatpush1.bf16.msra.mxu0 0
        %3361 = vmatprep.subr.bf16.mxu0 0
        %3362 = vmatpush1.bf16.msra.mxu0 0
        %3363 = vmatprep.subr.bf16.mxu0 0
        %3364 = vmatpush1.bf16.msra.mxu0 0
        %3365 = vmatprep.subr.bf16.mxu0 0
        %3366 = vmatpush1.bf16.msra.mxu0 0
        %3367 = vmatprep.subr.bf16.mxu0 0
        %3368 = vmatpush1.bf16.msra.mxu0 0
        %3369 = vmatprep.subr.bf16.mxu0 0
        %3370 = vmatpush1.bf16.msra.mxu0 0
        %3371 = vmatprep.subr.bf16.mxu0 0
        %3372 = vmatpush1.bf16.msra.mxu0 0
        %3373 = vmatprep.subr.bf16.mxu0 0
        %3374 = vmatpush1.bf16.msra.mxu0 0
        %3375 = vmatprep.subr.bf16.mxu0 0
        %3376 = vmatpush1.bf16.msra.mxu0 0
        %3377 = vmatprep.subr.bf16.mxu0 0
        %3378 = vmatpush1.bf16.msra.mxu0 0
        %3379 = vmatprep.mubr.bf16.mxu0 0
        %3380 = vmatmul.mubr.bf16.gmra.mrb[0].mxu0 %v3295
        %v3381 = vpop.f32.mrb[0].mxu0
        %v3382 = vadd.f32 0.0, %v3381
        %v3383 = vpop.f32.mrb[0].mxu0
        %v3384 = vpop.f32.mrb[0].mxu0
        %v3385 = vpop.f32.mrb[0].mxu0
        %3386 = vdwg.mxu0
        %v3387 = vadd.f32 %v3263, %v3341
        %v3388 = vadd.f32 %v3264, %v3343
        %v3389 = vadd.f32 %v3265, %v3382
        %s3390 = scalar_lea.vmem %s4, 16
        %v3391 = vld [vmem:[%s3390] sm:$0x3]
        %v3392 = vld [vmem:[#allocation2] sm:$0x3f]
        %v3394 = vcombine.high %v3392, %v3392
        %v3396 = vunpack.c.l.s4 1983009808
        %v3397 = vunpack.c.0.s8 %v3396
        %v3398 = vlaneseq
        %v3399 = vshrl.u32 %v3398, 7
        %v3400 = vsub.s32 %v3397, %v3399
        %v3401 = vrot.slane %v3392, %v3400
        %v3403 = vunpack.c.l.s4 1983009808
        %v3404 = vunpack.c.0.s8 %v3403
        %v3405 = vlaneseq
        %v3406 = vshrl.u32 %v3405, 7
        %v3407 = vsub.s32 %v3404, %v3406
        %v3408 = vrot.slane %v3394, %v3407
        %v3409 = vcombine.high %v3401, %v3401
        %3410 = vrot.lane.b32.xlu0 %v3401, 90
        %v3411 = vpop.permute.xlu0 %3410
        %3412 = vrot.lane.b32.xlu0 %v3409, 90
        %v3413 = vpop.permute.xlu0 %3412
        %3414 = vrot.lane.b32.xlu0 %v3408, 90
        %v3415 = vpop.permute.xlu0 %3414
        %v3416 = vsel %vm1190, %v3411, %v3413
        %v3417 = vsel %vm1190, %v3413, %v3415
        %v3419 = vsel %vm1449, %v3391, 0
        %v3422 = vsel %vm1453, %v3416, 0
        %v3425 = vsel %vm1453, %v3417, 0
        %v3428 = vsel %vm1453, %v3415, 0
        %3430 = vmatprep.subr.bf16.mxu0 %v3425
        %3431 = vmatpush1.bf16.msra.mxu0 %v3422
        %3432 = vmatprep.subr.bf16.mxu0 0
        %3433 = vmatpush1.bf16.msra.mxu0 0
        %3434 = vmatprep.subr.bf16.mxu0 0
        %3435 = vmatpush1.bf16.msra.mxu0 0
        %3436 = vmatprep.subr.bf16.mxu0 0
        %3437 = vmatpush1.bf16.msra.mxu0 0
        %3438 = vmatprep.subr.bf16.mxu0 0
        %3439 = vmatpush1.bf16.msra.mxu0 0
        %3440 = vmatprep.subr.bf16.mxu0 0
        %3441 = vmatpush1.bf16.msra.mxu0 0
        %3442 = vmatprep.subr.bf16.mxu0 0
        %3443 = vmatpush1.bf16.msra.mxu0 0
        %3444 = vmatprep.subr.bf16.mxu0 0
        %3445 = vmatpush1.bf16.msra.mxu0 0
        %3446 = vmatprep.subr.bf16.mxu0 0
        %3447 = vmatpush1.bf16.msra.mxu0 0
        %3448 = vmatprep.subr.bf16.mxu0 0
        %3449 = vmatpush1.bf16.msra.mxu0 0
        %3450 = vmatprep.subr.bf16.mxu0 0
        %3451 = vmatpush1.bf16.msra.mxu0 0
        %3452 = vmatprep.subr.bf16.mxu0 0
        %3453 = vmatpush1.bf16.msra.mxu0 0
        %3454 = vmatprep.subr.bf16.mxu0 0
        %3455 = vmatpush1.bf16.msra.mxu0 0
        %3456 = vmatprep.subr.bf16.mxu0 0
        %3457 = vmatpush1.bf16.msra.mxu0 0
        %3458 = vmatprep.subr.bf16.mxu0 0
        %3459 = vmatpush1.bf16.msra.mxu0 0
        %3460 = vmatprep.subr.bf16.mxu0 0
        %3461 = vmatpush1.bf16.msra.mxu0 0
        %3462 = vmatprep.mubr.bf16.mxu0 0
        %3463 = vmatmul.mubr.bf16.gmra.mrb[0].mxu0 %v3419
        %v3464 = vpop.f32.mrb[0].mxu0
        %v3465 = vadd.f32 0.0, %v3464
        %v3466 = vpop.f32.mrb[0].mxu0
        %v3467 = vadd.f32 0.0, %v3466
        %v3468 = vpop.f32.mrb[0].mxu0
        %v3469 = vpop.f32.mrb[0].mxu0
        %3470 = vdwg.mxu0
        %3471 = vmatprep.subr.bf16.mxu0 0
        %3472 = vmatpush1.bf16.msra.mxu0 %v3428
        %3473 = vmatprep.subr.bf16.mxu0 0
        %3474 = vmatpush1.bf16.msra.mxu0 0
        %3475 = vmatprep.subr.bf16.mxu0 0
        %3476 = vmatpush1.bf16.msra.mxu0 0
        %3477 = vmatprep.subr.bf16.mxu0 0
        %3478 = vmatpush1.bf16.msra.mxu0 0
        %3479 = vmatprep.subr.bf16.mxu0 0
        %3480 = vmatpush1.bf16.msra.mxu0 0
        %3481 = vmatprep.subr.bf16.mxu0 0
        %3482 = vmatpush1.bf16.msra.mxu0 0
        %3483 = vmatprep.subr.bf16.mxu0 0
        %3484 = vmatpush1.bf16.msra.mxu0 0
        %3485 = vmatprep.subr.bf16.mxu0 0
        %3486 = vmatpush1.bf16.msra.mxu0 0
        %3487 = vmatprep.subr.bf16.mxu0 0
        %3488 = vmatpush1.bf16.msra.mxu0 0
        %3489 = vmatprep.subr.bf16.mxu0 0
        %3490 = vmatpush1.bf16.msra.mxu0 0
        %3491 = vmatprep.subr.bf16.mxu0 0
        %3492 = vmatpush1.bf16.msra.mxu0 0
        %3493 = vmatprep.subr.bf16.mxu0 0
        %3494 = vmatpush1.bf16.msra.mxu0 0
        %3495 = vmatprep.subr.bf16.mxu0 0
        %3496 = vmatpush1.bf16.msra.mxu0 0
        %3497 = vmatprep.subr.bf16.mxu0 0
        %3498 = vmatpush1.bf16.msra.mxu0 0
        %3499 = vmatprep.subr.bf16.mxu0 0
        %3500 = vmatpush1.bf16.msra.mxu0 0
        %3501 = vmatprep.subr.bf16.mxu0 0
        %3502 = vmatpush1.bf16.msra.mxu0 0
        %3503 = vmatprep.mubr.bf16.mxu0 0
        %3504 = vmatmul.mubr.bf16.gmra.mrb[0].mxu0 %v3419
        %v3505 = vpop.f32.mrb[0].mxu0
        %v3506 = vadd.f32 0.0, %v3505
        %v3507 = vpop.f32.mrb[0].mxu0
        %v3508 = vpop.f32.mrb[0].mxu0
        %v3509 = vpop.f32.mrb[0].mxu0
        %3510 = vdwg.mxu0
        %v3511 = vadd.f32 %v3387, %v3465
        %v3512 = vadd.f32 %v3388, %v3467
        %v3513 = vadd.f32 %v3389, %v3506
        %s3514 = scalar_lea.vmem %s5, 16
        %v3515 = vld [vmem:[%s3514] sm:$0x3]
        %v3516 = vld [vmem:[#allocation3] sm:$0x3f]
        %v3518 = vcombine.high %v3516, %v3516
        %v3520 = vunpack.c.l.s4 1983009808
        %v3521 = vunpack.c.0.s8 %v3520
        %v3522 = vlaneseq
        %v3523 = vshrl.u32 %v3522, 7
        %v3524 = vsub.s32 %v3521, %v3523
        %v3525 = vrot.slane %v3516, %v3524
        %v3527 = vunpack.c.l.s4 1983009808
        %v3528 = vunpack.c.0.s8 %v3527
        %v3529 = vlaneseq
        %v3530 = vshrl.u32 %v3529, 7
        %v3531 = vsub.s32 %v3528, %v3530
        %v3532 = vrot.slane %v3518, %v3531
        %v3533 = vcombine.high %v3525, %v3525
        %3534 = vrot.lane.b32.xlu0 %v3525, 90
        %v3535 = vpop.permute.xlu0 %3534
        %3536 = vrot.lane.b32.xlu0 %v3533, 90
        %v3537 = vpop.permute.xlu0 %3536
        %3538 = vrot.lane.b32.xlu0 %v3532, 90
        %v3539 = vpop.permute.xlu0 %3538
        %v3540 = vsel %vm1190, %v3535, %v3537
        %v3541 = vsel %vm1190, %v3537, %v3539
        %v3543 = vsel %vm1449, %v3515, 0
        %v3546 = vsel %vm1453, %v3540, 0
        %v3549 = vsel %vm1453, %v3541, 0
        %v3552 = vsel %vm1453, %v3539, 0
        %3554 = vmatprep.subr.bf16.mxu0 %v3549
        %3555 = vmatpush1.bf16.msra.mxu0 %v3546
        %3556 = vmatprep.subr.bf16.mxu0 0
        %3557 = vmatpush1.bf16.msra.mxu0 0
        %3558 = vmatprep.subr.bf16.mxu0 0
        %3559 = vmatpush1.bf16.msra.mxu0 0
        %3560 = vmatprep.subr.bf16.mxu0 0
        %3561 = vmatpush1.bf16.msra.mxu0 0
        %3562 = vmatprep.subr.bf16.mxu0 0
        %3563 = vmatpush1.bf16.msra.mxu0 0
        %3564 = vmatprep.subr.bf16.mxu0 0
        %3565 = vmatpush1.bf16.msra.mxu0 0
        %3566 = vmatprep.subr.bf16.mxu0 0
        %3567 = vmatpush1.bf16.msra.mxu0 0
        %3568 = vmatprep.subr.bf16.mxu0 0
        %3569 = vmatpush1.bf16.msra.mxu0 0
        %3570 = vmatprep.subr.bf16.mxu0 0
        %3571 = vmatpush1.bf16.msra.mxu0 0
        %3572 = vmatprep.subr.bf16.mxu0 0
        %3573 = vmatpush1.bf16.msra.mxu0 0
        %3574 = vmatprep.subr.bf16.mxu0 0
        %3575 = vmatpush1.bf16.msra.mxu0 0
        %3576 = vmatprep.subr.bf16.mxu0 0
        %3577 = vmatpush1.bf16.msra.mxu0 0
        %3578 = vmatprep.subr.bf16.mxu0 0
        %3579 = vmatpush1.bf16.msra.mxu0 0
        %3580 = vmatprep.subr.bf16.mxu0 0
        %3581 = vmatpush1.bf16.msra.mxu0 0
        %3582 = vmatprep.subr.bf16.mxu0 0
        %3583 = vmatpush1.bf16.msra.mxu0 0
        %3584 = vmatprep.subr.bf16.mxu0 0
        %3585 = vmatpush1.bf16.msra.mxu0 0
        %3586 = vmatprep.mubr.bf16.mxu0 0
        %3587 = vmatmul.mubr.bf16.gmra.mrb[0].mxu0 %v3543
        %v3588 = vpop.f32.mrb[0].mxu0
        %v3589 = vadd.f32 0.0, %v3588
        %v3590 = vpop.f32.mrb[0].mxu0
        %v3591 = vadd.f32 0.0, %v3590
        %v3592 = vpop.f32.mrb[0].mxu0
        %v3593 = vpop.f32.mrb[0].mxu0
        %3594 = vdwg.mxu0
        %3595 = vmatprep.subr.bf16.mxu0 0
        %3596 = vmatpush1.bf16.msra.mxu0 %v3552
        %3597 = vmatprep.subr.bf16.mxu0 0
        %3598 = vmatpush1.bf16.msra.mxu0 0
        %3599 = vmatprep.subr.bf16.mxu0 0
        %3600 = vmatpush1.bf16.msra.mxu0 0
        %3601 = vmatprep.subr.bf16.mxu0 0
        %3602 = vmatpush1.bf16.msra.mxu0 0
        %3603 = vmatprep.subr.bf16.mxu0 0
        %3604 = vmatpush1.bf16.msra.mxu0 0
        %3605 = vmatprep.subr.bf16.mxu0 0
        %3606 = vmatpush1.bf16.msra.mxu0 0
        %3607 = vmatprep.subr.bf16.mxu0 0
        %3608 = vmatpush1.bf16.msra.mxu0 0
        %3609 = vmatprep.subr.bf16.mxu0 0
        %3610 = vmatpush1.bf16.msra.mxu0 0
        %3611 = vmatprep.subr.bf16.mxu0 0
        %3612 = vmatpush1.bf16.msra.mxu0 0
        %3613 = vmatprep.subr.bf16.mxu0 0
        %3614 = vmatpush1.bf16.msra.mxu0 0
        %3615 = vmatprep.subr.bf16.mxu0 0
        %3616 = vmatpush1.bf16.msra.mxu0 0
        %3617 = vmatprep.subr.bf16.mxu0 0
        %3618 = vmatpush1.bf16.msra.mxu0 0
        %3619 = vmatprep.subr.bf16.mxu0 0
        %3620 = vmatpush1.bf16.msra.mxu0 0
        %3621 = vmatprep.subr.bf16.mxu0 0
        %3622 = vmatpush1.bf16.msra.mxu0 0
        %3623 = vmatprep.subr.bf16.mxu0 0
        %3624 = vmatpush1.bf16.msra.mxu0 0
        %3625 = vmatprep.subr.bf16.mxu0 0
        %3626 = vmatpush1.bf16.msra.mxu0 0
        %3627 = vmatprep.mubr.bf16.mxu0 0
        %3628 = vmatmul.mubr.bf16.gmra.mrb[0].mxu0 %v3543
        %v3629 = vpop.f32.mrb[0].mxu0
        %v3630 = vadd.f32 0.0, %v3629
        %v3631 = vpop.f32.mrb[0].mxu0
        %v3632 = vpop.f32.mrb[0].mxu0
        %v3633 = vpop.f32.mrb[0].mxu0
        %3634 = vdwg.mxu0
        %v3635 = vadd.f32 %v3511, %v3589
        %v3636 = vadd.f32 %v3512, %v3591
        %v3637 = vadd.f32 %v3513, %v3630
        %v3638 = vld [vmem:[%s6] sm:$0xf]
        %3640 = vset.pattern.permute.xlu0 0
        %3641 = vperm.xlu0 %3640, %v3638
        %v3642 = vpop.permute.xlu0 %3641
        %v3644 = vadd.f32 %v3635, %v3642
        %v3645 = vadd.f32 %v3636, %v3642
        %v3646 = vadd.f32 %v3637, %v3642
        %v3647 = vmul.f32 %v3644, 0.5
        %v3648 = vmul.f32 %v3645, 0.5
        %v3649 = vmul.f32 %v3646, 0.5
        %v3650 = vmul.f32 %v3644, %v3644
        %v3651 = vmul.f32 %v3645, %v3645
        %v3652 = vmul.f32 %v3646, %v3646
        %v3653 = vmul.f32 %v3650, %v3644
        %v3654 = vmul.f32 %v3651, %v3645
        %v3655 = vmul.f32 %v3652, %v3646
        %v3656 = vmul.f32 %v3653, 0.044715
        %v3657 = vmul.f32 %v3654, 0.044715
        %v3658 = vmul.f32 %v3655, 0.044715
        %v3659 = vadd.f32 %v3644, %v3656
        %v3660 = vadd.f32 %v3645, %v3657
        %v3661 = vadd.f32 %v3646, %v3658
        %v3662 = vmul.f32 %v3659, 0.7978846
        %v3663 = vmul.f32 %v3660, 0.7978846
        %v3664 = vmul.f32 %v3661, 0.7978846
        %v3665 = vtanh.pop %v3662
        %v3666 = vtanh.pop %v3663
        %v3667 = vtanh.pop %v3664
        %v3668 = vadd.f32 %v3665, 1.0
        %v3669 = vadd.f32 %v3666, 1.0
        %v3670 = vadd.f32 %v3667, 1.0
        %v3671 = vmul.f32 %v3647, %v3668
        %v3672 = vmul.f32 %v3648, %v3669
        %v3673 = vmul.f32 %v3649, %v3670
        %3674 = vst [vmem:[%s315] sm:$0xff] 0.0
        %3675 = vst [vmem:[%s315 + $0x8] sm:$0xf] 0.0
        %v3679 = vcombine.low %v3671, %v3672
        %3680 = vrot.lane.b32.xlu0 %v3679, 19
        %v3681 = vpop.permute.xlu0 %3680
        %3682 = vrot.lane.b32.xlu0 %v3673, 19
        %v3683 = vpop.permute.xlu0 %3682
        %v3684 = vrot.slane %v3681, 4
        %vm3685 = vcmask 154624
        %v3686 = vsel %vm3685, %v3684, %v3681
        %v3687 = vsel %vm3685, %v3684, %v3683
        %vm3690 = vcmask 1043608
        %vm3691 = vcmask 1047556
        %vm3692 = vmor %vm3691, %vm3690
        %3693 = vst.msk [vmem:[%s315] sm:$0xff] %vm3692, %v3686
        %vm3694 = vcmask 707584
        %3695 = vst.msk [vmem:[%s315 + $0x8] sm:$0xf] %vm3694, %v3687
        %s3696 = sand.u32 %s208, 1
        %s3697 = scalar_lea.sflag [#allocation5], %s3696
        %s3698 = sand.u32 %s208, 1
        %s3699 = smul.addr %s3698, 12
        %s3700 = scalar_lea.vmem [#allocation4], %s3699
        // Predicated region
        $region53: #{tpu_custom_call.1} parent=51 // pred_check
          %p3701 = pneg %p218
        $region54: #{tpu_custom_call.1} parent=51 // pred_check_branch
          %3703 = sbr.rel (%p3701) target = $region56
        $region55: #{tpu_custom_call.1} parent=51 // pred_region
          %s3704 = smul.u32 3, %s22
          %s3706 = ssub.s32 192, 192
          %3707 = vsyncadd %s3697, %s3706
          %s3708 = smul.addr %s3704, 64
          %s3709 = scalar_lea.hbm %s8, %s3708
          %s3711 = sshll.u32 %s3700, 4
          %s3712 = int_to_ptr.vmem [resolvable:$true] %s3711
          %3714 = dma.vmem_to_hbm [thread:$0]  %s3712, 192, %s3709, %s3697
        $region56: #{tpu_custom_call.1} parent=51 // pred_fallthru
          _
      $region52: #{tpu_custom_call.1} parent=5 // pred_fallthru
        _
      %p3715 = scmp.le.s32.totalorder 2, %s17
      // Predicated region
      $region57: #{tpu_custom_call.1} parent=5 // pred_check
        %p3716 = pneg %p3715
      $region58: #{tpu_custom_call.1} parent=5 // pred_check_branch
        %3718 = sbr.rel (%p3716) target = $region60
      $region59: #{tpu_custom_call.1} parent=5 // pred_region
        %s3719 = ssub.s32 %s17, 2
        // Predicated region
        $region61: #{tpu_custom_call.1} parent=59 // pred_check
          %p3720 = pneg %p224
        $region62: #{tpu_custom_call.1} parent=59 // pred_check_branch
          %3722 = sbr.rel (%p3720) target = $region64
        $region63: #{tpu_custom_call.1} parent=59 // pred_region
          %s3723 = sand.u32 %s209, 1
          %s3724 = scalar_lea.sflag [#allocation5], %s3723
          %s3725 = sand.u32 %s209, 1
          %s3726 = smul.addr %s3725, 12
          %s3727 = scalar_lea.vmem [#allocation4], %s3726
          %3728 = dma.done %s3724, 192
        $region64: #{tpu_custom_call.1} parent=59 // pred_fallthru
          _
      $region60: #{tpu_custom_call.1} parent=5 // pred_fallthru
        _
    $region6: #{tpu_custom_call.1} parent=1 // loop_footer
      %s21 = sadd.s32 1, %s17
    $region7: #{tpu_custom_call.1} parent=1 // loop_footer_branch
      %16 = sbr.rel target = $region3
    $region8: #{tpu_custom_call.1} parent=1 // loop_exit
      _
    %3729 = vsyncpa [#allocation5], 1
    %s3730 = scalar_lea.sflag [#allocation5], 1
    %3731 = vsyncpa %s3730, 1

</llo_original>
